<compile_context>
chip_gen: v7x
topology: tpu7x:2x2x1
jax: 0.10.0
libtpu: 0.0.40
codegen_flags: <defaults>
</compile_context>

<pallas_src>
import functools

import jax
import jax.numpy as jnp
import numpy as np
from jax.experimental import pallas as pl
from jax.experimental.pallas import tpu as pltpu


def _round_up(n, m):
    return ((n + m - 1) // m) * m


# PyTorch LSTMCell gate order is [i | f | g | o]; the kernel uses [i | f | o | g]
# so that the sigmoid gates are one contiguous block and tanh touches only g.
_GATE_PERM = (0, 1, 3, 2)


# ----------------------------------------------------------------------------
# In-kernel LSTM gate math (gate layout [i | f | o | g], PyTorch semantics)
# ----------------------------------------------------------------------------
def _apply_gates(gates, c):
    """gates:(B,4H) laid out [i|f|o|g], c:(B,H) -> (h_new, c_new)."""
    h = c.shape[-1]
    sig = jax.nn.sigmoid(gates[:, : 3 * h])   # one EUP push over i|f|o only
    g_g = jnp.tanh(gates[:, 3 * h:])          # one EUP push over g only
    i_g = sig[:, 0 * h:1 * h]
    f_g = sig[:, 1 * h:2 * h]
    o_g = sig[:, 2 * h:3 * h]
    c_new = f_g * c + i_g * g_g
    h_new = o_g * jnp.tanh(c_new)
    return h_new, c_new


# ----------------------------------------------------------------------------
# Pallas kernel: full encoder-decoder forward for one batch tile
# ----------------------------------------------------------------------------
def _lstm_ed_kernel(
    x_ref,                                  # (T*Bt, Din) time-major within tile
    e1_wih_ref, e1_whh_ref, e1_b_ref,       # enc cell1: (Din,4Hd) (Hd,4Hd) (1,4Hd)
    e2_w_ref, e2_b_ref,                     # enc cell2 fused: (Hd+Ep,4Ep) (1,4Ep)
    d1_wih_ref, d1_whh_ref, d1_b_ref,       # dec cell1: (Ep,4Hd) (Hd,4Hd) (1,4Hd)
    d2_w_ref, d2_b_ref,                     # dec cell2 fused: (Hd+Dp,4Dp) (1,4Dp)
    out_ref,                                # (Bt, T*Dp) lane-dense
    *,
    step, bt, hidden_dim, emb_pad, out_pad,
):
    x = x_ref[...]                                           # (T*Bt, Din)

    # ---- Hoisted encoder cell-1 input projection: ONE big MXU matmul
    # (bias folded in; broadcast happens once, outside the time loop).
    x_proj = (
        jnp.dot(x, e1_wih_ref[...], preferred_element_type=jnp.float32)
        + e1_b_ref[...]
    )                                                        # (T*Bt, 4*Hd)

    e1_whh = e1_whh_ref[...]
    e2_w = e2_w_ref[...]
    e2_b = jnp.broadcast_to(e2_b_ref[...], (bt, 4 * emb_pad))  # hoisted bcast

    # ---------------- Encoder ----------------
    h0 = jnp.zeros((bt, hidden_dim), jnp.float32)
    c0 = jnp.zeros((bt, hidden_dim), jnp.float32)
    h1 = jnp.zeros((bt, emb_pad), jnp.float32)
    c1 = jnp.zeros((bt, emb_pad), jnp.float32)
    for t in range(step):                      # static unroll (step is small)
        # cell1: only the hh matmul remains on the serial path; the x_proj
        # slice is a contiguous sublane slice (time-major rows t*Bt + b).
        g1 = x_proj[t * bt:(t + 1) * bt, :] + jnp.dot(
            h0, e1_whh, preferred_element_type=jnp.float32)
        h0, c0 = _apply_gates(g1, c0)
        # cell2: fused ih/hh matmul, single MXU push over K = Hd + Ep.
        g2 = jnp.dot(jnp.concatenate([h0, h1], axis=1), e2_w,
                     preferred_element_type=jnp.float32) + e2_b
        h1, c1 = _apply_gates(g2, c1)
    emb = h1                                   # (Bt, Ep); padded lanes are 0

    # ---- Hoisted decoder cell-1 input projection (emb constant over t).
    d1_x = (
        jnp.dot(emb, d1_wih_ref[...], preferred_element_type=jnp.float32)
        + d1_b_ref[...]
    )                                                        # (Bt, 4*Hd)

    d1_whh = d1_whh_ref[...]
    d2_w = d2_w_ref[...]
    d2_b = jnp.broadcast_to(d2_b_ref[...], (bt, 4 * out_pad))  # hoisted bcast

    # ---------------- Decoder ----------------
    hd0 = jnp.zeros((bt, hidden_dim), jnp.float32)
    cd0 = jnp.zeros((bt, hidden_dim), jnp.float32)
    hd1 = jnp.zeros((bt, out_pad), jnp.float32)
    cd1 = jnp.zeros((bt, out_pad), jnp.float32)
    outs = []
    for t in range(step):
        g1 = d1_x + jnp.dot(hd0, d1_whh, preferred_element_type=jnp.float32)
        hd0, cd0 = _apply_gates(g1, cd0)
        g2 = jnp.dot(jnp.concatenate([hd0, hd1], axis=1), d2_w,
                     preferred_element_type=jnp.float32) + d2_b
        hd1, cd1 = _apply_gates(g2, cd1)
        outs.append(hd1)

    # Single lane-dense store of the whole tile's output slab (Bt, T*out_pad).
    out_ref[...] = jnp.concatenate(outs, axis=1).astype(out_ref.dtype)


# ----------------------------------------------------------------------------
# Wrapper: parameter prep (transpose / gate-permute / fuse / pad) + pallas_call
# ----------------------------------------------------------------------------
def lstm_encoder_decoder(x, params, *, step, hidden_dim, embedding_dim):
    batch, t_steps, input_dim = x.shape
    assert t_steps == step
    assert hidden_dim % 32 == 0, "4*hidden_dim must be a multiple of 128 lanes"

    emb_pad = _round_up(embedding_dim, 32)   # gate width 4*emb_pad % 128 == 0
    out_pad = _round_up(input_dim, 32)       # gate width 4*out_pad % 128 == 0

    # ---- Batch tiling: 128–256-row tiles keep the 256-wide MXU fed on
    # v6e/v7x and let dimension_semantics=("parallel",) split tiles across
    # v7x's two TensorCores.  Small batches stay a single tile (grid of 1).
    bt = batch
    if batch > 256:
        for cand in (256, 128, 64, 32, 16, 8):
            if batch % cand == 0:
                bt = cand
                break
    grid_b = batch // bt

    # ---- Weight prep helpers -------------------------------------------------
    def reorder_cols(w_t, h):
        k = w_t.shape[0]
        return w_t.reshape(k, 4, h)[:, _GATE_PERM, :].reshape(k, 4 * h)

    def reorder_bias(b, h):
        return b.reshape(4, h)[_GATE_PERM, :].reshape(1, 4 * h)

    def prep_plain(cell, h):
        # Pre-transpose so the kernel does x @ W; fold the two biases (exact);
        # permute gate blocks to [i|f|o|g].
        w_ih, w_hh, b_ih, b_hh = cell
        w_ih_t = reorder_cols(jnp.transpose(w_ih).astype(jnp.float32), h)
        w_hh_t = reorder_cols(jnp.transpose(w_hh).astype(jnp.float32), h)
        b = reorder_bias((b_ih + b_hh).astype(jnp.float32), h)
        return w_ih_t, w_hh_t, b

    def pad_gate_cols(w_t, h, hp):
        # (K, 4h) -> permute gate blocks -> zero-pad each block to hp lanes.
        k = w_t.shape[0]
        blocks = w_t.reshape(k, 4, h)[:, _GATE_PERM, :]
        return jnp.pad(blocks, ((0, 0), (0, 0), (0, hp - h))).reshape(k, 4 * hp)

    def pad_bias(b, h, hp):
        blocks = b.reshape(4, h)[_GATE_PERM, :]
        return jnp.pad(blocks, ((0, 0), (0, hp - h))).reshape(1, 4 * hp)

    def prep_fused(cell, h, hp):
        # Fuse [W_ih_t ; W_hh_t] on the contraction axis, pad gate width to hp.
        # Padded weight columns, padded W_hh rows and padded bias entries are
        # zero, so padded h/c lanes stay exactly 0 through the recurrence.
        w_ih, w_hh, b_ih, b_hh = cell
        w_ih_t = pad_gate_cols(jnp.transpose(w_ih).astype(jnp.float32), h, hp)
        w_hh_t = pad_gate_cols(jnp.transpose(w_hh).astype(jnp.float32), h, hp)
        w_hh_t = jnp.pad(w_hh_t, ((0, hp - h), (0, 0)))
        w = jnp.concatenate([w_ih_t, w_hh_t], axis=0)        # (in + hp, 4hp)
        b = pad_bias((b_ih + b_hh).astype(jnp.float32), h, hp)
        return w, b

    # Encoder/decoder cell-1: keep ih and hh separate (ih projections are
    # hoisted out of the time loop); gate width 4*hidden_dim is lane-aligned.
    e1_wih, e1_whh, e1_b = prep_plain(params["enc1"], hidden_dim)
    d1_wih, d1_whh, d1_b = prep_plain(params["dec1"], hidden_dim)
    # Decoder cell-1 consumes the padded embedding -> zero-pad its input rows.
    d1_wih = jnp.pad(d1_wih, ((0, emb_pad - embedding_dim), (0, 0)))

    e2_w, e2_b = prep_fused(params["enc2"], embedding_dim, emb_pad)
    d2_w, d2_b = prep_fused(params["dec2"], input_dim, out_pad)

    # ---- x packing: per batch-tile, time-major rows (row t*Bt + b_local),
    # so the kernel's per-step slice of x_proj is contiguous sublanes.
    x_f32 = x.astype(jnp.float32)
    x_pack = (
        jnp.transpose(x_f32, (1, 0, 2))                    # (T, B, Din)
        .reshape(step, grid_b, bt, input_dim)
        .transpose(1, 0, 2, 3)                             # (G, T, Bt, Din)
        .reshape(grid_b, step * bt, input_dim)
    )

    kernel = functools.partial(
        _lstm_ed_kernel, step=step, bt=bt, hidden_dim=hidden_dim,
        emb_pad=emb_pad, out_pad=out_pad)

    def full_spec(arr):
        # Tiny weight/bias arrays: whole array resident in VMEM every step.
        return pl.BlockSpec(arr.shape, lambda i: (0,) * arr.ndim)

    in_specs = [
        pl.BlockSpec((None, step * bt, input_dim), lambda i: (i, 0, 0)),  # x
        full_spec(e1_wih), full_spec(e1_whh), full_spec(e1_b),
        full_spec(e2_w), full_spec(e2_b),
        full_spec(d1_wih), full_spec(d1_whh), full_spec(d1_b),
        full_spec(d2_w), full_spec(d2_b),
    ]
    out_spec = pl.BlockSpec((bt, step * out_pad), lambda i: (i, 0))

    out_flat = pl.pallas_call(
        kernel,
        out_shape=jax.ShapeDtypeStruct((batch, step * out_pad), jnp.float32),
        grid=(grid_b,),
        in_specs=in_specs,
        out_specs=out_spec,
        compiler_params=pltpu.CompilerParams(
            dimension_semantics=("parallel",)),
    )(x_pack, e1_wih, e1_whh, e1_b, e2_w, e2_b,
      d1_wih, d1_whh, d1_b, d2_w, d2_b)

    # (B, T*Dp) -> (B, T, Dp) -> drop the zero padded lanes.
    return out_flat.reshape(batch, step, out_pad)[:, :, :input_dim]


# ----------------------------------------------------------------------------
# Pure-JAX reference (mirrors the PyTorch module exactly) for verification
# ----------------------------------------------------------------------------
def _ref_forward(x, params, *, step, hidden_dim, embedding_dim):
    batch, _, input_dim = x.shape

    def cell(xi, h, c, p):
        w_ih, w_hh, b_ih, b_hh = p
        gates = xi @ w_ih.T + b_ih + h @ w_hh.T + b_hh
        hdim = h.shape[-1]
        i = jax.nn.sigmoid(gates[:, 0 * hdim:1 * hdim])
        f = jax.nn.sigmoid(gates[:, 1 * hdim:2 * hdim])
        g = jnp.tanh(gates[:, 2 * hdim:3 * hdim])
        o = jax.nn.sigmoid(gates[:, 3 * hdim:4 * hdim])
        c_new = f * c + i * g
        return o * jnp.tanh(c_new), c_new

    h0 = jnp.zeros((batch, hidden_dim)); c0 = jnp.zeros((batch, hidden_dim))
    h1 = jnp.zeros((batch, embedding_dim)); c1 = jnp.zeros((batch, embedding_dim))
    for t in range(step):
        h0, c0 = cell(x[:, t, :], h0, c0, params["enc1"])
        h1, c1 = cell(h0, h1, c1, params["enc2"])
    emb = h1

    hd0 = jnp.zeros((batch, hidden_dim)); cd0 = jnp.zeros((batch, hidden_dim))
    hd1 = jnp.zeros((batch, input_dim)); cd1 = jnp.zeros((batch, input_dim))
    outs = []
    for t in range(step):
        hd0, cd0 = cell(emb, hd0, cd0, params["dec1"])
        hd1, cd1 = cell(hd0, hd1, cd1, params["dec2"])
        outs.append(hd1)
    return jnp.stack(outs, axis=1)  # == torch.stack(...).permute(1,0,2)


# ----------------------------------------------------------------------------
# Deterministic parameter init (nn.LSTMCell default: U(-1/sqrt(H), 1/sqrt(H)))
# ----------------------------------------------------------------------------
def _init_cell(key, in_dim, h_dim):
    k1, k2, k3, k4 = jax.random.split(key, 4)
    bound = 1.0 / np.sqrt(h_dim)
    w_ih = jax.random.uniform(k1, (4 * h_dim, in_dim), jnp.float32, -bound, bound)
    w_hh = jax.random.uniform(k2, (4 * h_dim, h_dim), jnp.float32, -bound, bound)
    b_ih = jax.random.uniform(k3, (4 * h_dim,), jnp.float32, -bound, bound)
    b_hh = jax.random.uniform(k4, (4 * h_dim,), jnp.float32, -bound, bound)
    return (w_ih, w_hh, b_ih, b_hh)


if __name__ == "__main__":
    # Small shapes consistent with the module: x is (batch, step, input_dim)
    batch = 8
    step = 8
    input_dim = 16
    hidden_dim = 32
    embedding_dim = 8
    assert embedding_dim < input_dim * step

    key = jax.random.PRNGKey(0)
    kx, k1, k2, k3, k4 = jax.random.split(key, 5)

    x = jax.random.normal(kx, (batch, step, input_dim), jnp.float32)

    params = {
        "enc1": _init_cell(k1, input_dim, hidden_dim),      # LSTMCell(input, hidden)
        "enc2": _init_cell(k2, hidden_dim, embedding_dim),  # LSTMCell(hidden, embedding)
        "dec1": _init_cell(k3, embedding_dim, hidden_dim),  # LSTMCell(embedding, hidden)
        "dec2": _init_cell(k4, hidden_dim, input_dim),      # LSTMCell(hidden, input)
    }

    out = lstm_encoder_decoder(
        x, params, step=step, hidden_dim=hidden_dim, embedding_dim=embedding_dim
    )
    out = jax.block_until_ready(out)

    ref = _ref_forward(
        x, params, step=step, hidden_dim=hidden_dim, embedding_dim=embedding_dim
    )
    assert out.shape == (batch, step, input_dim)
    np.testing.assert_allclose(np.asarray(out), np.asarray(ref), rtol=5e-5, atol=5e-5)

    print("KERNEL_OK")
</pallas_src>

<mosaic_0001>
module attributes {stable_mosaic.version = 11 : i64} {
  func.func @_lstm_ed_kernel(%arg0: i32, %arg1: memref<1x64x16xf32, #tpu.memory_space<vmem>>, %arg2: memref<16x128xf32, #tpu.memory_space<vmem>>, %arg3: memref<32x128xf32, #tpu.memory_space<vmem>>, %arg4: memref<1x128xf32, #tpu.memory_space<vmem>>, %arg5: memref<64x128xf32, #tpu.memory_space<vmem>>, %arg6: memref<1x128xf32, #tpu.memory_space<vmem>>, %arg7: memref<32x128xf32, #tpu.memory_space<vmem>>, %arg8: memref<32x128xf32, #tpu.memory_space<vmem>>, %arg9: memref<1x128xf32, #tpu.memory_space<vmem>>, %arg10: memref<64x128xf32, #tpu.memory_space<vmem>>, %arg11: memref<1x128xf32, #tpu.memory_space<vmem>>, %arg12: memref<8x256xf32, #tpu.memory_space<vmem>>) attributes {dimension_semantics = [#tpu.dimension_semantics<parallel>], iteration_bounds = array<i64: 1>, scalar_prefetch = 0 : i64, scratch_operands = 0 : i64, tpu.core_type = #tpu.core_type<tc>, window_params = [{transform_indices = @transform_0, window_bounds = array<i64: 1, 64, 16>}, {pipeline_mode = #tpu.pipeline_mode<synchronous>, transform_indices = @transform_1, window_bounds = array<i64: 16, 128>}, {pipeline_mode = #tpu.pipeline_mode<synchronous>, transform_indices = @transform_2, window_bounds = array<i64: 32, 128>}, {pipeline_mode = #tpu.pipeline_mode<synchronous>, transform_indices = @transform_3, window_bounds = array<i64: 1, 128>}, {pipeline_mode = #tpu.pipeline_mode<synchronous>, transform_indices = @transform_4, window_bounds = array<i64: 64, 128>}, {pipeline_mode = #tpu.pipeline_mode<synchronous>, transform_indices = @transform_5, window_bounds = array<i64: 1, 128>}, {pipeline_mode = #tpu.pipeline_mode<synchronous>, transform_indices = @transform_6, window_bounds = array<i64: 32, 128>}, {pipeline_mode = #tpu.pipeline_mode<synchronous>, transform_indices = @transform_7, window_bounds = array<i64: 32, 128>}, {pipeline_mode = #tpu.pipeline_mode<synchronous>, transform_indices = @transform_8, window_bounds = array<i64: 1, 128>}, {pipeline_mode = #tpu.pipeline_mode<synchronous>, transform_indices = @transform_9, window_bounds = array<i64: 64, 128>}, {pipeline_mode = #tpu.pipeline_mode<synchronous>, transform_indices = @transform_10, window_bounds = array<i64: 1, 128>}, {transform_indices = @transform_11, window_bounds = array<i64: 8, 256>}]} {
    %c0 = arith.constant 0 : index
    %c0_0 = arith.constant 0 : index
    %c0_1 = arith.constant 0 : index
    %0 = vector.load %arg1[%c0, %c0_0, %c0_1] : memref<1x64x16xf32, #tpu.memory_space<vmem>>, vector<1x64x16xf32>
    %1 = vector.shape_cast %0 : vector<1x64x16xf32> to vector<64x16xf32>
    %c0_2 = arith.constant 0 : index
    %c0_3 = arith.constant 0 : index
    %2 = vector.load %arg2[%c0_2, %c0_3] : memref<16x128xf32, #tpu.memory_space<vmem>>, vector<16x128xf32>
    %cst = arith.constant dense<0.000000e+00> : vector<64x128xf32>
    %3 = tpu.matmul %1, %2, %cst {dimension_numbers = #tpu.dot_dimension_numbers<[1], [0], [0], [1], [0, 0, 1, 1], [], []>} : vector<64x16xf32>, vector<16x128xf32>, vector<64x128xf32> -> vector<64x128xf32>
    %c0_4 = arith.constant 0 : index
    %c0_5 = arith.constant 0 : index
    %4 = vector.load %arg4[%c0_4, %c0_5] : memref<1x128xf32, #tpu.memory_space<vmem>>, vector<1x128xf32>
    %5 = vector.broadcast %4 : vector<1x128xf32> to vector<64x128xf32>
    %6 = arith.addf %3, %5 : vector<64x128xf32>
    %c0_6 = arith.constant 0 : index
    %c0_7 = arith.constant 0 : index
    %7 = vector.load %arg3[%c0_6, %c0_7] : memref<32x128xf32, #tpu.memory_space<vmem>>, vector<32x128xf32>
    %c0_8 = arith.constant 0 : index
    %c0_9 = arith.constant 0 : index
    %8 = vector.load %arg5[%c0_8, %c0_9] : memref<64x128xf32, #tpu.memory_space<vmem>>, vector<64x128xf32>
    %c0_10 = arith.constant 0 : index
    %c0_11 = arith.constant 0 : index
    %9 = vector.load %arg6[%c0_10, %c0_11] : memref<1x128xf32, #tpu.memory_space<vmem>>, vector<1x128xf32>
    %10 = vector.shape_cast %9 : vector<1x128xf32> to vector<1x128xf32>
    %11 = vector.broadcast %10 : vector<1x128xf32> to vector<8x128xf32>
    %cst_12 = arith.constant 0.000000e+00 : f32
    %12 = vector.broadcast %cst_12 : f32 to vector<8x32xf32>
    %cst_13 = arith.constant 0.000000e+00 : f32
    %13 = vector.broadcast %cst_13 : f32 to vector<8x32xf32>
    %cst_14 = arith.constant 0.000000e+00 : f32
    %14 = vector.broadcast %cst_14 : f32 to vector<8x32xf32>
    %cst_15 = arith.constant 0.000000e+00 : f32
    %15 = vector.broadcast %cst_15 : f32 to vector<8x32xf32>
    %16 = vector.extract_strided_slice %6 {offsets = [0, 0], sizes = [8, 128], strides = [1, 1]} : vector<64x128xf32> to vector<8x128xf32>
    %cst_16 = arith.constant dense<0.000000e+00> : vector<8x128xf32>
    %17 = tpu.matmul %12, %7, %cst_16 {dimension_numbers = #tpu.dot_dimension_numbers<[1], [0], [0], [1], [0, 0, 1, 1], [], []>} : vector<8x32xf32>, vector<32x128xf32>, vector<8x128xf32> -> vector<8x128xf32>
    %18 = arith.addf %16, %17 : vector<8x128xf32>
    %19 = vector.extract_strided_slice %18 {offsets = [0, 0], sizes = [8, 96], strides = [1, 1]} : vector<8x128xf32> to vector<8x96xf32>
    %20 = arith.negf %19 : vector<8x96xf32>
    %21 = math.exp %20 : vector<8x96xf32>
    %cst_17 = arith.constant 1.000000e+00 : f32
    %22 = vector.broadcast %cst_17 : f32 to vector<8x96xf32>
    %23 = arith.addf %22, %21 : vector<8x96xf32>
    %24 = arith.divf %22, %23 : vector<8x96xf32>
    %25 = vector.extract_strided_slice %18 {offsets = [0, 96], sizes = [8, 32], strides = [1, 1]} : vector<8x128xf32> to vector<8x32xf32>
    %26 = math.tanh %25 : vector<8x32xf32>
    %27 = vector.extract_strided_slice %24 {offsets = [0, 0], sizes = [8, 32], strides = [1, 1]} : vector<8x96xf32> to vector<8x32xf32>
    %28 = vector.extract_strided_slice %24 {offsets = [0, 32], sizes = [8, 32], strides = [1, 1]} : vector<8x96xf32> to vector<8x32xf32>
    %29 = vector.extract_strided_slice %24 {offsets = [0, 64], sizes = [8, 32], strides = [1, 1]} : vector<8x96xf32> to vector<8x32xf32>
    %30 = arith.mulf %28, %13 : vector<8x32xf32>
    %31 = arith.mulf %27, %26 : vector<8x32xf32>
    %32 = arith.addf %30, %31 : vector<8x32xf32>
    %33 = math.tanh %32 : vector<8x32xf32>
    %34 = arith.mulf %29, %33 : vector<8x32xf32>
    %35 = tpu.concatenate %34, %14 in 1 : vector<8x32xf32>, vector<8x32xf32> -> vector<8x64xf32>
    %cst_18 = arith.constant dense<0.000000e+00> : vector<8x128xf32>
    %36 = tpu.matmul %35, %8, %cst_18 {dimension_numbers = #tpu.dot_dimension_numbers<[1], [0], [0], [1], [0, 0, 1, 1], [], []>} : vector<8x64xf32>, vector<64x128xf32>, vector<8x128xf32> -> vector<8x128xf32>
    %37 = arith.addf %36, %11 : vector<8x128xf32>
    %38 = vector.extract_strided_slice %37 {offsets = [0, 0], sizes = [8, 96], strides = [1, 1]} : vector<8x128xf32> to vector<8x96xf32>
    %39 = arith.negf %38 : vector<8x96xf32>
    %40 = math.exp %39 : vector<8x96xf32>
    %cst_19 = arith.constant 1.000000e+00 : f32
    %41 = vector.broadcast %cst_19 : f32 to vector<8x96xf32>
    %42 = arith.addf %41, %40 : vector<8x96xf32>
    %43 = arith.divf %41, %42 : vector<8x96xf32>
    %44 = vector.extract_strided_slice %37 {offsets = [0, 96], sizes = [8, 32], strides = [1, 1]} : vector<8x128xf32> to vector<8x32xf32>
    %45 = math.tanh %44 : vector<8x32xf32>
    %46 = vector.extract_strided_slice %43 {offsets = [0, 0], sizes = [8, 32], strides = [1, 1]} : vector<8x96xf32> to vector<8x32xf32>
    %47 = vector.extract_strided_slice %43 {offsets = [0, 32], sizes = [8, 32], strides = [1, 1]} : vector<8x96xf32> to vector<8x32xf32>
    %48 = vector.extract_strided_slice %43 {offsets = [0, 64], sizes = [8, 32], strides = [1, 1]} : vector<8x96xf32> to vector<8x32xf32>
    %49 = arith.mulf %47, %15 : vector<8x32xf32>
    %50 = arith.mulf %46, %45 : vector<8x32xf32>
    %51 = arith.addf %49, %50 : vector<8x32xf32>
    %52 = math.tanh %51 : vector<8x32xf32>
    %53 = arith.mulf %48, %52 : vector<8x32xf32>
    %54 = vector.extract_strided_slice %6 {offsets = [8, 0], sizes = [8, 128], strides = [1, 1]} : vector<64x128xf32> to vector<8x128xf32>
    %cst_20 = arith.constant dense<0.000000e+00> : vector<8x128xf32>
    %55 = tpu.matmul %34, %7, %cst_20 {dimension_numbers = #tpu.dot_dimension_numbers<[1], [0], [0], [1], [0, 0, 1, 1], [], []>} : vector<8x32xf32>, vector<32x128xf32>, vector<8x128xf32> -> vector<8x128xf32>
    %56 = arith.addf %54, %55 : vector<8x128xf32>
    %57 = vector.extract_strided_slice %56 {offsets = [0, 0], sizes = [8, 96], strides = [1, 1]} : vector<8x128xf32> to vector<8x96xf32>
    %58 = arith.negf %57 : vector<8x96xf32>
    %59 = math.exp %58 : vector<8x96xf32>
    %cst_21 = arith.constant 1.000000e+00 : f32
    %60 = vector.broadcast %cst_21 : f32 to vector<8x96xf32>
    %61 = arith.addf %60, %59 : vector<8x96xf32>
    %62 = arith.divf %60, %61 : vector<8x96xf32>
    %63 = vector.extract_strided_slice %56 {offsets = [0, 96], sizes = [8, 32], strides = [1, 1]} : vector<8x128xf32> to vector<8x32xf32>
    %64 = math.tanh %63 : vector<8x32xf32>
    %65 = vector.extract_strided_slice %62 {offsets = [0, 0], sizes = [8, 32], strides = [1, 1]} : vector<8x96xf32> to vector<8x32xf32>
    %66 = vector.extract_strided_slice %62 {offsets = [0, 32], sizes = [8, 32], strides = [1, 1]} : vector<8x96xf32> to vector<8x32xf32>
    %67 = vector.extract_strided_slice %62 {offsets = [0, 64], sizes = [8, 32], strides = [1, 1]} : vector<8x96xf32> to vector<8x32xf32>
    %68 = arith.mulf %66, %32 : vector<8x32xf32>
    %69 = arith.mulf %65, %64 : vector<8x32xf32>
    %70 = arith.addf %68, %69 : vector<8x32xf32>
    %71 = math.tanh %70 : vector<8x32xf32>
    %72 = arith.mulf %67, %71 : vector<8x32xf32>
    %73 = tpu.concatenate %72, %53 in 1 : vector<8x32xf32>, vector<8x32xf32> -> vector<8x64xf32>
    %cst_22 = arith.constant dense<0.000000e+00> : vector<8x128xf32>
    %74 = tpu.matmul %73, %8, %cst_22 {dimension_numbers = #tpu.dot_dimension_numbers<[1], [0], [0], [1], [0, 0, 1, 1], [], []>} : vector<8x64xf32>, vector<64x128xf32>, vector<8x128xf32> -> vector<8x128xf32>
    %75 = arith.addf %74, %11 : vector<8x128xf32>
    %76 = vector.extract_strided_slice %75 {offsets = [0, 0], sizes = [8, 96], strides = [1, 1]} : vector<8x128xf32> to vector<8x96xf32>
    %77 = arith.negf %76 : vector<8x96xf32>
    %78 = math.exp %77 : vector<8x96xf32>
    %cst_23 = arith.constant 1.000000e+00 : f32
    %79 = vector.broadcast %cst_23 : f32 to vector<8x96xf32>
    %80 = arith.addf %79, %78 : vector<8x96xf32>
    %81 = arith.divf %79, %80 : vector<8x96xf32>
    %82 = vector.extract_strided_slice %75 {offsets = [0, 96], sizes = [8, 32], strides = [1, 1]} : vector<8x128xf32> to vector<8x32xf32>
    %83 = math.tanh %82 : vector<8x32xf32>
    %84 = vector.extract_strided_slice %81 {offsets = [0, 0], sizes = [8, 32], strides = [1, 1]} : vector<8x96xf32> to vector<8x32xf32>
    %85 = vector.extract_strided_slice %81 {offsets = [0, 32], sizes = [8, 32], strides = [1, 1]} : vector<8x96xf32> to vector<8x32xf32>
    %86 = vector.extract_strided_slice %81 {offsets = [0, 64], sizes = [8, 32], strides = [1, 1]} : vector<8x96xf32> to vector<8x32xf32>
    %87 = arith.mulf %85, %51 : vector<8x32xf32>
    %88 = arith.mulf %84, %83 : vector<8x32xf32>
    %89 = arith.addf %87, %88 : vector<8x32xf32>
    %90 = math.tanh %89 : vector<8x32xf32>
    %91 = arith.mulf %86, %90 : vector<8x32xf32>
    %92 = vector.extract_strided_slice %6 {offsets = [16, 0], sizes = [8, 128], strides = [1, 1]} : vector<64x128xf32> to vector<8x128xf32>
    %cst_24 = arith.constant dense<0.000000e+00> : vector<8x128xf32>
    %93 = tpu.matmul %72, %7, %cst_24 {dimension_numbers = #tpu.dot_dimension_numbers<[1], [0], [0], [1], [0, 0, 1, 1], [], []>} : vector<8x32xf32>, vector<32x128xf32>, vector<8x128xf32> -> vector<8x128xf32>
    %94 = arith.addf %92, %93 : vector<8x128xf32>
    %95 = vector.extract_strided_slice %94 {offsets = [0, 0], sizes = [8, 96], strides = [1, 1]} : vector<8x128xf32> to vector<8x96xf32>
    %96 = arith.negf %95 : vector<8x96xf32>
    %97 = math.exp %96 : vector<8x96xf32>
    %cst_25 = arith.constant 1.000000e+00 : f32
    %98 = vector.broadcast %cst_25 : f32 to vector<8x96xf32>
    %99 = arith.addf %98, %97 : vector<8x96xf32>
    %100 = arith.divf %98, %99 : vector<8x96xf32>
    %101 = vector.extract_strided_slice %94 {offsets = [0, 96], sizes = [8, 32], strides = [1, 1]} : vector<8x128xf32> to vector<8x32xf32>
    %102 = math.tanh %101 : vector<8x32xf32>
    %103 = vector.extract_strided_slice %100 {offsets = [0, 0], sizes = [8, 32], strides = [1, 1]} : vector<8x96xf32> to vector<8x32xf32>
    %104 = vector.extract_strided_slice %100 {offsets = [0, 32], sizes = [8, 32], strides = [1, 1]} : vector<8x96xf32> to vector<8x32xf32>
    %105 = vector.extract_strided_slice %100 {offsets = [0, 64], sizes = [8, 32], strides = [1, 1]} : vector<8x96xf32> to vector<8x32xf32>
    %106 = arith.mulf %104, %70 : vector<8x32xf32>
    %107 = arith.mulf %103, %102 : vector<8x32xf32>
    %108 = arith.addf %106, %107 : vector<8x32xf32>
    %109 = math.tanh %108 : vector<8x32xf32>
    %110 = arith.mulf %105, %109 : vector<8x32xf32>
    %111 = tpu.concatenate %110, %91 in 1 : vector<8x32xf32>, vector<8x32xf32> -> vector<8x64xf32>
    %cst_26 = arith.constant dense<0.000000e+00> : vector<8x128xf32>
    %112 = tpu.matmul %111, %8, %cst_26 {dimension_numbers = #tpu.dot_dimension_numbers<[1], [0], [0], [1], [0, 0, 1, 1], [], []>} : vector<8x64xf32>, vector<64x128xf32>, vector<8x128xf32> -> vector<8x128xf32>
    %113 = arith.addf %112, %11 : vector<8x128xf32>
    %114 = vector.extract_strided_slice %113 {offsets = [0, 0], sizes = [8, 96], strides = [1, 1]} : vector<8x128xf32> to vector<8x96xf32>
    %115 = arith.negf %114 : vector<8x96xf32>
    %116 = math.exp %115 : vector<8x96xf32>
    %cst_27 = arith.constant 1.000000e+00 : f32
    %117 = vector.broadcast %cst_27 : f32 to vector<8x96xf32>
    %118 = arith.addf %117, %116 : vector<8x96xf32>
    %119 = arith.divf %117, %118 : vector<8x96xf32>
    %120 = vector.extract_strided_slice %113 {offsets = [0, 96], sizes = [8, 32], strides = [1, 1]} : vector<8x128xf32> to vector<8x32xf32>
    %121 = math.tanh %120 : vector<8x32xf32>
    %122 = vector.extract_strided_slice %119 {offsets = [0, 0], sizes = [8, 32], strides = [1, 1]} : vector<8x96xf32> to vector<8x32xf32>
    %123 = vector.extract_strided_slice %119 {offsets = [0, 32], sizes = [8, 32], strides = [1, 1]} : vector<8x96xf32> to vector<8x32xf32>
    %124 = vector.extract_strided_slice %119 {offsets = [0, 64], sizes = [8, 32], strides = [1, 1]} : vector<8x96xf32> to vector<8x32xf32>
    %125 = arith.mulf %123, %89 : vector<8x32xf32>
    %126 = arith.mulf %122, %121 : vector<8x32xf32>
    %127 = arith.addf %125, %126 : vector<8x32xf32>
    %128 = math.tanh %127 : vector<8x32xf32>
    %129 = arith.mulf %124, %128 : vector<8x32xf32>
    %130 = vector.extract_strided_slice %6 {offsets = [24, 0], sizes = [8, 128], strides = [1, 1]} : vector<64x128xf32> to vector<8x128xf32>
    %cst_28 = arith.constant dense<0.000000e+00> : vector<8x128xf32>
    %131 = tpu.matmul %110, %7, %cst_28 {dimension_numbers = #tpu.dot_dimension_numbers<[1], [0], [0], [1], [0, 0, 1, 1], [], []>} : vector<8x32xf32>, vector<32x128xf32>, vector<8x128xf32> -> vector<8x128xf32>
    %132 = arith.addf %130, %131 : vector<8x128xf32>
    %133 = vector.extract_strided_slice %132 {offsets = [0, 0], sizes = [8, 96], strides = [1, 1]} : vector<8x128xf32> to vector<8x96xf32>
    %134 = arith.negf %133 : vector<8x96xf32>
    %135 = math.exp %134 : vector<8x96xf32>
    %cst_29 = arith.constant 1.000000e+00 : f32
    %136 = vector.broadcast %cst_29 : f32 to vector<8x96xf32>
    %137 = arith.addf %136, %135 : vector<8x96xf32>
    %138 = arith.divf %136, %137 : vector<8x96xf32>
    %139 = vector.extract_strided_slice %132 {offsets = [0, 96], sizes = [8, 32], strides = [1, 1]} : vector<8x128xf32> to vector<8x32xf32>
    %140 = math.tanh %139 : vector<8x32xf32>
    %141 = vector.extract_strided_slice %138 {offsets = [0, 0], sizes = [8, 32], strides = [1, 1]} : vector<8x96xf32> to vector<8x32xf32>
    %142 = vector.extract_strided_slice %138 {offsets = [0, 32], sizes = [8, 32], strides = [1, 1]} : vector<8x96xf32> to vector<8x32xf32>
    %143 = vector.extract_strided_slice %138 {offsets = [0, 64], sizes = [8, 32], strides = [1, 1]} : vector<8x96xf32> to vector<8x32xf32>
    %144 = arith.mulf %142, %108 : vector<8x32xf32>
    %145 = arith.mulf %141, %140 : vector<8x32xf32>
    %146 = arith.addf %144, %145 : vector<8x32xf32>
    %147 = math.tanh %146 : vector<8x32xf32>
    %148 = arith.mulf %143, %147 : vector<8x32xf32>
    %149 = tpu.concatenate %148, %129 in 1 : vector<8x32xf32>, vector<8x32xf32> -> vector<8x64xf32>
    %cst_30 = arith.constant dense<0.000000e+00> : vector<8x128xf32>
    %150 = tpu.matmul %149, %8, %cst_30 {dimension_numbers = #tpu.dot_dimension_numbers<[1], [0], [0], [1], [0, 0, 1, 1], [], []>} : vector<8x64xf32>, vector<64x128xf32>, vector<8x128xf32> -> vector<8x128xf32>
    %151 = arith.addf %150, %11 : vector<8x128xf32>
    %152 = vector.extract_strided_slice %151 {offsets = [0, 0], sizes = [8, 96], strides = [1, 1]} : vector<8x128xf32> to vector<8x96xf32>
    %153 = arith.negf %152 : vector<8x96xf32>
    %154 = math.exp %153 : vector<8x96xf32>
    %cst_31 = arith.constant 1.000000e+00 : f32
    %155 = vector.broadcast %cst_31 : f32 to vector<8x96xf32>
    %156 = arith.addf %155, %154 : vector<8x96xf32>
    %157 = arith.divf %155, %156 : vector<8x96xf32>
    %158 = vector.extract_strided_slice %151 {offsets = [0, 96], sizes = [8, 32], strides = [1, 1]} : vector<8x128xf32> to vector<8x32xf32>
    %159 = math.tanh %158 : vector<8x32xf32>
    %160 = vector.extract_strided_slice %157 {offsets = [0, 0], sizes = [8, 32], strides = [1, 1]} : vector<8x96xf32> to vector<8x32xf32>
    %161 = vector.extract_strided_slice %157 {offsets = [0, 32], sizes = [8, 32], strides = [1, 1]} : vector<8x96xf32> to vector<8x32xf32>
    %162 = vector.extract_strided_slice %157 {offsets = [0, 64], sizes = [8, 32], strides = [1, 1]} : vector<8x96xf32> to vector<8x32xf32>
    %163 = arith.mulf %161, %127 : vector<8x32xf32>
    %164 = arith.mulf %160, %159 : vector<8x32xf32>
    %165 = arith.addf %163, %164 : vector<8x32xf32>
    %166 = math.tanh %165 : vector<8x32xf32>
    %167 = arith.mulf %162, %166 : vector<8x32xf32>
    %168 = vector.extract_strided_slice %6 {offsets = [32, 0], sizes = [8, 128], strides = [1, 1]} : vector<64x128xf32> to vector<8x128xf32>
    %cst_32 = arith.constant dense<0.000000e+00> : vector<8x128xf32>
    %169 = tpu.matmul %148, %7, %cst_32 {dimension_numbers = #tpu.dot_dimension_numbers<[1], [0], [0], [1], [0, 0, 1, 1], [], []>} : vector<8x32xf32>, vector<32x128xf32>, vector<8x128xf32> -> vector<8x128xf32>
    %170 = arith.addf %168, %169 : vector<8x128xf32>
    %171 = vector.extract_strided_slice %170 {offsets = [0, 0], sizes = [8, 96], strides = [1, 1]} : vector<8x128xf32> to vector<8x96xf32>
    %172 = arith.negf %171 : vector<8x96xf32>
    %173 = math.exp %172 : vector<8x96xf32>
    %cst_33 = arith.constant 1.000000e+00 : f32
    %174 = vector.broadcast %cst_33 : f32 to vector<8x96xf32>
    %175 = arith.addf %174, %173 : vector<8x96xf32>
    %176 = arith.divf %174, %175 : vector<8x96xf32>
    %177 = vector.extract_strided_slice %170 {offsets = [0, 96], sizes = [8, 32], strides = [1, 1]} : vector<8x128xf32> to vector<8x32xf32>
    %178 = math.tanh %177 : vector<8x32xf32>
    %179 = vector.extract_strided_slice %176 {offsets = [0, 0], sizes = [8, 32], strides = [1, 1]} : vector<8x96xf32> to vector<8x32xf32>
    %180 = vector.extract_strided_slice %176 {offsets = [0, 32], sizes = [8, 32], strides = [1, 1]} : vector<8x96xf32> to vector<8x32xf32>
    %181 = vector.extract_strided_slice %176 {offsets = [0, 64], sizes = [8, 32], strides = [1, 1]} : vector<8x96xf32> to vector<8x32xf32>
    %182 = arith.mulf %180, %146 : vector<8x32xf32>
    %183 = arith.mulf %179, %178 : vector<8x32xf32>
    %184 = arith.addf %182, %183 : vector<8x32xf32>
    %185 = math.tanh %184 : vector<8x32xf32>
    %186 = arith.mulf %181, %185 : vector<8x32xf32>
    %187 = tpu.concatenate %186, %167 in 1 : vector<8x32xf32>, vector<8x32xf32> -> vector<8x64xf32>
    %cst_34 = arith.constant dense<0.000000e+00> : vector<8x128xf32>
    %188 = tpu.matmul %187, %8, %cst_34 {dimension_numbers = #tpu.dot_dimension_numbers<[1], [0], [0], [1], [0, 0, 1, 1], [], []>} : vector<8x64xf32>, vector<64x128xf32>, vector<8x128xf32> -> vector<8x128xf32>
    %189 = arith.addf %188, %11 : vector<8x128xf32>
    %190 = vector.extract_strided_slice %189 {offsets = [0, 0], sizes = [8, 96], strides = [1, 1]} : vector<8x128xf32> to vector<8x96xf32>
    %191 = arith.negf %190 : vector<8x96xf32>
    %192 = math.exp %191 : vector<8x96xf32>
    %cst_35 = arith.constant 1.000000e+00 : f32
    %193 = vector.broadcast %cst_35 : f32 to vector<8x96xf32>
    %194 = arith.addf %193, %192 : vector<8x96xf32>
    %195 = arith.divf %193, %194 : vector<8x96xf32>
    %196 = vector.extract_strided_slice %189 {offsets = [0, 96], sizes = [8, 32], strides = [1, 1]} : vector<8x128xf32> to vector<8x32xf32>
    %197 = math.tanh %196 : vector<8x32xf32>
    %198 = vector.extract_strided_slice %195 {offsets = [0, 0], sizes = [8, 32], strides = [1, 1]} : vector<8x96xf32> to vector<8x32xf32>
    %199 = vector.extract_strided_slice %195 {offsets = [0, 32], sizes = [8, 32], strides = [1, 1]} : vector<8x96xf32> to vector<8x32xf32>
    %200 = vector.extract_strided_slice %195 {offsets = [0, 64], sizes = [8, 32], strides = [1, 1]} : vector<8x96xf32> to vector<8x32xf32>
    %201 = arith.mulf %199, %165 : vector<8x32xf32>
    %202 = arith.mulf %198, %197 : vector<8x32xf32>
    %203 = arith.addf %201, %202 : vector<8x32xf32>
    %204 = math.tanh %203 : vector<8x32xf32>
    %205 = arith.mulf %200, %204 : vector<8x32xf32>
    %206 = vector.extract_strided_slice %6 {offsets = [40, 0], sizes = [8, 128], strides = [1, 1]} : vector<64x128xf32> to vector<8x128xf32>
    %cst_36 = arith.constant dense<0.000000e+00> : vector<8x128xf32>
    %207 = tpu.matmul %186, %7, %cst_36 {dimension_numbers = #tpu.dot_dimension_numbers<[1], [0], [0], [1], [0, 0, 1, 1], [], []>} : vector<8x32xf32>, vector<32x128xf32>, vector<8x128xf32> -> vector<8x128xf32>
    %208 = arith.addf %206, %207 : vector<8x128xf32>
    %209 = vector.extract_strided_slice %208 {offsets = [0, 0], sizes = [8, 96], strides = [1, 1]} : vector<8x128xf32> to vector<8x96xf32>
    %210 = arith.negf %209 : vector<8x96xf32>
    %211 = math.exp %210 : vector<8x96xf32>
    %cst_37 = arith.constant 1.000000e+00 : f32
    %212 = vector.broadcast %cst_37 : f32 to vector<8x96xf32>
    %213 = arith.addf %212, %211 : vector<8x96xf32>
    %214 = arith.divf %212, %213 : vector<8x96xf32>
    %215 = vector.extract_strided_slice %208 {offsets = [0, 96], sizes = [8, 32], strides = [1, 1]} : vector<8x128xf32> to vector<8x32xf32>
    %216 = math.tanh %215 : vector<8x32xf32>
    %217 = vector.extract_strided_slice %214 {offsets = [0, 0], sizes = [8, 32], strides = [1, 1]} : vector<8x96xf32> to vector<8x32xf32>
    %218 = vector.extract_strided_slice %214 {offsets = [0, 32], sizes = [8, 32], strides = [1, 1]} : vector<8x96xf32> to vector<8x32xf32>
    %219 = vector.extract_strided_slice %214 {offsets = [0, 64], sizes = [8, 32], strides = [1, 1]} : vector<8x96xf32> to vector<8x32xf32>
    %220 = arith.mulf %218, %184 : vector<8x32xf32>
    %221 = arith.mulf %217, %216 : vector<8x32xf32>
    %222 = arith.addf %220, %221 : vector<8x32xf32>
    %223 = math.tanh %222 : vector<8x32xf32>
    %224 = arith.mulf %219, %223 : vector<8x32xf32>
    %225 = tpu.concatenate %224, %205 in 1 : vector<8x32xf32>, vector<8x32xf32> -> vector<8x64xf32>
    %cst_38 = arith.constant dense<0.000000e+00> : vector<8x128xf32>
    %226 = tpu.matmul %225, %8, %cst_38 {dimension_numbers = #tpu.dot_dimension_numbers<[1], [0], [0], [1], [0, 0, 1, 1], [], []>} : vector<8x64xf32>, vector<64x128xf32>, vector<8x128xf32> -> vector<8x128xf32>
    %227 = arith.addf %226, %11 : vector<8x128xf32>
    %228 = vector.extract_strided_slice %227 {offsets = [0, 0], sizes = [8, 96], strides = [1, 1]} : vector<8x128xf32> to vector<8x96xf32>
    %229 = arith.negf %228 : vector<8x96xf32>
    %230 = math.exp %229 : vector<8x96xf32>
    %cst_39 = arith.constant 1.000000e+00 : f32
    %231 = vector.broadcast %cst_39 : f32 to vector<8x96xf32>
    %232 = arith.addf %231, %230 : vector<8x96xf32>
    %233 = arith.divf %231, %232 : vector<8x96xf32>
    %234 = vector.extract_strided_slice %227 {offsets = [0, 96], sizes = [8, 32], strides = [1, 1]} : vector<8x128xf32> to vector<8x32xf32>
    %235 = math.tanh %234 : vector<8x32xf32>
    %236 = vector.extract_strided_slice %233 {offsets = [0, 0], sizes = [8, 32], strides = [1, 1]} : vector<8x96xf32> to vector<8x32xf32>
    %237 = vector.extract_strided_slice %233 {offsets = [0, 32], sizes = [8, 32], strides = [1, 1]} : vector<8x96xf32> to vector<8x32xf32>
    %238 = vector.extract_strided_slice %233 {offsets = [0, 64], sizes = [8, 32], strides = [1, 1]} : vector<8x96xf32> to vector<8x32xf32>
    %239 = arith.mulf %237, %203 : vector<8x32xf32>
    %240 = arith.mulf %236, %235 : vector<8x32xf32>
    %241 = arith.addf %239, %240 : vector<8x32xf32>
    %242 = math.tanh %241 : vector<8x32xf32>
    %243 = arith.mulf %238, %242 : vector<8x32xf32>
    %244 = vector.extract_strided_slice %6 {offsets = [48, 0], sizes = [8, 128], strides = [1, 1]} : vector<64x128xf32> to vector<8x128xf32>
    %cst_40 = arith.constant dense<0.000000e+00> : vector<8x128xf32>
    %245 = tpu.matmul %224, %7, %cst_40 {dimension_numbers = #tpu.dot_dimension_numbers<[1], [0], [0], [1], [0, 0, 1, 1], [], []>} : vector<8x32xf32>, vector<32x128xf32>, vector<8x128xf32> -> vector<8x128xf32>
    %246 = arith.addf %244, %245 : vector<8x128xf32>
    %247 = vector.extract_strided_slice %246 {offsets = [0, 0], sizes = [8, 96], strides = [1, 1]} : vector<8x128xf32> to vector<8x96xf32>
    %248 = arith.negf %247 : vector<8x96xf32>
    %249 = math.exp %248 : vector<8x96xf32>
    %cst_41 = arith.constant 1.000000e+00 : f32
    %250 = vector.broadcast %cst_41 : f32 to vector<8x96xf32>
    %251 = arith.addf %250, %249 : vector<8x96xf32>
    %252 = arith.divf %250, %251 : vector<8x96xf32>
    %253 = vector.extract_strided_slice %246 {offsets = [0, 96], sizes = [8, 32], strides = [1, 1]} : vector<8x128xf32> to vector<8x32xf32>
    %254 = math.tanh %253 : vector<8x32xf32>
    %255 = vector.extract_strided_slice %252 {offsets = [0, 0], sizes = [8, 32], strides = [1, 1]} : vector<8x96xf32> to vector<8x32xf32>
    %256 = vector.extract_strided_slice %252 {offsets = [0, 32], sizes = [8, 32], strides = [1, 1]} : vector<8x96xf32> to vector<8x32xf32>
    %257 = vector.extract_strided_slice %252 {offsets = [0, 64], sizes = [8, 32], strides = [1, 1]} : vector<8x96xf32> to vector<8x32xf32>
    %258 = arith.mulf %256, %222 : vector<8x32xf32>
    %259 = arith.mulf %255, %254 : vector<8x32xf32>
    %260 = arith.addf %258, %259 : vector<8x32xf32>
    %261 = math.tanh %260 : vector<8x32xf32>
    %262 = arith.mulf %257, %261 : vector<8x32xf32>
    %263 = tpu.concatenate %262, %243 in 1 : vector<8x32xf32>, vector<8x32xf32> -> vector<8x64xf32>
    %cst_42 = arith.constant dense<0.000000e+00> : vector<8x128xf32>
    %264 = tpu.matmul %263, %8, %cst_42 {dimension_numbers = #tpu.dot_dimension_numbers<[1], [0], [0], [1], [0, 0, 1, 1], [], []>} : vector<8x64xf32>, vector<64x128xf32>, vector<8x128xf32> -> vector<8x128xf32>
    %265 = arith.addf %264, %11 : vector<8x128xf32>
    %266 = vector.extract_strided_slice %265 {offsets = [0, 0], sizes = [8, 96], strides = [1, 1]} : vector<8x128xf32> to vector<8x96xf32>
    %267 = arith.negf %266 : vector<8x96xf32>
    %268 = math.exp %267 : vector<8x96xf32>
    %cst_43 = arith.constant 1.000000e+00 : f32
    %269 = vector.broadcast %cst_43 : f32 to vector<8x96xf32>
    %270 = arith.addf %269, %268 : vector<8x96xf32>
    %271 = arith.divf %269, %270 : vector<8x96xf32>
    %272 = vector.extract_strided_slice %265 {offsets = [0, 96], sizes = [8, 32], strides = [1, 1]} : vector<8x128xf32> to vector<8x32xf32>
    %273 = math.tanh %272 : vector<8x32xf32>
    %274 = vector.extract_strided_slice %271 {offsets = [0, 0], sizes = [8, 32], strides = [1, 1]} : vector<8x96xf32> to vector<8x32xf32>
    %275 = vector.extract_strided_slice %271 {offsets = [0, 32], sizes = [8, 32], strides = [1, 1]} : vector<8x96xf32> to vector<8x32xf32>
    %276 = vector.extract_strided_slice %271 {offsets = [0, 64], sizes = [8, 32], strides = [1, 1]} : vector<8x96xf32> to vector<8x32xf32>
    %277 = arith.mulf %275, %241 : vector<8x32xf32>
    %278 = arith.mulf %274, %273 : vector<8x32xf32>
    %279 = arith.addf %277, %278 : vector<8x32xf32>
    %280 = math.tanh %279 : vector<8x32xf32>
    %281 = arith.mulf %276, %280 : vector<8x32xf32>
    %282 = vector.extract_strided_slice %6 {offsets = [56, 0], sizes = [8, 128], strides = [1, 1]} : vector<64x128xf32> to vector<8x128xf32>
    %cst_44 = arith.constant dense<0.000000e+00> : vector<8x128xf32>
    %283 = tpu.matmul %262, %7, %cst_44 {dimension_numbers = #tpu.dot_dimension_numbers<[1], [0], [0], [1], [0, 0, 1, 1], [], []>} : vector<8x32xf32>, vector<32x128xf32>, vector<8x128xf32> -> vector<8x128xf32>
    %284 = arith.addf %282, %283 : vector<8x128xf32>
    %285 = vector.extract_strided_slice %284 {offsets = [0, 0], sizes = [8, 96], strides = [1, 1]} : vector<8x128xf32> to vector<8x96xf32>
    %286 = arith.negf %285 : vector<8x96xf32>
    %287 = math.exp %286 : vector<8x96xf32>
    %cst_45 = arith.constant 1.000000e+00 : f32
    %288 = vector.broadcast %cst_45 : f32 to vector<8x96xf32>
    %289 = arith.addf %288, %287 : vector<8x96xf32>
    %290 = arith.divf %288, %289 : vector<8x96xf32>
    %291 = vector.extract_strided_slice %284 {offsets = [0, 96], sizes = [8, 32], strides = [1, 1]} : vector<8x128xf32> to vector<8x32xf32>
    %292 = math.tanh %291 : vector<8x32xf32>
    %293 = vector.extract_strided_slice %290 {offsets = [0, 0], sizes = [8, 32], strides = [1, 1]} : vector<8x96xf32> to vector<8x32xf32>
    %294 = vector.extract_strided_slice %290 {offsets = [0, 32], sizes = [8, 32], strides = [1, 1]} : vector<8x96xf32> to vector<8x32xf32>
    %295 = vector.extract_strided_slice %290 {offsets = [0, 64], sizes = [8, 32], strides = [1, 1]} : vector<8x96xf32> to vector<8x32xf32>
    %296 = arith.mulf %294, %260 : vector<8x32xf32>
    %297 = arith.mulf %293, %292 : vector<8x32xf32>
    %298 = arith.addf %296, %297 : vector<8x32xf32>
    %299 = math.tanh %298 : vector<8x32xf32>
    %300 = arith.mulf %295, %299 : vector<8x32xf32>
    %301 = tpu.concatenate %300, %281 in 1 : vector<8x32xf32>, vector<8x32xf32> -> vector<8x64xf32>
    %cst_46 = arith.constant dense<0.000000e+00> : vector<8x128xf32>
    %302 = tpu.matmul %301, %8, %cst_46 {dimension_numbers = #tpu.dot_dimension_numbers<[1], [0], [0], [1], [0, 0, 1, 1], [], []>} : vector<8x64xf32>, vector<64x128xf32>, vector<8x128xf32> -> vector<8x128xf32>
    %303 = arith.addf %302, %11 : vector<8x128xf32>
    %304 = vector.extract_strided_slice %303 {offsets = [0, 0], sizes = [8, 96], strides = [1, 1]} : vector<8x128xf32> to vector<8x96xf32>
    %305 = arith.negf %304 : vector<8x96xf32>
    %306 = math.exp %305 : vector<8x96xf32>
    %cst_47 = arith.constant 1.000000e+00 : f32
    %307 = vector.broadcast %cst_47 : f32 to vector<8x96xf32>
    %308 = arith.addf %307, %306 : vector<8x96xf32>
    %309 = arith.divf %307, %308 : vector<8x96xf32>
    %310 = vector.extract_strided_slice %303 {offsets = [0, 96], sizes = [8, 32], strides = [1, 1]} : vector<8x128xf32> to vector<8x32xf32>
    %311 = math.tanh %310 : vector<8x32xf32>
    %312 = vector.extract_strided_slice %309 {offsets = [0, 0], sizes = [8, 32], strides = [1, 1]} : vector<8x96xf32> to vector<8x32xf32>
    %313 = vector.extract_strided_slice %309 {offsets = [0, 32], sizes = [8, 32], strides = [1, 1]} : vector<8x96xf32> to vector<8x32xf32>
    %314 = vector.extract_strided_slice %309 {offsets = [0, 64], sizes = [8, 32], strides = [1, 1]} : vector<8x96xf32> to vector<8x32xf32>
    %315 = arith.mulf %313, %279 : vector<8x32xf32>
    %316 = arith.mulf %312, %311 : vector<8x32xf32>
    %317 = arith.addf %315, %316 : vector<8x32xf32>
    %318 = math.tanh %317 : vector<8x32xf32>
    %319 = arith.mulf %314, %318 : vector<8x32xf32>
    %c0_48 = arith.constant 0 : index
    %c0_49 = arith.constant 0 : index
    %320 = vector.load %arg7[%c0_48, %c0_49] : memref<32x128xf32, #tpu.memory_space<vmem>>, vector<32x128xf32>
    %cst_50 = arith.constant dense<0.000000e+00> : vector<8x128xf32>
    %321 = tpu.matmul %319, %320, %cst_50 {dimension_numbers = #tpu.dot_dimension_numbers<[1], [0], [0], [1], [0, 0, 1, 1], [], []>} : vector<8x32xf32>, vector<32x128xf32>, vector<8x128xf32> -> vector<8x128xf32>
    %c0_51 = arith.constant 0 : index
    %c0_52 = arith.constant 0 : index
    %322 = vector.load %arg9[%c0_51, %c0_52] : memref<1x128xf32, #tpu.memory_space<vmem>>, vector<1x128xf32>
    %323 = vector.broadcast %322 : vector<1x128xf32> to vector<8x128xf32>
    %324 = arith.addf %321, %323 : vector<8x128xf32>
    %c0_53 = arith.constant 0 : index
    %c0_54 = arith.constant 0 : index
    %325 = vector.load %arg8[%c0_53, %c0_54] : memref<32x128xf32, #tpu.memory_space<vmem>>, vector<32x128xf32>
    %c0_55 = arith.constant 0 : index
    %c0_56 = arith.constant 0 : index
    %326 = vector.load %arg10[%c0_55, %c0_56] : memref<64x128xf32, #tpu.memory_space<vmem>>, vector<64x128xf32>
    %c0_57 = arith.constant 0 : index
    %c0_58 = arith.constant 0 : index
    %327 = vector.load %arg11[%c0_57, %c0_58] : memref<1x128xf32, #tpu.memory_space<vmem>>, vector<1x128xf32>
    %328 = vector.shape_cast %327 : vector<1x128xf32> to vector<1x128xf32>
    %329 = vector.broadcast %328 : vector<1x128xf32> to vector<8x128xf32>
    %cst_59 = arith.constant 0.000000e+00 : f32
    %330 = vector.broadcast %cst_59 : f32 to vector<8x32xf32>
    %cst_60 = arith.constant 0.000000e+00 : f32
    %331 = vector.broadcast %cst_60 : f32 to vector<8x32xf32>
    %cst_61 = arith.constant 0.000000e+00 : f32
    %332 = vector.broadcast %cst_61 : f32 to vector<8x32xf32>
    %cst_62 = arith.constant 0.000000e+00 : f32
    %333 = vector.broadcast %cst_62 : f32 to vector<8x32xf32>
    %cst_63 = arith.constant dense<0.000000e+00> : vector<8x128xf32>
    %334 = tpu.matmul %330, %325, %cst_63 {dimension_numbers = #tpu.dot_dimension_numbers<[1], [0], [0], [1], [0, 0, 1, 1], [], []>} : vector<8x32xf32>, vector<32x128xf32>, vector<8x128xf32> -> vector<8x128xf32>
    %335 = arith.addf %324, %334 : vector<8x128xf32>
    %336 = vector.extract_strided_slice %335 {offsets = [0, 0], sizes = [8, 96], strides = [1, 1]} : vector<8x128xf32> to vector<8x96xf32>
    %337 = arith.negf %336 : vector<8x96xf32>
    %338 = math.exp %337 : vector<8x96xf32>
    %cst_64 = arith.constant 1.000000e+00 : f32
    %339 = vector.broadcast %cst_64 : f32 to vector<8x96xf32>
    %340 = arith.addf %339, %338 : vector<8x96xf32>
    %341 = arith.divf %339, %340 : vector<8x96xf32>
    %342 = vector.extract_strided_slice %335 {offsets = [0, 96], sizes = [8, 32], strides = [1, 1]} : vector<8x128xf32> to vector<8x32xf32>
    %343 = math.tanh %342 : vector<8x32xf32>
    %344 = vector.extract_strided_slice %341 {offsets = [0, 0], sizes = [8, 32], strides = [1, 1]} : vector<8x96xf32> to vector<8x32xf32>
    %345 = vector.extract_strided_slice %341 {offsets = [0, 32], sizes = [8, 32], strides = [1, 1]} : vector<8x96xf32> to vector<8x32xf32>
    %346 = vector.extract_strided_slice %341 {offsets = [0, 64], sizes = [8, 32], strides = [1, 1]} : vector<8x96xf32> to vector<8x32xf32>
    %347 = arith.mulf %345, %331 : vector<8x32xf32>
    %348 = arith.mulf %344, %343 : vector<8x32xf32>
    %349 = arith.addf %347, %348 : vector<8x32xf32>
    %350 = math.tanh %349 : vector<8x32xf32>
    %351 = arith.mulf %346, %350 : vector<8x32xf32>
    %352 = tpu.concatenate %351, %332 in 1 : vector<8x32xf32>, vector<8x32xf32> -> vector<8x64xf32>
    %cst_65 = arith.constant dense<0.000000e+00> : vector<8x128xf32>
    %353 = tpu.matmul %352, %326, %cst_65 {dimension_numbers = #tpu.dot_dimension_numbers<[1], [0], [0], [1], [0, 0, 1, 1], [], []>} : vector<8x64xf32>, vector<64x128xf32>, vector<8x128xf32> -> vector<8x128xf32>
    %354 = arith.addf %353, %329 : vector<8x128xf32>
    %355 = vector.extract_strided_slice %354 {offsets = [0, 0], sizes = [8, 96], strides = [1, 1]} : vector<8x128xf32> to vector<8x96xf32>
    %356 = arith.negf %355 : vector<8x96xf32>
    %357 = math.exp %356 : vector<8x96xf32>
    %cst_66 = arith.constant 1.000000e+00 : f32
    %358 = vector.broadcast %cst_66 : f32 to vector<8x96xf32>
    %359 = arith.addf %358, %357 : vector<8x96xf32>
    %360 = arith.divf %358, %359 : vector<8x96xf32>
    %361 = vector.extract_strided_slice %354 {offsets = [0, 96], sizes = [8, 32], strides = [1, 1]} : vector<8x128xf32> to vector<8x32xf32>
    %362 = math.tanh %361 : vector<8x32xf32>
    %363 = vector.extract_strided_slice %360 {offsets = [0, 0], sizes = [8, 32], strides = [1, 1]} : vector<8x96xf32> to vector<8x32xf32>
    %364 = vector.extract_strided_slice %360 {offsets = [0, 32], sizes = [8, 32], strides = [1, 1]} : vector<8x96xf32> to vector<8x32xf32>
    %365 = vector.extract_strided_slice %360 {offsets = [0, 64], sizes = [8, 32], strides = [1, 1]} : vector<8x96xf32> to vector<8x32xf32>
    %366 = arith.mulf %364, %333 : vector<8x32xf32>
    %367 = arith.mulf %363, %362 : vector<8x32xf32>
    %368 = arith.addf %366, %367 : vector<8x32xf32>
    %369 = math.tanh %368 : vector<8x32xf32>
    %370 = arith.mulf %365, %369 : vector<8x32xf32>
    %cst_67 = arith.constant dense<0.000000e+00> : vector<8x128xf32>
    %371 = tpu.matmul %351, %325, %cst_67 {dimension_numbers = #tpu.dot_dimension_numbers<[1], [0], [0], [1], [0, 0, 1, 1], [], []>} : vector<8x32xf32>, vector<32x128xf32>, vector<8x128xf32> -> vector<8x128xf32>
    %372 = arith.addf %324, %371 : vector<8x128xf32>
    %373 = vector.extract_strided_slice %372 {offsets = [0, 0], sizes = [8, 96], strides = [1, 1]} : vector<8x128xf32> to vector<8x96xf32>
    %374 = arith.negf %373 : vector<8x96xf32>
    %375 = math.exp %374 : vector<8x96xf32>
    %cst_68 = arith.constant 1.000000e+00 : f32
    %376 = vector.broadcast %cst_68 : f32 to vector<8x96xf32>
    %377 = arith.addf %376, %375 : vector<8x96xf32>
    %378 = arith.divf %376, %377 : vector<8x96xf32>
    %379 = vector.extract_strided_slice %372 {offsets = [0, 96], sizes = [8, 32], strides = [1, 1]} : vector<8x128xf32> to vector<8x32xf32>
    %380 = math.tanh %379 : vector<8x32xf32>
    %381 = vector.extract_strided_slice %378 {offsets = [0, 0], sizes = [8, 32], strides = [1, 1]} : vector<8x96xf32> to vector<8x32xf32>
    %382 = vector.extract_strided_slice %378 {offsets = [0, 32], sizes = [8, 32], strides = [1, 1]} : vector<8x96xf32> to vector<8x32xf32>
    %383 = vector.extract_strided_slice %378 {offsets = [0, 64], sizes = [8, 32], strides = [1, 1]} : vector<8x96xf32> to vector<8x32xf32>
    %384 = arith.mulf %382, %349 : vector<8x32xf32>
    %385 = arith.mulf %381, %380 : vector<8x32xf32>
    %386 = arith.addf %384, %385 : vector<8x32xf32>
    %387 = math.tanh %386 : vector<8x32xf32>
    %388 = arith.mulf %383, %387 : vector<8x32xf32>
    %389 = tpu.concatenate %388, %370 in 1 : vector<8x32xf32>, vector<8x32xf32> -> vector<8x64xf32>
    %cst_69 = arith.constant dense<0.000000e+00> : vector<8x128xf32>
    %390 = tpu.matmul %389, %326, %cst_69 {dimension_numbers = #tpu.dot_dimension_numbers<[1], [0], [0], [1], [0, 0, 1, 1], [], []>} : vector<8x64xf32>, vector<64x128xf32>, vector<8x128xf32> -> vector<8x128xf32>
    %391 = arith.addf %390, %329 : vector<8x128xf32>
    %392 = vector.extract_strided_slice %391 {offsets = [0, 0], sizes = [8, 96], strides = [1, 1]} : vector<8x128xf32> to vector<8x96xf32>
    %393 = arith.negf %392 : vector<8x96xf32>
    %394 = math.exp %393 : vector<8x96xf32>
    %cst_70 = arith.constant 1.000000e+00 : f32
    %395 = vector.broadcast %cst_70 : f32 to vector<8x96xf32>
    %396 = arith.addf %395, %394 : vector<8x96xf32>
    %397 = arith.divf %395, %396 : vector<8x96xf32>
    %398 = vector.extract_strided_slice %391 {offsets = [0, 96], sizes = [8, 32], strides = [1, 1]} : vector<8x128xf32> to vector<8x32xf32>
    %399 = math.tanh %398 : vector<8x32xf32>
    %400 = vector.extract_strided_slice %397 {offsets = [0, 0], sizes = [8, 32], strides = [1, 1]} : vector<8x96xf32> to vector<8x32xf32>
    %401 = vector.extract_strided_slice %397 {offsets = [0, 32], sizes = [8, 32], strides = [1, 1]} : vector<8x96xf32> to vector<8x32xf32>
    %402 = vector.extract_strided_slice %397 {offsets = [0, 64], sizes = [8, 32], strides = [1, 1]} : vector<8x96xf32> to vector<8x32xf32>
    %403 = arith.mulf %401, %368 : vector<8x32xf32>
    %404 = arith.mulf %400, %399 : vector<8x32xf32>
    %405 = arith.addf %403, %404 : vector<8x32xf32>
    %406 = math.tanh %405 : vector<8x32xf32>
    %407 = arith.mulf %402, %406 : vector<8x32xf32>
    %cst_71 = arith.constant dense<0.000000e+00> : vector<8x128xf32>
    %408 = tpu.matmul %388, %325, %cst_71 {dimension_numbers = #tpu.dot_dimension_numbers<[1], [0], [0], [1], [0, 0, 1, 1], [], []>} : vector<8x32xf32>, vector<32x128xf32>, vector<8x128xf32> -> vector<8x128xf32>
    %409 = arith.addf %324, %408 : vector<8x128xf32>
    %410 = vector.extract_strided_slice %409 {offsets = [0, 0], sizes = [8, 96], strides = [1, 1]} : vector<8x128xf32> to vector<8x96xf32>
    %411 = arith.negf %410 : vector<8x96xf32>
    %412 = math.exp %411 : vector<8x96xf32>
    %cst_72 = arith.constant 1.000000e+00 : f32
    %413 = vector.broadcast %cst_72 : f32 to vector<8x96xf32>
    %414 = arith.addf %413, %412 : vector<8x96xf32>
    %415 = arith.divf %413, %414 : vector<8x96xf32>
    %416 = vector.extract_strided_slice %409 {offsets = [0, 96], sizes = [8, 32], strides = [1, 1]} : vector<8x128xf32> to vector<8x32xf32>
    %417 = math.tanh %416 : vector<8x32xf32>
    %418 = vector.extract_strided_slice %415 {offsets = [0, 0], sizes = [8, 32], strides = [1, 1]} : vector<8x96xf32> to vector<8x32xf32>
    %419 = vector.extract_strided_slice %415 {offsets = [0, 32], sizes = [8, 32], strides = [1, 1]} : vector<8x96xf32> to vector<8x32xf32>
    %420 = vector.extract_strided_slice %415 {offsets = [0, 64], sizes = [8, 32], strides = [1, 1]} : vector<8x96xf32> to vector<8x32xf32>
    %421 = arith.mulf %419, %386 : vector<8x32xf32>
    %422 = arith.mulf %418, %417 : vector<8x32xf32>
    %423 = arith.addf %421, %422 : vector<8x32xf32>
    %424 = math.tanh %423 : vector<8x32xf32>
    %425 = arith.mulf %420, %424 : vector<8x32xf32>
    %426 = tpu.concatenate %425, %407 in 1 : vector<8x32xf32>, vector<8x32xf32> -> vector<8x64xf32>
    %cst_73 = arith.constant dense<0.000000e+00> : vector<8x128xf32>
    %427 = tpu.matmul %426, %326, %cst_73 {dimension_numbers = #tpu.dot_dimension_numbers<[1], [0], [0], [1], [0, 0, 1, 1], [], []>} : vector<8x64xf32>, vector<64x128xf32>, vector<8x128xf32> -> vector<8x128xf32>
    %428 = arith.addf %427, %329 : vector<8x128xf32>
    %429 = vector.extract_strided_slice %428 {offsets = [0, 0], sizes = [8, 96], strides = [1, 1]} : vector<8x128xf32> to vector<8x96xf32>
    %430 = arith.negf %429 : vector<8x96xf32>
    %431 = math.exp %430 : vector<8x96xf32>
    %cst_74 = arith.constant 1.000000e+00 : f32
    %432 = vector.broadcast %cst_74 : f32 to vector<8x96xf32>
    %433 = arith.addf %432, %431 : vector<8x96xf32>
    %434 = arith.divf %432, %433 : vector<8x96xf32>
    %435 = vector.extract_strided_slice %428 {offsets = [0, 96], sizes = [8, 32], strides = [1, 1]} : vector<8x128xf32> to vector<8x32xf32>
    %436 = math.tanh %435 : vector<8x32xf32>
    %437 = vector.extract_strided_slice %434 {offsets = [0, 0], sizes = [8, 32], strides = [1, 1]} : vector<8x96xf32> to vector<8x32xf32>
    %438 = vector.extract_strided_slice %434 {offsets = [0, 32], sizes = [8, 32], strides = [1, 1]} : vector<8x96xf32> to vector<8x32xf32>
    %439 = vector.extract_strided_slice %434 {offsets = [0, 64], sizes = [8, 32], strides = [1, 1]} : vector<8x96xf32> to vector<8x32xf32>
    %440 = arith.mulf %438, %405 : vector<8x32xf32>
    %441 = arith.mulf %437, %436 : vector<8x32xf32>
    %442 = arith.addf %440, %441 : vector<8x32xf32>
    %443 = math.tanh %442 : vector<8x32xf32>
    %444 = arith.mulf %439, %443 : vector<8x32xf32>
    %cst_75 = arith.constant dense<0.000000e+00> : vector<8x128xf32>
    %445 = tpu.matmul %425, %325, %cst_75 {dimension_numbers = #tpu.dot_dimension_numbers<[1], [0], [0], [1], [0, 0, 1, 1], [], []>} : vector<8x32xf32>, vector<32x128xf32>, vector<8x128xf32> -> vector<8x128xf32>
    %446 = arith.addf %324, %445 : vector<8x128xf32>
    %447 = vector.extract_strided_slice %446 {offsets = [0, 0], sizes = [8, 96], strides = [1, 1]} : vector<8x128xf32> to vector<8x96xf32>
    %448 = arith.negf %447 : vector<8x96xf32>
    %449 = math.exp %448 : vector<8x96xf32>
    %cst_76 = arith.constant 1.000000e+00 : f32
    %450 = vector.broadcast %cst_76 : f32 to vector<8x96xf32>
    %451 = arith.addf %450, %449 : vector<8x96xf32>
    %452 = arith.divf %450, %451 : vector<8x96xf32>
    %453 = vector.extract_strided_slice %446 {offsets = [0, 96], sizes = [8, 32], strides = [1, 1]} : vector<8x128xf32> to vector<8x32xf32>
    %454 = math.tanh %453 : vector<8x32xf32>
    %455 = vector.extract_strided_slice %452 {offsets = [0, 0], sizes = [8, 32], strides = [1, 1]} : vector<8x96xf32> to vector<8x32xf32>
    %456 = vector.extract_strided_slice %452 {offsets = [0, 32], sizes = [8, 32], strides = [1, 1]} : vector<8x96xf32> to vector<8x32xf32>
    %457 = vector.extract_strided_slice %452 {offsets = [0, 64], sizes = [8, 32], strides = [1, 1]} : vector<8x96xf32> to vector<8x32xf32>
    %458 = arith.mulf %456, %423 : vector<8x32xf32>
    %459 = arith.mulf %455, %454 : vector<8x32xf32>
    %460 = arith.addf %458, %459 : vector<8x32xf32>
    %461 = math.tanh %460 : vector<8x32xf32>
    %462 = arith.mulf %457, %461 : vector<8x32xf32>
    %463 = tpu.concatenate %462, %444 in 1 : vector<8x32xf32>, vector<8x32xf32> -> vector<8x64xf32>
    %cst_77 = arith.constant dense<0.000000e+00> : vector<8x128xf32>
    %464 = tpu.matmul %463, %326, %cst_77 {dimension_numbers = #tpu.dot_dimension_numbers<[1], [0], [0], [1], [0, 0, 1, 1], [], []>} : vector<8x64xf32>, vector<64x128xf32>, vector<8x128xf32> -> vector<8x128xf32>
    %465 = arith.addf %464, %329 : vector<8x128xf32>
    %466 = vector.extract_strided_slice %465 {offsets = [0, 0], sizes = [8, 96], strides = [1, 1]} : vector<8x128xf32> to vector<8x96xf32>
    %467 = arith.negf %466 : vector<8x96xf32>
    %468 = math.exp %467 : vector<8x96xf32>
    %cst_78 = arith.constant 1.000000e+00 : f32
    %469 = vector.broadcast %cst_78 : f32 to vector<8x96xf32>
    %470 = arith.addf %469, %468 : vector<8x96xf32>
    %471 = arith.divf %469, %470 : vector<8x96xf32>
    %472 = vector.extract_strided_slice %465 {offsets = [0, 96], sizes = [8, 32], strides = [1, 1]} : vector<8x128xf32> to vector<8x32xf32>
    %473 = math.tanh %472 : vector<8x32xf32>
    %474 = vector.extract_strided_slice %471 {offsets = [0, 0], sizes = [8, 32], strides = [1, 1]} : vector<8x96xf32> to vector<8x32xf32>
    %475 = vector.extract_strided_slice %471 {offsets = [0, 32], sizes = [8, 32], strides = [1, 1]} : vector<8x96xf32> to vector<8x32xf32>
    %476 = vector.extract_strided_slice %471 {offsets = [0, 64], sizes = [8, 32], strides = [1, 1]} : vector<8x96xf32> to vector<8x32xf32>
    %477 = arith.mulf %475, %442 : vector<8x32xf32>
    %478 = arith.mulf %474, %473 : vector<8x32xf32>
    %479 = arith.addf %477, %478 : vector<8x32xf32>
    %480 = math.tanh %479 : vector<8x32xf32>
    %481 = arith.mulf %476, %480 : vector<8x32xf32>
    %cst_79 = arith.constant dense<0.000000e+00> : vector<8x128xf32>
    %482 = tpu.matmul %462, %325, %cst_79 {dimension_numbers = #tpu.dot_dimension_numbers<[1], [0], [0], [1], [0, 0, 1, 1], [], []>} : vector<8x32xf32>, vector<32x128xf32>, vector<8x128xf32> -> vector<8x128xf32>
    %483 = arith.addf %324, %482 : vector<8x128xf32>
    %484 = vector.extract_strided_slice %483 {offsets = [0, 0], sizes = [8, 96], strides = [1, 1]} : vector<8x128xf32> to vector<8x96xf32>
    %485 = arith.negf %484 : vector<8x96xf32>
    %486 = math.exp %485 : vector<8x96xf32>
    %cst_80 = arith.constant 1.000000e+00 : f32
    %487 = vector.broadcast %cst_80 : f32 to vector<8x96xf32>
    %488 = arith.addf %487, %486 : vector<8x96xf32>
    %489 = arith.divf %487, %488 : vector<8x96xf32>
    %490 = vector.extract_strided_slice %483 {offsets = [0, 96], sizes = [8, 32], strides = [1, 1]} : vector<8x128xf32> to vector<8x32xf32>
    %491 = math.tanh %490 : vector<8x32xf32>
    %492 = vector.extract_strided_slice %489 {offsets = [0, 0], sizes = [8, 32], strides = [1, 1]} : vector<8x96xf32> to vector<8x32xf32>
    %493 = vector.extract_strided_slice %489 {offsets = [0, 32], sizes = [8, 32], strides = [1, 1]} : vector<8x96xf32> to vector<8x32xf32>
    %494 = vector.extract_strided_slice %489 {offsets = [0, 64], sizes = [8, 32], strides = [1, 1]} : vector<8x96xf32> to vector<8x32xf32>
    %495 = arith.mulf %493, %460 : vector<8x32xf32>
    %496 = arith.mulf %492, %491 : vector<8x32xf32>
    %497 = arith.addf %495, %496 : vector<8x32xf32>
    %498 = math.tanh %497 : vector<8x32xf32>
    %499 = arith.mulf %494, %498 : vector<8x32xf32>
    %500 = tpu.concatenate %499, %481 in 1 : vector<8x32xf32>, vector<8x32xf32> -> vector<8x64xf32>
    %cst_81 = arith.constant dense<0.000000e+00> : vector<8x128xf32>
    %501 = tpu.matmul %500, %326, %cst_81 {dimension_numbers = #tpu.dot_dimension_numbers<[1], [0], [0], [1], [0, 0, 1, 1], [], []>} : vector<8x64xf32>, vector<64x128xf32>, vector<8x128xf32> -> vector<8x128xf32>
    %502 = arith.addf %501, %329 : vector<8x128xf32>
    %503 = vector.extract_strided_slice %502 {offsets = [0, 0], sizes = [8, 96], strides = [1, 1]} : vector<8x128xf32> to vector<8x96xf32>
    %504 = arith.negf %503 : vector<8x96xf32>
    %505 = math.exp %504 : vector<8x96xf32>
    %cst_82 = arith.constant 1.000000e+00 : f32
    %506 = vector.broadcast %cst_82 : f32 to vector<8x96xf32>
    %507 = arith.addf %506, %505 : vector<8x96xf32>
    %508 = arith.divf %506, %507 : vector<8x96xf32>
    %509 = vector.extract_strided_slice %502 {offsets = [0, 96], sizes = [8, 32], strides = [1, 1]} : vector<8x128xf32> to vector<8x32xf32>
    %510 = math.tanh %509 : vector<8x32xf32>
    %511 = vector.extract_strided_slice %508 {offsets = [0, 0], sizes = [8, 32], strides = [1, 1]} : vector<8x96xf32> to vector<8x32xf32>
    %512 = vector.extract_strided_slice %508 {offsets = [0, 32], sizes = [8, 32], strides = [1, 1]} : vector<8x96xf32> to vector<8x32xf32>
    %513 = vector.extract_strided_slice %508 {offsets = [0, 64], sizes = [8, 32], strides = [1, 1]} : vector<8x96xf32> to vector<8x32xf32>
    %514 = arith.mulf %512, %479 : vector<8x32xf32>
    %515 = arith.mulf %511, %510 : vector<8x32xf32>
    %516 = arith.addf %514, %515 : vector<8x32xf32>
    %517 = math.tanh %516 : vector<8x32xf32>
    %518 = arith.mulf %513, %517 : vector<8x32xf32>
    %cst_83 = arith.constant dense<0.000000e+00> : vector<8x128xf32>
    %519 = tpu.matmul %499, %325, %cst_83 {dimension_numbers = #tpu.dot_dimension_numbers<[1], [0], [0], [1], [0, 0, 1, 1], [], []>} : vector<8x32xf32>, vector<32x128xf32>, vector<8x128xf32> -> vector<8x128xf32>
    %520 = arith.addf %324, %519 : vector<8x128xf32>
    %521 = vector.extract_strided_slice %520 {offsets = [0, 0], sizes = [8, 96], strides = [1, 1]} : vector<8x128xf32> to vector<8x96xf32>
    %522 = arith.negf %521 : vector<8x96xf32>
    %523 = math.exp %522 : vector<8x96xf32>
    %cst_84 = arith.constant 1.000000e+00 : f32
    %524 = vector.broadcast %cst_84 : f32 to vector<8x96xf32>
    %525 = arith.addf %524, %523 : vector<8x96xf32>
    %526 = arith.divf %524, %525 : vector<8x96xf32>
    %527 = vector.extract_strided_slice %520 {offsets = [0, 96], sizes = [8, 32], strides = [1, 1]} : vector<8x128xf32> to vector<8x32xf32>
    %528 = math.tanh %527 : vector<8x32xf32>
    %529 = vector.extract_strided_slice %526 {offsets = [0, 0], sizes = [8, 32], strides = [1, 1]} : vector<8x96xf32> to vector<8x32xf32>
    %530 = vector.extract_strided_slice %526 {offsets = [0, 32], sizes = [8, 32], strides = [1, 1]} : vector<8x96xf32> to vector<8x32xf32>
    %531 = vector.extract_strided_slice %526 {offsets = [0, 64], sizes = [8, 32], strides = [1, 1]} : vector<8x96xf32> to vector<8x32xf32>
    %532 = arith.mulf %530, %497 : vector<8x32xf32>
    %533 = arith.mulf %529, %528 : vector<8x32xf32>
    %534 = arith.addf %532, %533 : vector<8x32xf32>
    %535 = math.tanh %534 : vector<8x32xf32>
    %536 = arith.mulf %531, %535 : vector<8x32xf32>
    %537 = tpu.concatenate %536, %518 in 1 : vector<8x32xf32>, vector<8x32xf32> -> vector<8x64xf32>
    %cst_85 = arith.constant dense<0.000000e+00> : vector<8x128xf32>
    %538 = tpu.matmul %537, %326, %cst_85 {dimension_numbers = #tpu.dot_dimension_numbers<[1], [0], [0], [1], [0, 0, 1, 1], [], []>} : vector<8x64xf32>, vector<64x128xf32>, vector<8x128xf32> -> vector<8x128xf32>
    %539 = arith.addf %538, %329 : vector<8x128xf32>
    %540 = vector.extract_strided_slice %539 {offsets = [0, 0], sizes = [8, 96], strides = [1, 1]} : vector<8x128xf32> to vector<8x96xf32>
    %541 = arith.negf %540 : vector<8x96xf32>
    %542 = math.exp %541 : vector<8x96xf32>
    %cst_86 = arith.constant 1.000000e+00 : f32
    %543 = vector.broadcast %cst_86 : f32 to vector<8x96xf32>
    %544 = arith.addf %543, %542 : vector<8x96xf32>
    %545 = arith.divf %543, %544 : vector<8x96xf32>
    %546 = vector.extract_strided_slice %539 {offsets = [0, 96], sizes = [8, 32], strides = [1, 1]} : vector<8x128xf32> to vector<8x32xf32>
    %547 = math.tanh %546 : vector<8x32xf32>
    %548 = vector.extract_strided_slice %545 {offsets = [0, 0], sizes = [8, 32], strides = [1, 1]} : vector<8x96xf32> to vector<8x32xf32>
    %549 = vector.extract_strided_slice %545 {offsets = [0, 32], sizes = [8, 32], strides = [1, 1]} : vector<8x96xf32> to vector<8x32xf32>
    %550 = vector.extract_strided_slice %545 {offsets = [0, 64], sizes = [8, 32], strides = [1, 1]} : vector<8x96xf32> to vector<8x32xf32>
    %551 = arith.mulf %549, %516 : vector<8x32xf32>
    %552 = arith.mulf %548, %547 : vector<8x32xf32>
    %553 = arith.addf %551, %552 : vector<8x32xf32>
    %554 = math.tanh %553 : vector<8x32xf32>
    %555 = arith.mulf %550, %554 : vector<8x32xf32>
    %cst_87 = arith.constant dense<0.000000e+00> : vector<8x128xf32>
    %556 = tpu.matmul %536, %325, %cst_87 {dimension_numbers = #tpu.dot_dimension_numbers<[1], [0], [0], [1], [0, 0, 1, 1], [], []>} : vector<8x32xf32>, vector<32x128xf32>, vector<8x128xf32> -> vector<8x128xf32>
    %557 = arith.addf %324, %556 : vector<8x128xf32>
    %558 = vector.extract_strided_slice %557 {offsets = [0, 0], sizes = [8, 96], strides = [1, 1]} : vector<8x128xf32> to vector<8x96xf32>
    %559 = arith.negf %558 : vector<8x96xf32>
    %560 = math.exp %559 : vector<8x96xf32>
    %cst_88 = arith.constant 1.000000e+00 : f32
    %561 = vector.broadcast %cst_88 : f32 to vector<8x96xf32>
    %562 = arith.addf %561, %560 : vector<8x96xf32>
    %563 = arith.divf %561, %562 : vector<8x96xf32>
    %564 = vector.extract_strided_slice %557 {offsets = [0, 96], sizes = [8, 32], strides = [1, 1]} : vector<8x128xf32> to vector<8x32xf32>
    %565 = math.tanh %564 : vector<8x32xf32>
    %566 = vector.extract_strided_slice %563 {offsets = [0, 0], sizes = [8, 32], strides = [1, 1]} : vector<8x96xf32> to vector<8x32xf32>
    %567 = vector.extract_strided_slice %563 {offsets = [0, 32], sizes = [8, 32], strides = [1, 1]} : vector<8x96xf32> to vector<8x32xf32>
    %568 = vector.extract_strided_slice %563 {offsets = [0, 64], sizes = [8, 32], strides = [1, 1]} : vector<8x96xf32> to vector<8x32xf32>
    %569 = arith.mulf %567, %534 : vector<8x32xf32>
    %570 = arith.mulf %566, %565 : vector<8x32xf32>
    %571 = arith.addf %569, %570 : vector<8x32xf32>
    %572 = math.tanh %571 : vector<8x32xf32>
    %573 = arith.mulf %568, %572 : vector<8x32xf32>
    %574 = tpu.concatenate %573, %555 in 1 : vector<8x32xf32>, vector<8x32xf32> -> vector<8x64xf32>
    %cst_89 = arith.constant dense<0.000000e+00> : vector<8x128xf32>
    %575 = tpu.matmul %574, %326, %cst_89 {dimension_numbers = #tpu.dot_dimension_numbers<[1], [0], [0], [1], [0, 0, 1, 1], [], []>} : vector<8x64xf32>, vector<64x128xf32>, vector<8x128xf32> -> vector<8x128xf32>
    %576 = arith.addf %575, %329 : vector<8x128xf32>
    %577 = vector.extract_strided_slice %576 {offsets = [0, 0], sizes = [8, 96], strides = [1, 1]} : vector<8x128xf32> to vector<8x96xf32>
    %578 = arith.negf %577 : vector<8x96xf32>
    %579 = math.exp %578 : vector<8x96xf32>
    %cst_90 = arith.constant 1.000000e+00 : f32
    %580 = vector.broadcast %cst_90 : f32 to vector<8x96xf32>
    %581 = arith.addf %580, %579 : vector<8x96xf32>
    %582 = arith.divf %580, %581 : vector<8x96xf32>
    %583 = vector.extract_strided_slice %576 {offsets = [0, 96], sizes = [8, 32], strides = [1, 1]} : vector<8x128xf32> to vector<8x32xf32>
    %584 = math.tanh %583 : vector<8x32xf32>
    %585 = vector.extract_strided_slice %582 {offsets = [0, 0], sizes = [8, 32], strides = [1, 1]} : vector<8x96xf32> to vector<8x32xf32>
    %586 = vector.extract_strided_slice %582 {offsets = [0, 32], sizes = [8, 32], strides = [1, 1]} : vector<8x96xf32> to vector<8x32xf32>
    %587 = vector.extract_strided_slice %582 {offsets = [0, 64], sizes = [8, 32], strides = [1, 1]} : vector<8x96xf32> to vector<8x32xf32>
    %588 = arith.mulf %586, %553 : vector<8x32xf32>
    %589 = arith.mulf %585, %584 : vector<8x32xf32>
    %590 = arith.addf %588, %589 : vector<8x32xf32>
    %591 = math.tanh %590 : vector<8x32xf32>
    %592 = arith.mulf %587, %591 : vector<8x32xf32>
    %cst_91 = arith.constant dense<0.000000e+00> : vector<8x128xf32>
    %593 = tpu.matmul %573, %325, %cst_91 {dimension_numbers = #tpu.dot_dimension_numbers<[1], [0], [0], [1], [0, 0, 1, 1], [], []>} : vector<8x32xf32>, vector<32x128xf32>, vector<8x128xf32> -> vector<8x128xf32>
    %594 = arith.addf %324, %593 : vector<8x128xf32>
    %595 = vector.extract_strided_slice %594 {offsets = [0, 0], sizes = [8, 96], strides = [1, 1]} : vector<8x128xf32> to vector<8x96xf32>
    %596 = arith.negf %595 : vector<8x96xf32>
    %597 = math.exp %596 : vector<8x96xf32>
    %cst_92 = arith.constant 1.000000e+00 : f32
    %598 = vector.broadcast %cst_92 : f32 to vector<8x96xf32>
    %599 = arith.addf %598, %597 : vector<8x96xf32>
    %600 = arith.divf %598, %599 : vector<8x96xf32>
    %601 = vector.extract_strided_slice %594 {offsets = [0, 96], sizes = [8, 32], strides = [1, 1]} : vector<8x128xf32> to vector<8x32xf32>
    %602 = math.tanh %601 : vector<8x32xf32>
    %603 = vector.extract_strided_slice %600 {offsets = [0, 0], sizes = [8, 32], strides = [1, 1]} : vector<8x96xf32> to vector<8x32xf32>
    %604 = vector.extract_strided_slice %600 {offsets = [0, 32], sizes = [8, 32], strides = [1, 1]} : vector<8x96xf32> to vector<8x32xf32>
    %605 = vector.extract_strided_slice %600 {offsets = [0, 64], sizes = [8, 32], strides = [1, 1]} : vector<8x96xf32> to vector<8x32xf32>
    %606 = arith.mulf %604, %571 : vector<8x32xf32>
    %607 = arith.mulf %603, %602 : vector<8x32xf32>
    %608 = arith.addf %606, %607 : vector<8x32xf32>
    %609 = math.tanh %608 : vector<8x32xf32>
    %610 = arith.mulf %605, %609 : vector<8x32xf32>
    %611 = tpu.concatenate %610, %592 in 1 : vector<8x32xf32>, vector<8x32xf32> -> vector<8x64xf32>
    %cst_93 = arith.constant dense<0.000000e+00> : vector<8x128xf32>
    %612 = tpu.matmul %611, %326, %cst_93 {dimension_numbers = #tpu.dot_dimension_numbers<[1], [0], [0], [1], [0, 0, 1, 1], [], []>} : vector<8x64xf32>, vector<64x128xf32>, vector<8x128xf32> -> vector<8x128xf32>
    %613 = arith.addf %612, %329 : vector<8x128xf32>
    %614 = vector.extract_strided_slice %613 {offsets = [0, 0], sizes = [8, 96], strides = [1, 1]} : vector<8x128xf32> to vector<8x96xf32>
    %615 = arith.negf %614 : vector<8x96xf32>
    %616 = math.exp %615 : vector<8x96xf32>
    %cst_94 = arith.constant 1.000000e+00 : f32
    %617 = vector.broadcast %cst_94 : f32 to vector<8x96xf32>
    %618 = arith.addf %617, %616 : vector<8x96xf32>
    %619 = arith.divf %617, %618 : vector<8x96xf32>
    %620 = vector.extract_strided_slice %613 {offsets = [0, 96], sizes = [8, 32], strides = [1, 1]} : vector<8x128xf32> to vector<8x32xf32>
    %621 = math.tanh %620 : vector<8x32xf32>
    %622 = vector.extract_strided_slice %619 {offsets = [0, 0], sizes = [8, 32], strides = [1, 1]} : vector<8x96xf32> to vector<8x32xf32>
    %623 = vector.extract_strided_slice %619 {offsets = [0, 32], sizes = [8, 32], strides = [1, 1]} : vector<8x96xf32> to vector<8x32xf32>
    %624 = vector.extract_strided_slice %619 {offsets = [0, 64], sizes = [8, 32], strides = [1, 1]} : vector<8x96xf32> to vector<8x32xf32>
    %625 = arith.mulf %623, %590 : vector<8x32xf32>
    %626 = arith.mulf %622, %621 : vector<8x32xf32>
    %627 = arith.addf %625, %626 : vector<8x32xf32>
    %628 = math.tanh %627 : vector<8x32xf32>
    %629 = arith.mulf %624, %628 : vector<8x32xf32>
    %630 = tpu.concatenate %370, %407, %444, %481, %518, %555, %592, %629 in 1 : vector<8x32xf32>, vector<8x32xf32>, vector<8x32xf32>, vector<8x32xf32>, vector<8x32xf32>, vector<8x32xf32>, vector<8x32xf32>, vector<8x32xf32> -> vector<8x256xf32>
    %c0_95 = arith.constant 0 : index
    %c0_96 = arith.constant 0 : index
    %631 = vector.load %arg12[%c0_95, %c0_96] : memref<8x256xf32, #tpu.memory_space<vmem>>, vector<8x256xf32>
    tpu.vector_store %arg12[%c0_95, %c0_96], %630 {strides = array<i32>} : memref<8x256xf32, #tpu.memory_space<vmem>>, vector<8x256xf32>,
    return
  }
  func.func @transform_0(%arg0: i32) -> (i32, i32, i32) {
    %c0_i32 = arith.constant 0 : i32
    %c0_i32_0 = arith.constant 0 : i32
    %c0_i32_1 = arith.constant 0 : i32
    return %arg0, %c0_i32, %c0_i32_0 : i32, i32, i32
  }
  func.func @transform_1(%arg0: i32) -> (i32, i32) {
    %c0_i32 = arith.constant 0 : i32
    %c0_i32_0 = arith.constant 0 : i32
    %c0_i32_1 = arith.constant 0 : i32
    return %c0_i32, %c0_i32_0 : i32, i32
  }
  func.func @transform_2(%arg0: i32) -> (i32, i32) {
    %c0_i32 = arith.constant 0 : i32
    %c0_i32_0 = arith.constant 0 : i32
    %c0_i32_1 = arith.constant 0 : i32
    return %c0_i32, %c0_i32_0 : i32, i32
  }
  func.func @transform_3(%arg0: i32) -> (i32, i32) {
    %c0_i32 = arith.constant 0 : i32
    %c0_i32_0 = arith.constant 0 : i32
    %c0_i32_1 = arith.constant 0 : i32
    return %c0_i32, %c0_i32_0 : i32, i32
  }
  func.func @transform_4(%arg0: i32) -> (i32, i32) {
    %c0_i32 = arith.constant 0 : i32
    %c0_i32_0 = arith.constant 0 : i32
    %c0_i32_1 = arith.constant 0 : i32
    return %c0_i32, %c0_i32_0 : i32, i32
  }
  func.func @transform_5(%arg0: i32) -> (i32, i32) {
    %c0_i32 = arith.constant 0 : i32
    %c0_i32_0 = arith.constant 0 : i32
    %c0_i32_1 = arith.constant 0 : i32
    return %c0_i32, %c0_i32_0 : i32, i32
  }
  func.func @transform_6(%arg0: i32) -> (i32, i32) {
    %c0_i32 = arith.constant 0 : i32
    %c0_i32_0 = arith.constant 0 : i32
    %c0_i32_1 = arith.constant 0 : i32
    return %c0_i32, %c0_i32_0 : i32, i32
  }
  func.func @transform_7(%arg0: i32) -> (i32, i32) {
    %c0_i32 = arith.constant 0 : i32
    %c0_i32_0 = arith.constant 0 : i32
    %c0_i32_1 = arith.constant 0 : i32
    return %c0_i32, %c0_i32_0 : i32, i32
  }
  func.func @transform_8(%arg0: i32) -> (i32, i32) {
    %c0_i32 = arith.constant 0 : i32
    %c0_i32_0 = arith.constant 0 : i32
    %c0_i32_1 = arith.constant 0 : i32
    return %c0_i32, %c0_i32_0 : i32, i32
  }
  func.func @transform_9(%arg0: i32) -> (i32, i32) {
    %c0_i32 = arith.constant 0 : i32
    %c0_i32_0 = arith.constant 0 : i32
    %c0_i32_1 = arith.constant 0 : i32
    return %c0_i32, %c0_i32_0 : i32, i32
  }
  func.func @transform_10(%arg0: i32) -> (i32, i32) {
    %c0_i32 = arith.constant 0 : i32
    %c0_i32_0 = arith.constant 0 : i32
    %c0_i32_1 = arith.constant 0 : i32
    return %c0_i32, %c0_i32_0 : i32, i32
  }
  func.func @transform_11(%arg0: i32) -> (i32, i32) {
    %c0_i32 = arith.constant 0 : i32
    %c0_i32_0 = arith.constant 0 : i32
    return %arg0, %c0_i32 : i32, i32
  }
}

</mosaic_0001>

<llo_original>
// kernel: tpu_custom_call.1
$region0: #{tpu_custom_call.1}
  #allocation0 [shape = 'u32[]', space=smem, size = 0x4, offset = 0x4, fixed_abs, tag = 'smem constant byte address 0x4 - core index']
  #allocation1 [shape = 'u32[144,128]{1,0:T(1,128)}', space=vmem, size = 0x12000, scoped, tag = 'internal scratch']
  %s0 = inlined_call_operand.vmem [shape: f32[1,64,16], index: 0, kind: input, shape index: {}]
  %s1 = inlined_call_operand.hbm [shape: f32[16,128], index: 1, kind: input, shape index: {}]
  %s2 = inlined_call_operand.hbm [shape: f32[32,128], index: 2, kind: input, shape index: {}]
  %s3 = inlined_call_operand.vmem [shape: f32[1,128], index: 3, kind: input, shape index: {}]
  %s4 = inlined_call_operand.vmem [shape: f32[64,128], index: 4, kind: input, shape index: {}]
  %s5 = inlined_call_operand.vmem [shape: f32[1,128], index: 5, kind: input, shape index: {}]
  %s6 = inlined_call_operand.vmem [shape: f32[32,128], index: 6, kind: input, shape index: {}]
  %s7 = inlined_call_operand.hbm [shape: f32[32,128], index: 7, kind: input, shape index: {}]
  %s8 = inlined_call_operand.vmem [shape: f32[1,128], index: 8, kind: input, shape index: {}]
  %s9 = inlined_call_operand.hbm [shape: f32[64,128], index: 9, kind: input, shape index: {}]
  %s10 = inlined_call_operand.vmem [shape: f32[1,128], index: 10, kind: input, shape index: {}]
  %s11 = inlined_call_operand.hbm [shape: f32[8,256], index: 11, kind: output, shape index: {}]
  %s12 = sld [smem:[#allocation0]]
  $region70: #{tpu_custom_call.1} parent=0
    _
  %s14 = ssub.s32 1, %s12
  %s15 = scalar_select 0, %s14, %s12
  $region1: #{tpu_custom_call.1} parent=0
    #allocation2 [shape = 'u8[8192]{0}', space=vmem, size = 0x2000, scoped, tag = 'input window, operand 1, single buffered']
    #allocation3 [shape = 's32[1]{0}', space=sflag, size = 0x4, scoped, tag = 'scoped memory for tpu_custom_call.1']
    #allocation4 [shape = 's32[1]{0}', space=sflag, size = 0x4, scoped, tag = 'scoped memory for tpu_custom_call.1']
    #allocation5 [shape = 'u8[16384]{0}', space=vmem, size = 0x4000, scoped, tag = 'input window, operand 2, single buffered']
    #allocation6 [shape = 's32[1]{0}', space=sflag, size = 0x4, scoped, tag = 'scoped memory for tpu_custom_call.1']
    #allocation7 [shape = 'u8[16384]{0}', space=vmem, size = 0x4000, scoped, tag = 'input window, operand 7, single buffered']
    #allocation8 [shape = 'u8[32768]{0}', space=vmem, size = 0x8000, scoped, tag = 'input window, operand 9, single buffered']
    #allocation9 [shape = 's32[1]{0}', space=sflag, size = 0x4, scoped, tag = 'scoped memory for tpu_custom_call.1']
    #allocation10 [shape = 'u8[8192]{0}', space=vmem, size = 0x2000, scoped, tag = 'output window, operand 0, single buffered']
    %16 = vsyncpa [#allocation3], 0
    %17 = vsyncpa [#allocation6], 0
    %18 = vsyncpa [#allocation9], 0
    %19 = vsyncpa [#allocation4], 0
    // Predicated region
    $region2: #{tpu_custom_call.1} parent=1 // pred_check
      _
    $region3: #{tpu_custom_call.1} parent=1 // pred_check_branch
      %21 = sbr.rel (0) target = $region5
    $region4: #{tpu_custom_call.1} parent=1 // pred_region
      _
    $region5: #{tpu_custom_call.1} parent=1 // pred_fallthru
      _
    // Predicated region
    $region6: #{tpu_custom_call.1} parent=1 // pred_check
      _
    $region7: #{tpu_custom_call.1} parent=1 // pred_check_branch
      %23 = sbr.rel (0) target = $region9
    $region8: #{tpu_custom_call.1} parent=1 // pred_region
      %s25 = ssub.s32 256, 256
      %26 = vsyncadd [#allocation3], %s25
      %s27 = sshll.u32 [#allocation2], 4
      %s28 = int_to_ptr.vmem [resolvable:$true] %s27
      %33 = dma.hbm_to_vmem [thread:$0]  %s1, 256, %s28, [#allocation3], 128, 128, 8
    $region9: #{tpu_custom_call.1} parent=1 // pred_fallthru
      _
    // Predicated region
    $region10: #{tpu_custom_call.1} parent=1 // pred_check
      _
    $region11: #{tpu_custom_call.1} parent=1 // pred_check_branch
      %35 = sbr.rel (0) target = $region13
    $region12: #{tpu_custom_call.1} parent=1 // pred_region
      %s37 = ssub.s32 512, 512
      %38 = vsyncadd [#allocation6], %s37
      %s39 = sshll.u32 [#allocation5], 4
      %s40 = int_to_ptr.vmem [resolvable:$true] %s39
      %45 = dma.hbm_to_vmem [thread:$0]  %s2, 512, %s40, [#allocation6], 128, 128, 8
    $region13: #{tpu_custom_call.1} parent=1 // pred_fallthru
      _
    // Predicated region
    $region14: #{tpu_custom_call.1} parent=1 // pred_check
      _
    $region15: #{tpu_custom_call.1} parent=1 // pred_check_branch
      %47 = sbr.rel (0) target = $region17
    $region16: #{tpu_custom_call.1} parent=1 // pred_region
      _
    $region17: #{tpu_custom_call.1} parent=1 // pred_fallthru
      _
    // Predicated region
    $region18: #{tpu_custom_call.1} parent=1 // pred_check
      _
    $region19: #{tpu_custom_call.1} parent=1 // pred_check_branch
      %49 = sbr.rel (0) target = $region21
    $region20: #{tpu_custom_call.1} parent=1 // pred_region
      _
    $region21: #{tpu_custom_call.1} parent=1 // pred_fallthru
      _
    // Predicated region
    $region22: #{tpu_custom_call.1} parent=1 // pred_check
      _
    $region23: #{tpu_custom_call.1} parent=1 // pred_check_branch
      %51 = sbr.rel (0) target = $region25
    $region24: #{tpu_custom_call.1} parent=1 // pred_region
      _
    $region25: #{tpu_custom_call.1} parent=1 // pred_fallthru
      _
    // Predicated region
    $region26: #{tpu_custom_call.1} parent=1 // pred_check
      _
    $region27: #{tpu_custom_call.1} parent=1 // pred_check_branch
      %53 = sbr.rel (0) target = $region29
    $region28: #{tpu_custom_call.1} parent=1 // pred_region
      _
    $region29: #{tpu_custom_call.1} parent=1 // pred_fallthru
      _
    // Predicated region
    $region30: #{tpu_custom_call.1} parent=1 // pred_check
      _
    $region31: #{tpu_custom_call.1} parent=1 // pred_check_branch
      %55 = sbr.rel (0) target = $region33
    $region32: #{tpu_custom_call.1} parent=1 // pred_region
      %s57 = ssub.s32 512, 512
      %58 = vsyncadd [#allocation6], %s57
      %s59 = sshll.u32 [#allocation7], 4
      %s60 = int_to_ptr.vmem [resolvable:$true] %s59
      %65 = dma.hbm_to_vmem [thread:$0]  %s7, 512, %s60, [#allocation6], 128, 128, 8
    $region33: #{tpu_custom_call.1} parent=1 // pred_fallthru
      _
    // Predicated region
    $region34: #{tpu_custom_call.1} parent=1 // pred_check
      _
    $region35: #{tpu_custom_call.1} parent=1 // pred_check_branch
      %67 = sbr.rel (0) target = $region37
    $region36: #{tpu_custom_call.1} parent=1 // pred_region
      _
    $region37: #{tpu_custom_call.1} parent=1 // pred_fallthru
      _
    // Predicated region
    $region38: #{tpu_custom_call.1} parent=1 // pred_check
      _
    $region39: #{tpu_custom_call.1} parent=1 // pred_check_branch
      %69 = sbr.rel (0) target = $region41
    $region40: #{tpu_custom_call.1} parent=1 // pred_region
      %s71 = ssub.s32 1024, 1024
      %72 = vsyncadd [#allocation9], %s71
      %s73 = sshll.u32 [#allocation8], 4
      %s74 = int_to_ptr.vmem [resolvable:$true] %s73
      %79 = dma.hbm_to_vmem [thread:$0]  %s9, 1024, %s74, [#allocation9], 128, 128, 8
    $region41: #{tpu_custom_call.1} parent=1 // pred_fallthru
      _
    // Predicated region
    $region42: #{tpu_custom_call.1} parent=1 // pred_check
      _
    $region43: #{tpu_custom_call.1} parent=1 // pred_check_branch
      %81 = sbr.rel (0) target = $region45
    $region44: #{tpu_custom_call.1} parent=1 // pred_region
      _
    $region45: #{tpu_custom_call.1} parent=1 // pred_fallthru
      _
    // Predicated region
    $region46: #{tpu_custom_call.1} parent=1 // pred_check
      _
    $region47: #{tpu_custom_call.1} parent=1 // pred_check_branch
      %83 = sbr.rel (0) target = $region49
    $region48: #{tpu_custom_call.1} parent=1 // pred_region
      %84 = dma.done [#allocation3], 256
    $region49: #{tpu_custom_call.1} parent=1 // pred_fallthru
      _
    // Predicated region
    $region50: #{tpu_custom_call.1} parent=1 // pred_check
      _
    $region51: #{tpu_custom_call.1} parent=1 // pred_check_branch
      %86 = sbr.rel (0) target = $region53
    $region52: #{tpu_custom_call.1} parent=1 // pred_region
      %87 = dma.done [#allocation6], 512
    $region53: #{tpu_custom_call.1} parent=1 // pred_fallthru
      _
    // Predicated region
    $region54: #{tpu_custom_call.1} parent=1 // pred_check
      _
    $region55: #{tpu_custom_call.1} parent=1 // pred_check_branch
      %89 = sbr.rel (0) target = $region57
    $region56: #{tpu_custom_call.1} parent=1 // pred_region
      %90 = dma.done [#allocation6], 512
    $region57: #{tpu_custom_call.1} parent=1 // pred_fallthru
      _
    // Predicated region
    $region58: #{tpu_custom_call.1} parent=1 // pred_check
      _
    $region59: #{tpu_custom_call.1} parent=1 // pred_check_branch
      %92 = sbr.rel (0) target = $region61
    $region60: #{tpu_custom_call.1} parent=1 // pred_region
      %93 = dma.done [#allocation9], 1024
    $region61: #{tpu_custom_call.1} parent=1 // pred_fallthru
      _
    %v94 = vld [vmem:[%s0] sm:$0xff]
    %v95 = vld [vmem:[%s0 + $0x8] sm:$0xff]
    %v96 = vld [vmem:[%s0 + $0x10] sm:$0xff]
    %v97 = vld [vmem:[%s0 + $0x18] sm:$0xff]
    %v98 = vld [vmem:[%s0 + $0x20] sm:$0xff]
    %v99 = vld [vmem:[%s0 + $0x28] sm:$0xff]
    %v100 = vld [vmem:[%s0 + $0x30] sm:$0xff]
    %v101 = vld [vmem:[%s0 + $0x38] sm:$0xff]
    %v102 = vld [vmem:[#allocation2] sm:$0xff]
    %v103 = vld [vmem:[#allocation2 + $0x8] sm:$0xff]
    %v104 = vld [vmem:[%s3] sm:$0x1]
    %v106 = vlaneseq
    %v107 = vshrl.u32 %v106, 7
    %v108 = vsub.s32 0, %v107
    %v109 = vrot.slane %v104, %v108
    %vm111 = vcmask 130048
    %v113 = vsel %vm111, %v94, 0
    %v116 = vsel %vm111, %v95, 0
    %v119 = vsel %vm111, %v96, 0
    %v122 = vsel %vm111, %v97, 0
    %v125 = vsel %vm111, %v98, 0
    %v128 = vsel %vm111, %v99, 0
    %v131 = vsel %vm111, %v100, 0
    %v134 = vsel %vm111, %v101, 0
    %136 = vmatprep.subr.mxu0 0.0
    %137 = vmatpush1.msra.mxu0 %v102
    %138 = vmatprep.subr.mxu0 0.0
    %139 = vmatpush1.msra.mxu0 %v103
    %140 = vmatprep.subr.mxu0 0.0
    %141 = vmatpush1.msra.mxu0 0.0
    %142 = vmatprep.subr.mxu0 0.0
    %143 = vmatpush1.msra.mxu0 0.0
    %144 = vmatprep.subr.mxu0 0.0
    %145 = vmatpush1.msra.mxu0 0.0
    %146 = vmatprep.subr.mxu0 0.0
    %147 = vmatpush1.msra.mxu0 0.0
    %148 = vmatprep.subr.mxu0 0.0
    %149 = vmatpush1.msra.mxu0 0.0
    %150 = vmatprep.subr.mxu0 0.0
    %151 = vmatpush1.msra.mxu0 0.0
    %152 = vmatprep.subr.mxu0 0.0
    %153 = vmatpush1.msra.mxu0 0.0
    %154 = vmatprep.subr.mxu0 0.0
    %155 = vmatpush1.msra.mxu0 0.0
    %156 = vmatprep.subr.mxu0 0.0
    %157 = vmatpush1.msra.mxu0 0.0
    %158 = vmatprep.subr.mxu0 0.0
    %159 = vmatpush1.msra.mxu0 0.0
    %160 = vmatprep.subr.mxu0 0.0
    %161 = vmatpush1.msra.mxu0 0.0
    %162 = vmatprep.subr.mxu0 0.0
    %163 = vmatpush1.msra.mxu0 0.0
    %164 = vmatprep.subr.mxu0 0.0
    %165 = vmatpush1.msra.mxu0 0.0
    %166 = vmatprep.subr.mxu0 0.0
    %167 = vmatpush1.msra.mxu0 0.0
    %168 = vmatprep.subr.mxu0 0.0
    %169 = vmatpush1.msra.mxu0 0.0
    %170 = vmatprep.subr.mxu0 0.0
    %171 = vmatpush1.msra.mxu0 0.0
    %172 = vmatprep.subr.mxu0 0.0
    %173 = vmatpush1.msra.mxu0 0.0
    %174 = vmatprep.subr.mxu0 0.0
    %175 = vmatpush1.msra.mxu0 0.0
    %176 = vmatprep.subr.mxu0 0.0
    %177 = vmatpush1.msra.mxu0 0.0
    %178 = vmatprep.subr.mxu0 0.0
    %179 = vmatpush1.msra.mxu0 0.0
    %180 = vmatprep.subr.mxu0 0.0
    %181 = vmatpush1.msra.mxu0 0.0
    %182 = vmatprep.subr.mxu0 0.0
    %183 = vmatpush1.msra.mxu0 0.0
    %184 = vmatprep.subr.mxu0 0.0
    %185 = vmatpush1.msra.mxu0 0.0
    %186 = vmatprep.subr.mxu0 0.0
    %187 = vmatpush1.msra.mxu0 0.0
    %188 = vmatprep.subr.mxu0 0.0
    %189 = vmatpush1.msra.mxu0 0.0
    %190 = vmatprep.subr.mxu0 0.0
    %191 = vmatpush1.msra.mxu0 0.0
    %192 = vmatprep.subr.mxu0 0.0
    %193 = vmatpush1.msra.mxu0 0.0
    %194 = vmatprep.subr.mxu0 0.0
    %195 = vmatpush1.msra.mxu0 0.0
    %196 = vmatprep.subr.mxu0 0.0
    %197 = vmatpush1.msra.mxu0 0.0
    %198 = vmatprep.subr.mxu0 0.0
    %199 = vmatpush1.msra.mxu0 0.0
    %200 = vmatprep.mubr.f32.mxu0 0.0
    %201 = vmatmul.mubr.f32.gmra.mrb[0].mxu0 %v113
    %v202 = vpop.f32.mrb[0].mxu0
    %v203 = vadd.f32 %v109, %v202
    %v204 = vpop.f32.mrb[0].mxu0
    %205 = vmatprep.mubr.f32.mxu0 0.0
    %206 = vmatmul.mubr.f32.gmra.mrb[0].mxu0 %v116
    %v207 = vpop.f32.mrb[0].mxu0
    %v208 = vadd.f32 %v109, %v207
    %v209 = vpop.f32.mrb[0].mxu0
    %210 = vmatprep.mubr.f32.mxu0 0.0
    %211 = vmatmul.mubr.f32.gmra.mrb[0].mxu0 %v119
    %v212 = vpop.f32.mrb[0].mxu0
    %v213 = vadd.f32 %v109, %v212
    %v214 = vpop.f32.mrb[0].mxu0
    %215 = vmatprep.mubr.f32.mxu0 0.0
    %216 = vmatmul.mubr.f32.gmra.mrb[0].mxu0 %v122
    %v217 = vpop.f32.mrb[0].mxu0
    %v218 = vadd.f32 %v109, %v217
    %v219 = vpop.f32.mrb[0].mxu0
    %220 = vmatprep.mubr.f32.mxu0 0.0
    %221 = vmatmul.mubr.f32.gmra.mrb[0].mxu0 %v125
    %v222 = vpop.f32.mrb[0].mxu0
    %v223 = vadd.f32 %v109, %v222
    %v224 = vpop.f32.mrb[0].mxu0
    %225 = vmatprep.mubr.f32.mxu0 0.0
    %226 = vmatmul.mubr.f32.gmra.mrb[0].mxu0 %v128
    %v227 = vpop.f32.mrb[0].mxu0
    %v228 = vadd.f32 %v109, %v227
    %v229 = vpop.f32.mrb[0].mxu0
    %230 = vmatprep.mubr.f32.mxu0 0.0
    %231 = vmatmul.mubr.f32.gmra.mrb[0].mxu0 %v131
    %v232 = vpop.f32.mrb[0].mxu0
    %v233 = vadd.f32 %v109, %v232
    %v234 = vpop.f32.mrb[0].mxu0
    %235 = vmatprep.mubr.f32.mxu0 0.0
    %236 = vmatmul.mubr.f32.gmra.mrb[0].mxu0 %v134
    %v237 = vpop.f32.mrb[0].mxu0
    %v238 = vadd.f32 %v109, %v237
    %v239 = vpop.f32.mrb[0].mxu0
    %240 = vdwg.mxu0
    %v241 = vld [vmem:[#allocation5] sm:$0xff]
    %v242 = vld [vmem:[#allocation5 + $0x8] sm:$0xff]
    %v243 = vld [vmem:[#allocation5 + $0x10] sm:$0xff]
    %v244 = vld [vmem:[#allocation5 + $0x18] sm:$0xff]
    %v245 = vld [vmem:[%s4] sm:$0xff]
    %v246 = vld [vmem:[%s4 + $0x8] sm:$0xff]
    %v247 = vld [vmem:[%s4 + $0x10] sm:$0xff]
    %v248 = vld [vmem:[%s4 + $0x18] sm:$0xff]
    %v249 = vld [vmem:[%s4 + $0x20] sm:$0xff]
    %v250 = vld [vmem:[%s4 + $0x28] sm:$0xff]
    %v251 = vld [vmem:[%s4 + $0x30] sm:$0xff]
    %v252 = vld [vmem:[%s4 + $0x38] sm:$0xff]
    %v253 = vld [vmem:[%s5] sm:$0x1]
    %v255 = vlaneseq
    %v256 = vshrl.u32 %v255, 7
    %v257 = vsub.s32 0, %v256
    %v258 = vrot.slane %v253, %v257
    %vm260 = vcmask 261120
    %v262 = vsel %vm260, 0.0, 0
    %264 = vmatprep.subr.mxu0 0.0
    %265 = vmatpush1.msra.mxu0 %v241
    %266 = vmatprep.subr.mxu0 0.0
    %267 = vmatpush1.msra.mxu0 %v242
    %268 = vmatprep.subr.mxu0 0.0
    %269 = vmatpush1.msra.mxu0 %v243
    %270 = vmatprep.subr.mxu0 0.0
    %271 = vmatpush1.msra.mxu0 %v244
    %272 = vmatprep.subr.mxu0 0.0
    %273 = vmatpush1.msra.mxu0 0.0
    %274 = vmatprep.subr.mxu0 0.0
    %275 = vmatpush1.msra.mxu0 0.0
    %276 = vmatprep.subr.mxu0 0.0
    %277 = vmatpush1.msra.mxu0 0.0
    %278 = vmatprep.subr.mxu0 0.0
    %279 = vmatpush1.msra.mxu0 0.0
    %280 = vmatprep.subr.mxu0 0.0
    %281 = vmatpush1.msra.mxu0 0.0
    %282 = vmatprep.subr.mxu0 0.0
    %283 = vmatpush1.msra.mxu0 0.0
    %284 = vmatprep.subr.mxu0 0.0
    %285 = vmatpush1.msra.mxu0 0.0
    %286 = vmatprep.subr.mxu0 0.0
    %287 = vmatpush1.msra.mxu0 0.0
    %288 = vmatprep.subr.mxu0 0.0
    %289 = vmatpush1.msra.mxu0 0.0
    %290 = vmatprep.subr.mxu0 0.0
    %291 = vmatpush1.msra.mxu0 0.0
    %292 = vmatprep.subr.mxu0 0.0
    %293 = vmatpush1.msra.mxu0 0.0
    %294 = vmatprep.subr.mxu0 0.0
    %295 = vmatpush1.msra.mxu0 0.0
    %296 = vmatprep.subr.mxu0 0.0
    %297 = vmatpush1.msra.mxu0 0.0
    %298 = vmatprep.subr.mxu0 0.0
    %299 = vmatpush1.msra.mxu0 0.0
    %300 = vmatprep.subr.mxu0 0.0
    %301 = vmatpush1.msra.mxu0 0.0
    %302 = vmatprep.subr.mxu0 0.0
    %303 = vmatpush1.msra.mxu0 0.0
    %304 = vmatprep.subr.mxu0 0.0
    %305 = vmatpush1.msra.mxu0 0.0
    %306 = vmatprep.subr.mxu0 0.0
    %307 = vmatpush1.msra.mxu0 0.0
    %308 = vmatprep.subr.mxu0 0.0
    %309 = vmatpush1.msra.mxu0 0.0
    %310 = vmatprep.subr.mxu0 0.0
    %311 = vmatpush1.msra.mxu0 0.0
    %312 = vmatprep.subr.mxu0 0.0
    %313 = vmatpush1.msra.mxu0 0.0
    %314 = vmatprep.subr.mxu0 0.0
    %315 = vmatpush1.msra.mxu0 0.0
    %316 = vmatprep.subr.mxu0 0.0
    %317 = vmatpush1.msra.mxu0 0.0
    %318 = vmatprep.subr.mxu0 0.0
    %319 = vmatpush1.msra.mxu0 0.0
    %320 = vmatprep.subr.mxu0 0.0
    %321 = vmatpush1.msra.mxu0 0.0
    %322 = vmatprep.subr.mxu0 0.0
    %323 = vmatpush1.msra.mxu0 0.0
    %324 = vmatprep.subr.mxu0 0.0
    %325 = vmatpush1.msra.mxu0 0.0
    %326 = vmatprep.subr.mxu0 0.0
    %327 = vmatpush1.msra.mxu0 0.0
    %328 = vmatprep.mubr.f32.mxu0 0.0
    %329 = vmatmul.mubr.f32.gmra.mrb[0].mxu0 %v262
    %v330 = vpop.f32.mrb[0].mxu0
    %v331 = vadd.f32 0.0, %v330
    %v332 = vpop.f32.mrb[0].mxu0
    %333 = vdwg.mxu0
    %v334 = vadd.f32 %v203, %v331
    %v335 = vxor.u32 %v334, 2147483648
    %v336 = vmul.f32 %v335, 1.442695
    %v337 = vpow.pop %v336
    %v338 = vadd.f32 %v337, 1.0
    %v339 = vrcp.pop %v338
    %v340 = vmul.f32 1.0, %v339
    %v341 = vtanh.pop %v334
    %v342 = vmul.f32 %v340, 0.0
    %344 = vrot.lane.b32.xlu0 %v341, 32
    %v345 = vpop.permute.xlu0 %344
    %v347 = vmul.f32 %v340, %v345
    %349 = vrot.lane.b32.xlu0 %v347, 32
    %v350 = vpop.permute.xlu0 %349
    %v352 = vadd.f32 %v342, %v350
    %v353 = vtanh.pop %v352
    %355 = vrot.lane.b32.xlu0 %v353, 32
    %v356 = vpop.permute.xlu0 %355
    %v358 = vmul.f32 %v340, %v356
    %360 = vrot.lane.b32.xlu0 %v358, 64
    %v361 = vpop.permute.xlu0 %360
    %v363 = vsel %vm260, %v361, 0.0
    %vm364 = vcmask 523264
    %v366 = vsel %vm364, %v363, 0
    %368 = vmatprep.subr.mxu0 0.0
    %369 = vmatpush1.msra.mxu0 %v245
    %370 = vmatprep.subr.mxu0 0.0
    %371 = vmatpush1.msra.mxu0 %v246
    %372 = vmatprep.subr.mxu0 0.0
    %373 = vmatpush1.msra.mxu0 %v247
    %374 = vmatprep.subr.mxu0 0.0
    %375 = vmatpush1.msra.mxu0 %v248
    %376 = vmatprep.subr.mxu0 0.0
    %377 = vmatpush1.msra.mxu0 %v249
    %378 = vmatprep.subr.mxu0 0.0
    %379 = vmatpush1.msra.mxu0 %v250
    %380 = vmatprep.subr.mxu0 0.0
    %381 = vmatpush1.msra.mxu0 %v251
    %382 = vmatprep.subr.mxu0 0.0
    %383 = vmatpush1.msra.mxu0 %v252
    %384 = vmatprep.subr.mxu0 0.0
    %385 = vmatpush1.msra.mxu0 0.0
    %386 = vmatprep.subr.mxu0 0.0
    %387 = vmatpush1.msra.mxu0 0.0
    %388 = vmatprep.subr.mxu0 0.0
    %389 = vmatpush1.msra.mxu0 0.0
    %390 = vmatprep.subr.mxu0 0.0
    %391 = vmatpush1.msra.mxu0 0.0
    %392 = vmatprep.subr.mxu0 0.0
    %393 = vmatpush1.msra.mxu0 0.0
    %394 = vmatprep.subr.mxu0 0.0
    %395 = vmatpush1.msra.mxu0 0.0
    %396 = vmatprep.subr.mxu0 0.0
    %397 = vmatpush1.msra.mxu0 0.0
    %398 = vmatprep.subr.mxu0 0.0
    %399 = vmatpush1.msra.mxu0 0.0
    %400 = vmatprep.subr.mxu0 0.0
    %401 = vmatpush1.msra.mxu0 0.0
    %402 = vmatprep.subr.mxu0 0.0
    %403 = vmatpush1.msra.mxu0 0.0
    %404 = vmatprep.subr.mxu0 0.0
    %405 = vmatpush1.msra.mxu0 0.0
    %406 = vmatprep.subr.mxu0 0.0
    %407 = vmatpush1.msra.mxu0 0.0
    %408 = vmatprep.subr.mxu0 0.0
    %409 = vmatpush1.msra.mxu0 0.0
    %410 = vmatprep.subr.mxu0 0.0
    %411 = vmatpush1.msra.mxu0 0.0
    %412 = vmatprep.subr.mxu0 0.0
    %413 = vmatpush1.msra.mxu0 0.0
    %414 = vmatprep.subr.mxu0 0.0
    %415 = vmatpush1.msra.mxu0 0.0
    %416 = vmatprep.subr.mxu0 0.0
    %417 = vmatpush1.msra.mxu0 0.0
    %418 = vmatprep.subr.mxu0 0.0
    %419 = vmatpush1.msra.mxu0 0.0
    %420 = vmatprep.subr.mxu0 0.0
    %421 = vmatpush1.msra.mxu0 0.0
    %422 = vmatprep.subr.mxu0 0.0
    %423 = vmatpush1.msra.mxu0 0.0
    %424 = vmatprep.subr.mxu0 0.0
    %425 = vmatpush1.msra.mxu0 0.0
    %426 = vmatprep.subr.mxu0 0.0
    %427 = vmatpush1.msra.mxu0 0.0
    %428 = vmatprep.subr.mxu0 0.0
    %429 = vmatpush1.msra.mxu0 0.0
    %430 = vmatprep.subr.mxu0 0.0
    %431 = vmatpush1.msra.mxu0 0.0
    %432 = vmatprep.mubr.f32.mxu0 0.0
    %433 = vmatmul.mubr.f32.gmra.mrb[0].mxu0 %v366
    %v434 = vpop.f32.mrb[0].mxu0
    %v435 = vadd.f32 %v258, %v434
    %v436 = vpop.f32.mrb[0].mxu0
    %437 = vdwg.mxu0
    %v438 = vxor.u32 %v435, 2147483648
    %v439 = vmul.f32 %v438, 1.442695
    %v440 = vpow.pop %v439
    %v441 = vadd.f32 %v440, 1.0
    %v442 = vrcp.pop %v441
    %v443 = vmul.f32 1.0, %v442
    %v444 = vtanh.pop %v435
    %v445 = vmul.f32 %v443, 0.0
    %447 = vrot.lane.b32.xlu0 %v444, 32
    %v448 = vpop.permute.xlu0 %447
    %v450 = vmul.f32 %v443, %v448
    %452 = vrot.lane.b32.xlu0 %v450, 32
    %v453 = vpop.permute.xlu0 %452
    %v455 = vadd.f32 %v445, %v453
    %v456 = vtanh.pop %v455
    %458 = vrot.lane.b32.xlu0 %v456, 32
    %v459 = vpop.permute.xlu0 %458
    %v461 = vmul.f32 %v443, %v459
    %v462 = vsel %vm260, %v361, 0
    %464 = vmatprep.subr.mxu0 0.0
    %465 = vmatpush1.msra.mxu0 %v241
    %466 = vmatprep.subr.mxu0 0.0
    %467 = vmatpush1.msra.mxu0 %v242
    %468 = vmatprep.subr.mxu0 0.0
    %469 = vmatpush1.msra.mxu0 %v243
    %470 = vmatprep.subr.mxu0 0.0
    %471 = vmatpush1.msra.mxu0 %v244
    %472 = vmatprep.subr.mxu0 0.0
    %473 = vmatpush1.msra.mxu0 0.0
    %474 = vmatprep.subr.mxu0 0.0
    %475 = vmatpush1.msra.mxu0 0.0
    %476 = vmatprep.subr.mxu0 0.0
    %477 = vmatpush1.msra.mxu0 0.0
    %478 = vmatprep.subr.mxu0 0.0
    %479 = vmatpush1.msra.mxu0 0.0
    %480 = vmatprep.subr.mxu0 0.0
    %481 = vmatpush1.msra.mxu0 0.0
    %482 = vmatprep.subr.mxu0 0.0
    %483 = vmatpush1.msra.mxu0 0.0
    %484 = vmatprep.subr.mxu0 0.0
    %485 = vmatpush1.msra.mxu0 0.0
    %486 = vmatprep.subr.mxu0 0.0
    %487 = vmatpush1.msra.mxu0 0.0
    %488 = vmatprep.subr.mxu0 0.0
    %489 = vmatpush1.msra.mxu0 0.0
    %490 = vmatprep.subr.mxu0 0.0
    %491 = vmatpush1.msra.mxu0 0.0
    %492 = vmatprep.subr.mxu0 0.0
    %493 = vmatpush1.msra.mxu0 0.0
    %494 = vmatprep.subr.mxu0 0.0
    %495 = vmatpush1.msra.mxu0 0.0
    %496 = vmatprep.subr.mxu0 0.0
    %497 = vmatpush1.msra.mxu0 0.0
    %498 = vmatprep.subr.mxu0 0.0
    %499 = vmatpush1.msra.mxu0 0.0
    %500 = vmatprep.subr.mxu0 0.0
    %501 = vmatpush1.msra.mxu0 0.0
    %502 = vmatprep.subr.mxu0 0.0
    %503 = vmatpush1.msra.mxu0 0.0
    %504 = vmatprep.subr.mxu0 0.0
    %505 = vmatpush1.msra.mxu0 0.0
    %506 = vmatprep.subr.mxu0 0.0
    %507 = vmatpush1.msra.mxu0 0.0
    %508 = vmatprep.subr.mxu0 0.0
    %509 = vmatpush1.msra.mxu0 0.0
    %510 = vmatprep.subr.mxu0 0.0
    %511 = vmatpush1.msra.mxu0 0.0
    %512 = vmatprep.subr.mxu0 0.0
    %513 = vmatpush1.msra.mxu0 0.0
    %514 = vmatprep.subr.mxu0 0.0
    %515 = vmatpush1.msra.mxu0 0.0
    %516 = vmatprep.subr.mxu0 0.0
    %517 = vmatpush1.msra.mxu0 0.0
    %518 = vmatprep.subr.mxu0 0.0
    %519 = vmatpush1.msra.mxu0 0.0
    %520 = vmatprep.subr.mxu0 0.0
    %521 = vmatpush1.msra.mxu0 0.0
    %522 = vmatprep.subr.mxu0 0.0
    %523 = vmatpush1.msra.mxu0 0.0
    %524 = vmatprep.subr.mxu0 0.0
    %525 = vmatpush1.msra.mxu0 0.0
    %526 = vmatprep.subr.mxu0 0.0
    %527 = vmatpush1.msra.mxu0 0.0
    %528 = vmatprep.mubr.f32.mxu0 0.0
    %529 = vmatmul.mubr.f32.gmra.mrb[0].mxu0 %v462
    %v530 = vpop.f32.mrb[0].mxu0
    %v531 = vadd.f32 0.0, %v530
    %v532 = vpop.f32.mrb[0].mxu0
    %533 = vdwg.mxu0
    %v534 = vadd.f32 %v208, %v531
    %v535 = vxor.u32 %v534, 2147483648
    %v536 = vmul.f32 %v535, 1.442695
    %v537 = vpow.pop %v536
    %v538 = vadd.f32 %v537, 1.0
    %v539 = vrcp.pop %v538
    %v540 = vmul.f32 1.0, %v539
    %v541 = vtanh.pop %v534
    %v542 = vmul.f32 %v540, %v352
    %544 = vrot.lane.b32.xlu0 %v541, 32
    %v545 = vpop.permute.xlu0 %544
    %v547 = vmul.f32 %v540, %v545
    %549 = vrot.lane.b32.xlu0 %v547, 32
    %v550 = vpop.permute.xlu0 %549
    %v552 = vadd.f32 %v542, %v550
    %v553 = vtanh.pop %v552
    %555 = vrot.lane.b32.xlu0 %v553, 32
    %v556 = vpop.permute.xlu0 %555
    %v558 = vmul.f32 %v540, %v556
    %560 = vrot.lane.b32.xlu0 %v558, 64
    %v561 = vpop.permute.xlu0 %560
    %564 = vrot.lane.b32.xlu0 %v461, 96
    %v565 = vpop.permute.xlu0 %564
    %v567 = vsel %vm260, %v561, %v565
    %v569 = vsel %vm364, %v567, 0
    %571 = vmatprep.subr.mxu0 0.0
    %572 = vmatpush1.msra.mxu0 %v245
    %573 = vmatprep.subr.mxu0 0.0
    %574 = vmatpush1.msra.mxu0 %v246
    %575 = vmatprep.subr.mxu0 0.0
    %576 = vmatpush1.msra.mxu0 %v247
    %577 = vmatprep.subr.mxu0 0.0
    %578 = vmatpush1.msra.mxu0 %v248
    %579 = vmatprep.subr.mxu0 0.0
    %580 = vmatpush1.msra.mxu0 %v249
    %581 = vmatprep.subr.mxu0 0.0
    %582 = vmatpush1.msra.mxu0 %v250
    %583 = vmatprep.subr.mxu0 0.0
    %584 = vmatpush1.msra.mxu0 %v251
    %585 = vmatprep.subr.mxu0 0.0
    %586 = vmatpush1.msra.mxu0 %v252
    %587 = vmatprep.subr.mxu0 0.0
    %588 = vmatpush1.msra.mxu0 0.0
    %589 = vmatprep.subr.mxu0 0.0
    %590 = vmatpush1.msra.mxu0 0.0
    %591 = vmatprep.subr.mxu0 0.0
    %592 = vmatpush1.msra.mxu0 0.0
    %593 = vmatprep.subr.mxu0 0.0
    %594 = vmatpush1.msra.mxu0 0.0
    %595 = vmatprep.subr.mxu0 0.0
    %596 = vmatpush1.msra.mxu0 0.0
    %597 = vmatprep.subr.mxu0 0.0
    %598 = vmatpush1.msra.mxu0 0.0
    %599 = vmatprep.subr.mxu0 0.0
    %600 = vmatpush1.msra.mxu0 0.0
    %601 = vmatprep.subr.mxu0 0.0
    %602 = vmatpush1.msra.mxu0 0.0
    %603 = vmatprep.subr.mxu0 0.0
    %604 = vmatpush1.msra.mxu0 0.0
    %605 = vmatprep.subr.mxu0 0.0
    %606 = vmatpush1.msra.mxu0 0.0
    %607 = vmatprep.subr.mxu0 0.0
    %608 = vmatpush1.msra.mxu0 0.0
    %609 = vmatprep.subr.mxu0 0.0
    %610 = vmatpush1.msra.mxu0 0.0
    %611 = vmatprep.subr.mxu0 0.0
    %612 = vmatpush1.msra.mxu0 0.0
    %613 = vmatprep.subr.mxu0 0.0
    %614 = vmatpush1.msra.mxu0 0.0
    %615 = vmatprep.subr.mxu0 0.0
    %616 = vmatpush1.msra.mxu0 0.0
    %617 = vmatprep.subr.mxu0 0.0
    %618 = vmatpush1.msra.mxu0 0.0
    %619 = vmatprep.subr.mxu0 0.0
    %620 = vmatpush1.msra.mxu0 0.0
    %621 = vmatprep.subr.mxu0 0.0
    %622 = vmatpush1.msra.mxu0 0.0
    %623 = vmatprep.subr.mxu0 0.0
    %624 = vmatpush1.msra.mxu0 0.0
    %625 = vmatprep.subr.mxu0 0.0
    %626 = vmatpush1.msra.mxu0 0.0
    %627 = vmatprep.subr.mxu0 0.0
    %628 = vmatpush1.msra.mxu0 0.0
    %629 = vmatprep.subr.mxu0 0.0
    %630 = vmatpush1.msra.mxu0 0.0
    %631 = vmatprep.subr.mxu0 0.0
    %632 = vmatpush1.msra.mxu0 0.0
    %633 = vmatprep.subr.mxu0 0.0
    %634 = vmatpush1.msra.mxu0 0.0
    %635 = vmatprep.mubr.f32.mxu0 0.0
    %636 = vmatmul.mubr.f32.gmra.mrb[0].mxu0 %v569
    %v637 = vpop.f32.mrb[0].mxu0
    %v638 = vadd.f32 %v258, %v637
    %v639 = vpop.f32.mrb[0].mxu0
    %640 = vdwg.mxu0
    %v641 = vxor.u32 %v638, 2147483648
    %v642 = vmul.f32 %v641, 1.442695
    %v643 = vpow.pop %v642
    %v644 = vadd.f32 %v643, 1.0
    %v645 = vrcp.pop %v644
    %v646 = vmul.f32 1.0, %v645
    %v647 = vtanh.pop %v638
    %v648 = vmul.f32 %v646, %v455
    %650 = vrot.lane.b32.xlu0 %v647, 32
    %v651 = vpop.permute.xlu0 %650
    %v653 = vmul.f32 %v646, %v651
    %655 = vrot.lane.b32.xlu0 %v653, 32
    %v656 = vpop.permute.xlu0 %655
    %v658 = vadd.f32 %v648, %v656
    %v659 = vtanh.pop %v658
    %661 = vrot.lane.b32.xlu0 %v659, 32
    %v662 = vpop.permute.xlu0 %661
    %v664 = vmul.f32 %v646, %v662
    %v665 = vsel %vm260, %v561, 0
    %667 = vmatprep.subr.mxu0 0.0
    %668 = vmatpush1.msra.mxu0 %v241
    %669 = vmatprep.subr.mxu0 0.0
    %670 = vmatpush1.msra.mxu0 %v242
    %671 = vmatprep.subr.mxu0 0.0
    %672 = vmatpush1.msra.mxu0 %v243
    %673 = vmatprep.subr.mxu0 0.0
    %674 = vmatpush1.msra.mxu0 %v244
    %675 = vmatprep.subr.mxu0 0.0
    %676 = vmatpush1.msra.mxu0 0.0
    %677 = vmatprep.subr.mxu0 0.0
    %678 = vmatpush1.msra.mxu0 0.0
    %679 = vmatprep.subr.mxu0 0.0
    %680 = vmatpush1.msra.mxu0 0.0
    %681 = vmatprep.subr.mxu0 0.0
    %682 = vmatpush1.msra.mxu0 0.0
    %683 = vmatprep.subr.mxu0 0.0
    %684 = vmatpush1.msra.mxu0 0.0
    %685 = vmatprep.subr.mxu0 0.0
    %686 = vmatpush1.msra.mxu0 0.0
    %687 = vmatprep.subr.mxu0 0.0
    %688 = vmatpush1.msra.mxu0 0.0
    %689 = vmatprep.subr.mxu0 0.0
    %690 = vmatpush1.msra.mxu0 0.0
    %691 = vmatprep.subr.mxu0 0.0
    %692 = vmatpush1.msra.mxu0 0.0
    %693 = vmatprep.subr.mxu0 0.0
    %694 = vmatpush1.msra.mxu0 0.0
    %695 = vmatprep.subr.mxu0 0.0
    %696 = vmatpush1.msra.mxu0 0.0
    %697 = vmatprep.subr.mxu0 0.0
    %698 = vmatpush1.msra.mxu0 0.0
    %699 = vmatprep.subr.mxu0 0.0
    %700 = vmatpush1.msra.mxu0 0.0
    %701 = vmatprep.subr.mxu0 0.0
    %702 = vmatpush1.msra.mxu0 0.0
    %703 = vmatprep.subr.mxu0 0.0
    %704 = vmatpush1.msra.mxu0 0.0
    %705 = vmatprep.subr.mxu0 0.0
    %706 = vmatpush1.msra.mxu0 0.0
    %707 = vmatprep.subr.mxu0 0.0
    %708 = vmatpush1.msra.mxu0 0.0
    %709 = vmatprep.subr.mxu0 0.0
    %710 = vmatpush1.msra.mxu0 0.0
    %711 = vmatprep.subr.mxu0 0.0
    %712 = vmatpush1.msra.mxu0 0.0
    %713 = vmatprep.subr.mxu0 0.0
    %714 = vmatpush1.msra.mxu0 0.0
    %715 = vmatprep.subr.mxu0 0.0
    %716 = vmatpush1.msra.mxu0 0.0
    %717 = vmatprep.subr.mxu0 0.0
    %718 = vmatpush1.msra.mxu0 0.0
    %719 = vmatprep.subr.mxu0 0.0
    %720 = vmatpush1.msra.mxu0 0.0
    %721 = vmatprep.subr.mxu0 0.0
    %722 = vmatpush1.msra.mxu0 0.0
    %723 = vmatprep.subr.mxu0 0.0
    %724 = vmatpush1.msra.mxu0 0.0
    %725 = vmatprep.subr.mxu0 0.0
    %726 = vmatpush1.msra.mxu0 0.0
    %727 = vmatprep.subr.mxu0 0.0
    %728 = vmatpush1.msra.mxu0 0.0
    %729 = vmatprep.subr.mxu0 0.0
    %730 = vmatpush1.msra.mxu0 0.0
    %731 = vmatprep.mubr.f32.mxu0 0.0
    %732 = vmatmul.mubr.f32.gmra.mrb[0].mxu0 %v665
    %v733 = vpop.f32.mrb[0].mxu0
    %v734 = vadd.f32 0.0, %v733
    %v735 = vpop.f32.mrb[0].mxu0
    %736 = vdwg.mxu0
    %v737 = vadd.f32 %v213, %v734
    %v738 = vxor.u32 %v737, 2147483648
    %v739 = vmul.f32 %v738, 1.442695
    %v740 = vpow.pop %v739
    %v741 = vadd.f32 %v740, 1.0
    %v742 = vrcp.pop %v741
    %v743 = vmul.f32 1.0, %v742
    %v744 = vtanh.pop %v737
    %v745 = vmul.f32 %v743, %v552
    %747 = vrot.lane.b32.xlu0 %v744, 32
    %v748 = vpop.permute.xlu0 %747
    %v750 = vmul.f32 %v743, %v748
    %752 = vrot.lane.b32.xlu0 %v750, 32
    %v753 = vpop.permute.xlu0 %752
    %v755 = vadd.f32 %v745, %v753
    %v756 = vtanh.pop %v755
    %758 = vrot.lane.b32.xlu0 %v756, 32
    %v759 = vpop.permute.xlu0 %758
    %v761 = vmul.f32 %v743, %v759
    %763 = vrot.lane.b32.xlu0 %v761, 64
    %v764 = vpop.permute.xlu0 %763
    %767 = vrot.lane.b32.xlu0 %v664, 96
    %v768 = vpop.permute.xlu0 %767
    %v770 = vsel %vm260, %v764, %v768
    %v772 = vsel %vm364, %v770, 0
    %774 = vmatprep.subr.mxu0 0.0
    %775 = vmatpush1.msra.mxu0 %v245
    %776 = vmatprep.subr.mxu0 0.0
    %777 = vmatpush1.msra.mxu0 %v246
    %778 = vmatprep.subr.mxu0 0.0
    %779 = vmatpush1.msra.mxu0 %v247
    %780 = vmatprep.subr.mxu0 0.0
    %781 = vmatpush1.msra.mxu0 %v248
    %782 = vmatprep.subr.mxu0 0.0
    %783 = vmatpush1.msra.mxu0 %v249
    %784 = vmatprep.subr.mxu0 0.0
    %785 = vmatpush1.msra.mxu0 %v250
    %786 = vmatprep.subr.mxu0 0.0
    %787 = vmatpush1.msra.mxu0 %v251
    %788 = vmatprep.subr.mxu0 0.0
    %789 = vmatpush1.msra.mxu0 %v252
    %790 = vmatprep.subr.mxu0 0.0
    %791 = vmatpush1.msra.mxu0 0.0
    %792 = vmatprep.subr.mxu0 0.0
    %793 = vmatpush1.msra.mxu0 0.0
    %794 = vmatprep.subr.mxu0 0.0
    %795 = vmatpush1.msra.mxu0 0.0
    %796 = vmatprep.subr.mxu0 0.0
    %797 = vmatpush1.msra.mxu0 0.0
    %798 = vmatprep.subr.mxu0 0.0
    %799 = vmatpush1.msra.mxu0 0.0
    %800 = vmatprep.subr.mxu0 0.0
    %801 = vmatpush1.msra.mxu0 0.0
    %802 = vmatprep.subr.mxu0 0.0
    %803 = vmatpush1.msra.mxu0 0.0
    %804 = vmatprep.subr.mxu0 0.0
    %805 = vmatpush1.msra.mxu0 0.0
    %806 = vmatprep.subr.mxu0 0.0
    %807 = vmatpush1.msra.mxu0 0.0
    %808 = vmatprep.subr.mxu0 0.0
    %809 = vmatpush1.msra.mxu0 0.0
    %810 = vmatprep.subr.mxu0 0.0
    %811 = vmatpush1.msra.mxu0 0.0
    %812 = vmatprep.subr.mxu0 0.0
    %813 = vmatpush1.msra.mxu0 0.0
    %814 = vmatprep.subr.mxu0 0.0
    %815 = vmatpush1.msra.mxu0 0.0
    %816 = vmatprep.subr.mxu0 0.0
    %817 = vmatpush1.msra.mxu0 0.0
    %818 = vmatprep.subr.mxu0 0.0
    %819 = vmatpush1.msra.mxu0 0.0
    %820 = vmatprep.subr.mxu0 0.0
    %821 = vmatpush1.msra.mxu0 0.0
    %822 = vmatprep.subr.mxu0 0.0
    %823 = vmatpush1.msra.mxu0 0.0
    %824 = vmatprep.subr.mxu0 0.0
    %825 = vmatpush1.msra.mxu0 0.0
    %826 = vmatprep.subr.mxu0 0.0
    %827 = vmatpush1.msra.mxu0 0.0
    %828 = vmatprep.subr.mxu0 0.0
    %829 = vmatpush1.msra.mxu0 0.0
    %830 = vmatprep.subr.mxu0 0.0
    %831 = vmatpush1.msra.mxu0 0.0
    %832 = vmatprep.subr.mxu0 0.0
    %833 = vmatpush1.msra.mxu0 0.0
    %834 = vmatprep.subr.mxu0 0.0
    %835 = vmatpush1.msra.mxu0 0.0
    %836 = vmatprep.subr.mxu0 0.0
    %837 = vmatpush1.msra.mxu0 0.0
    %838 = vmatprep.mubr.f32.mxu0 0.0
    %839 = vmatmul.mubr.f32.gmra.mrb[0].mxu0 %v772
    %v840 = vpop.f32.mrb[0].mxu0
    %v841 = vadd.f32 %v258, %v840
    %v842 = vpop.f32.mrb[0].mxu0
    %843 = vdwg.mxu0
    %v844 = vxor.u32 %v841, 2147483648
    %v845 = vmul.f32 %v844, 1.442695
    %v846 = vpow.pop %v845
    %v847 = vadd.f32 %v846, 1.0
    %v848 = vrcp.pop %v847
    %v849 = vmul.f32 1.0, %v848
    %v850 = vtanh.pop %v841
    %v851 = vmul.f32 %v849, %v658
    %853 = vrot.lane.b32.xlu0 %v850, 32
    %v854 = vpop.permute.xlu0 %853
    %v856 = vmul.f32 %v849, %v854
    %858 = vrot.lane.b32.xlu0 %v856, 32
    %v859 = vpop.permute.xlu0 %858
    %v861 = vadd.f32 %v851, %v859
    %v862 = vtanh.pop %v861
    %864 = vrot.lane.b32.xlu0 %v862, 32
    %v865 = vpop.permute.xlu0 %864
    %v867 = vmul.f32 %v849, %v865
    %v868 = vsel %vm260, %v764, 0
    %870 = vmatprep.subr.mxu0 0.0
    %871 = vmatpush1.msra.mxu0 %v241
    %872 = vmatprep.subr.mxu0 0.0
    %873 = vmatpush1.msra.mxu0 %v242
    %874 = vmatprep.subr.mxu0 0.0
    %875 = vmatpush1.msra.mxu0 %v243
    %876 = vmatprep.subr.mxu0 0.0
    %877 = vmatpush1.msra.mxu0 %v244
    %878 = vmatprep.subr.mxu0 0.0
    %879 = vmatpush1.msra.mxu0 0.0
    %880 = vmatprep.subr.mxu0 0.0
    %881 = vmatpush1.msra.mxu0 0.0
    %882 = vmatprep.subr.mxu0 0.0
    %883 = vmatpush1.msra.mxu0 0.0
    %884 = vmatprep.subr.mxu0 0.0
    %885 = vmatpush1.msra.mxu0 0.0
    %886 = vmatprep.subr.mxu0 0.0
    %887 = vmatpush1.msra.mxu0 0.0
    %888 = vmatprep.subr.mxu0 0.0
    %889 = vmatpush1.msra.mxu0 0.0
    %890 = vmatprep.subr.mxu0 0.0
    %891 = vmatpush1.msra.mxu0 0.0
    %892 = vmatprep.subr.mxu0 0.0
    %893 = vmatpush1.msra.mxu0 0.0
    %894 = vmatprep.subr.mxu0 0.0
    %895 = vmatpush1.msra.mxu0 0.0
    %896 = vmatprep.subr.mxu0 0.0
    %897 = vmatpush1.msra.mxu0 0.0
    %898 = vmatprep.subr.mxu0 0.0
    %899 = vmatpush1.msra.mxu0 0.0
    %900 = vmatprep.subr.mxu0 0.0
    %901 = vmatpush1.msra.mxu0 0.0
    %902 = vmatprep.subr.mxu0 0.0
    %903 = vmatpush1.msra.mxu0 0.0
    %904 = vmatprep.subr.mxu0 0.0
    %905 = vmatpush1.msra.mxu0 0.0
    %906 = vmatprep.subr.mxu0 0.0
    %907 = vmatpush1.msra.mxu0 0.0
    %908 = vmatprep.subr.mxu0 0.0
    %909 = vmatpush1.msra.mxu0 0.0
    %910 = vmatprep.subr.mxu0 0.0
    %911 = vmatpush1.msra.mxu0 0.0
    %912 = vmatprep.subr.mxu0 0.0
    %913 = vmatpush1.msra.mxu0 0.0
    %914 = vmatprep.subr.mxu0 0.0
    %915 = vmatpush1.msra.mxu0 0.0
    %916 = vmatprep.subr.mxu0 0.0
    %917 = vmatpush1.msra.mxu0 0.0
    %918 = vmatprep.subr.mxu0 0.0
    %919 = vmatpush1.msra.mxu0 0.0
    %920 = vmatprep.subr.mxu0 0.0
    %921 = vmatpush1.msra.mxu0 0.0
    %922 = vmatprep.subr.mxu0 0.0
    %923 = vmatpush1.msra.mxu0 0.0
    %924 = vmatprep.subr.mxu0 0.0
    %925 = vmatpush1.msra.mxu0 0.0
    %926 = vmatprep.subr.mxu0 0.0
    %927 = vmatpush1.msra.mxu0 0.0
    %928 = vmatprep.subr.mxu0 0.0
    %929 = vmatpush1.msra.mxu0 0.0
    %930 = vmatprep.subr.mxu0 0.0
    %931 = vmatpush1.msra.mxu0 0.0
    %932 = vmatprep.subr.mxu0 0.0
    %933 = vmatpush1.msra.mxu0 0.0
    %934 = vmatprep.mubr.f32.mxu0 0.0
    %935 = vmatmul.mubr.f32.gmra.mrb[0].mxu0 %v868
    %v936 = vpop.f32.mrb[0].mxu0
    %v937 = vadd.f32 0.0, %v936
    %v938 = vpop.f32.mrb[0].mxu0
    %939 = vdwg.mxu0
    %v940 = vadd.f32 %v218, %v937
    %v941 = vxor.u32 %v940, 2147483648
    %v942 = vmul.f32 %v941, 1.442695
    %v943 = vpow.pop %v942
    %v944 = vadd.f32 %v943, 1.0
    %v945 = vrcp.pop %v944
    %v946 = vmul.f32 1.0, %v945
    %v947 = vtanh.pop %v940
    %v948 = vmul.f32 %v946, %v755
    %950 = vrot.lane.b32.xlu0 %v947, 32
    %v951 = vpop.permute.xlu0 %950
    %v953 = vmul.f32 %v946, %v951
    %955 = vrot.lane.b32.xlu0 %v953, 32
    %v956 = vpop.permute.xlu0 %955
    %v958 = vadd.f32 %v948, %v956
    %v959 = vtanh.pop %v958
    %961 = vrot.lane.b32.xlu0 %v959, 32
    %v962 = vpop.permute.xlu0 %961
    %v964 = vmul.f32 %v946, %v962
    %966 = vrot.lane.b32.xlu0 %v964, 64
    %v967 = vpop.permute.xlu0 %966
    %970 = vrot.lane.b32.xlu0 %v867, 96
    %v971 = vpop.permute.xlu0 %970
    %v973 = vsel %vm260, %v967, %v971
    %v975 = vsel %vm364, %v973, 0
    %977 = vmatprep.subr.mxu0 0.0
    %978 = vmatpush1.msra.mxu0 %v245
    %979 = vmatprep.subr.mxu0 0.0
    %980 = vmatpush1.msra.mxu0 %v246
    %981 = vmatprep.subr.mxu0 0.0
    %982 = vmatpush1.msra.mxu0 %v247
    %983 = vmatprep.subr.mxu0 0.0
    %984 = vmatpush1.msra.mxu0 %v248
    %985 = vmatprep.subr.mxu0 0.0
    %986 = vmatpush1.msra.mxu0 %v249
    %987 = vmatprep.subr.mxu0 0.0
    %988 = vmatpush1.msra.mxu0 %v250
    %989 = vmatprep.subr.mxu0 0.0
    %990 = vmatpush1.msra.mxu0 %v251
    %991 = vmatprep.subr.mxu0 0.0
    %992 = vmatpush1.msra.mxu0 %v252
    %993 = vmatprep.subr.mxu0 0.0
    %994 = vmatpush1.msra.mxu0 0.0
    %995 = vmatprep.subr.mxu0 0.0
    %996 = vmatpush1.msra.mxu0 0.0
    %997 = vmatprep.subr.mxu0 0.0
    %998 = vmatpush1.msra.mxu0 0.0
    %999 = vmatprep.subr.mxu0 0.0
    %1000 = vmatpush1.msra.mxu0 0.0
    %1001 = vmatprep.subr.mxu0 0.0
    %1002 = vmatpush1.msra.mxu0 0.0
    %1003 = vmatprep.subr.mxu0 0.0
    %1004 = vmatpush1.msra.mxu0 0.0
    %1005 = vmatprep.subr.mxu0 0.0
    %1006 = vmatpush1.msra.mxu0 0.0
    %1007 = vmatprep.subr.mxu0 0.0
    %1008 = vmatpush1.msra.mxu0 0.0
    %1009 = vmatprep.subr.mxu0 0.0
    %1010 = vmatpush1.msra.mxu0 0.0
    %1011 = vmatprep.subr.mxu0 0.0
    %1012 = vmatpush1.msra.mxu0 0.0
    %1013 = vmatprep.subr.mxu0 0.0
    %1014 = vmatpush1.msra.mxu0 0.0
    %1015 = vmatprep.subr.mxu0 0.0
    %1016 = vmatpush1.msra.mxu0 0.0
    %1017 = vmatprep.subr.mxu0 0.0
    %1018 = vmatpush1.msra.mxu0 0.0
    %1019 = vmatprep.subr.mxu0 0.0
    %1020 = vmatpush1.msra.mxu0 0.0
    %1021 = vmatprep.subr.mxu0 0.0
    %1022 = vmatpush1.msra.mxu0 0.0
    %1023 = vmatprep.subr.mxu0 0.0
    %1024 = vmatpush1.msra.mxu0 0.0
    %1025 = vmatprep.subr.mxu0 0.0
    %1026 = vmatpush1.msra.mxu0 0.0
    %1027 = vmatprep.subr.mxu0 0.0
    %1028 = vmatpush1.msra.mxu0 0.0
    %1029 = vmatprep.subr.mxu0 0.0
    %1030 = vmatpush1.msra.mxu0 0.0
    %1031 = vmatprep.subr.mxu0 0.0
    %1032 = vmatpush1.msra.mxu0 0.0
    %1033 = vmatprep.subr.mxu0 0.0
    %1034 = vmatpush1.msra.mxu0 0.0
    %1035 = vmatprep.subr.mxu0 0.0
    %1036 = vmatpush1.msra.mxu0 0.0
    %1037 = vmatprep.subr.mxu0 0.0
    %1038 = vmatpush1.msra.mxu0 0.0
    %1039 = vmatprep.subr.mxu0 0.0
    %1040 = vmatpush1.msra.mxu0 0.0
    %1041 = vmatprep.mubr.f32.mxu0 0.0
    %1042 = vmatmul.mubr.f32.gmra.mrb[0].mxu0 %v975
    %v1043 = vpop.f32.mrb[0].mxu0
    %v1044 = vadd.f32 %v258, %v1043
    %v1045 = vpop.f32.mrb[0].mxu0
    %1046 = vdwg.mxu0
    %v1047 = vxor.u32 %v1044, 2147483648
    %v1048 = vmul.f32 %v1047, 1.442695
    %v1049 = vpow.pop %v1048
    %v1050 = vadd.f32 %v1049, 1.0
    %v1051 = vrcp.pop %v1050
    %v1052 = vmul.f32 1.0, %v1051
    %v1053 = vtanh.pop %v1044
    %v1054 = vmul.f32 %v1052, %v861
    %1056 = vrot.lane.b32.xlu0 %v1053, 32
    %v1057 = vpop.permute.xlu0 %1056
    %v1059 = vmul.f32 %v1052, %v1057
    %1061 = vrot.lane.b32.xlu0 %v1059, 32
    %v1062 = vpop.permute.xlu0 %1061
    %v1064 = vadd.f32 %v1054, %v1062
    %v1065 = vtanh.pop %v1064
    %1067 = vrot.lane.b32.xlu0 %v1065, 32
    %v1068 = vpop.permute.xlu0 %1067
    %v1070 = vmul.f32 %v1052, %v1068
    %v1071 = vsel %vm260, %v967, 0
    %1073 = vmatprep.subr.mxu0 0.0
    %1074 = vmatpush1.msra.mxu0 %v241
    %1075 = vmatprep.subr.mxu0 0.0
    %1076 = vmatpush1.msra.mxu0 %v242
    %1077 = vmatprep.subr.mxu0 0.0
    %1078 = vmatpush1.msra.mxu0 %v243
    %1079 = vmatprep.subr.mxu0 0.0
    %1080 = vmatpush1.msra.mxu0 %v244
    %1081 = vmatprep.subr.mxu0 0.0
    %1082 = vmatpush1.msra.mxu0 0.0
    %1083 = vmatprep.subr.mxu0 0.0
    %1084 = vmatpush1.msra.mxu0 0.0
    %1085 = vmatprep.subr.mxu0 0.0
    %1086 = vmatpush1.msra.mxu0 0.0
    %1087 = vmatprep.subr.mxu0 0.0
    %1088 = vmatpush1.msra.mxu0 0.0
    %1089 = vmatprep.subr.mxu0 0.0
    %1090 = vmatpush1.msra.mxu0 0.0
    %1091 = vmatprep.subr.mxu0 0.0
    %1092 = vmatpush1.msra.mxu0 0.0
    %1093 = vmatprep.subr.mxu0 0.0
    %1094 = vmatpush1.msra.mxu0 0.0
    %1095 = vmatprep.subr.mxu0 0.0
    %1096 = vmatpush1.msra.mxu0 0.0
    %1097 = vmatprep.subr.mxu0 0.0
    %1098 = vmatpush1.msra.mxu0 0.0
    %1099 = vmatprep.subr.mxu0 0.0
    %1100 = vmatpush1.msra.mxu0 0.0
    %1101 = vmatprep.subr.mxu0 0.0
    %1102 = vmatpush1.msra.mxu0 0.0
    %1103 = vmatprep.subr.mxu0 0.0
    %1104 = vmatpush1.msra.mxu0 0.0
    %1105 = vmatprep.subr.mxu0 0.0
    %1106 = vmatpush1.msra.mxu0 0.0
    %1107 = vmatprep.subr.mxu0 0.0
    %1108 = vmatpush1.msra.mxu0 0.0
    %1109 = vmatprep.subr.mxu0 0.0
    %1110 = vmatpush1.msra.mxu0 0.0
    %1111 = vmatprep.subr.mxu0 0.0
    %1112 = vmatpush1.msra.mxu0 0.0
    %1113 = vmatprep.subr.mxu0 0.0
    %1114 = vmatpush1.msra.mxu0 0.0
    %1115 = vmatprep.subr.mxu0 0.0
    %1116 = vmatpush1.msra.mxu0 0.0
    %1117 = vmatprep.subr.mxu0 0.0
    %1118 = vmatpush1.msra.mxu0 0.0
    %1119 = vmatprep.subr.mxu0 0.0
    %1120 = vmatpush1.msra.mxu0 0.0
    %1121 = vmatprep.subr.mxu0 0.0
    %1122 = vmatpush1.msra.mxu0 0.0
    %1123 = vmatprep.subr.mxu0 0.0
    %1124 = vmatpush1.msra.mxu0 0.0
    %1125 = vmatprep.subr.mxu0 0.0
    %1126 = vmatpush1.msra.mxu0 0.0
    %1127 = vmatprep.subr.mxu0 0.0
    %1128 = vmatpush1.msra.mxu0 0.0
    %1129 = vmatprep.subr.mxu0 0.0
    %1130 = vmatpush1.msra.mxu0 0.0
    %1131 = vmatprep.subr.mxu0 0.0
    %1132 = vmatpush1.msra.mxu0 0.0
    %1133 = vmatprep.subr.mxu0 0.0
    %1134 = vmatpush1.msra.mxu0 0.0
    %1135 = vmatprep.subr.mxu0 0.0
    %1136 = vmatpush1.msra.mxu0 0.0
    %1137 = vmatprep.mubr.f32.mxu0 0.0
    %1138 = vmatmul.mubr.f32.gmra.mrb[0].mxu0 %v1071
    %v1139 = vpop.f32.mrb[0].mxu0
    %v1140 = vadd.f32 0.0, %v1139
    %v1141 = vpop.f32.mrb[0].mxu0
    %1142 = vdwg.mxu0
    %v1143 = vadd.f32 %v223, %v1140
    %v1144 = vxor.u32 %v1143, 2147483648
    %v1145 = vmul.f32 %v1144, 1.442695
    %v1146 = vpow.pop %v1145
    %v1147 = vadd.f32 %v1146, 1.0
    %v1148 = vrcp.pop %v1147
    %v1149 = vmul.f32 1.0, %v1148
    %v1150 = vtanh.pop %v1143
    %v1151 = vmul.f32 %v1149, %v958
    %1153 = vrot.lane.b32.xlu0 %v1150, 32
    %v1154 = vpop.permute.xlu0 %1153
    %v1156 = vmul.f32 %v1149, %v1154
    %1158 = vrot.lane.b32.xlu0 %v1156, 32
    %v1159 = vpop.permute.xlu0 %1158
    %v1161 = vadd.f32 %v1151, %v1159
    %v1162 = vtanh.pop %v1161
    %1164 = vrot.lane.b32.xlu0 %v1162, 32
    %v1165 = vpop.permute.xlu0 %1164
    %v1167 = vmul.f32 %v1149, %v1165
    %1169 = vrot.lane.b32.xlu0 %v1167, 64
    %v1170 = vpop.permute.xlu0 %1169
    %1173 = vrot.lane.b32.xlu0 %v1070, 96
    %v1174 = vpop.permute.xlu0 %1173
    %v1176 = vsel %vm260, %v1170, %v1174
    %v1178 = vsel %vm364, %v1176, 0
    %1180 = vmatprep.subr.mxu0 0.0
    %1181 = vmatpush1.msra.mxu0 %v245
    %1182 = vmatprep.subr.mxu0 0.0
    %1183 = vmatpush1.msra.mxu0 %v246
    %1184 = vmatprep.subr.mxu0 0.0
    %1185 = vmatpush1.msra.mxu0 %v247
    %1186 = vmatprep.subr.mxu0 0.0
    %1187 = vmatpush1.msra.mxu0 %v248
    %1188 = vmatprep.subr.mxu0 0.0
    %1189 = vmatpush1.msra.mxu0 %v249
    %1190 = vmatprep.subr.mxu0 0.0
    %1191 = vmatpush1.msra.mxu0 %v250
    %1192 = vmatprep.subr.mxu0 0.0
    %1193 = vmatpush1.msra.mxu0 %v251
    %1194 = vmatprep.subr.mxu0 0.0
    %1195 = vmatpush1.msra.mxu0 %v252
    %1196 = vmatprep.subr.mxu0 0.0
    %1197 = vmatpush1.msra.mxu0 0.0
    %1198 = vmatprep.subr.mxu0 0.0
    %1199 = vmatpush1.msra.mxu0 0.0
    %1200 = vmatprep.subr.mxu0 0.0
    %1201 = vmatpush1.msra.mxu0 0.0
    %1202 = vmatprep.subr.mxu0 0.0
    %1203 = vmatpush1.msra.mxu0 0.0
    %1204 = vmatprep.subr.mxu0 0.0
    %1205 = vmatpush1.msra.mxu0 0.0
    %1206 = vmatprep.subr.mxu0 0.0
    %1207 = vmatpush1.msra.mxu0 0.0
    %1208 = vmatprep.subr.mxu0 0.0
    %1209 = vmatpush1.msra.mxu0 0.0
    %1210 = vmatprep.subr.mxu0 0.0
    %1211 = vmatpush1.msra.mxu0 0.0
    %1212 = vmatprep.subr.mxu0 0.0
    %1213 = vmatpush1.msra.mxu0 0.0
    %1214 = vmatprep.subr.mxu0 0.0
    %1215 = vmatpush1.msra.mxu0 0.0
    %1216 = vmatprep.subr.mxu0 0.0
    %1217 = vmatpush1.msra.mxu0 0.0
    %1218 = vmatprep.subr.mxu0 0.0
    %1219 = vmatpush1.msra.mxu0 0.0
    %1220 = vmatprep.subr.mxu0 0.0
    %1221 = vmatpush1.msra.mxu0 0.0
    %1222 = vmatprep.subr.mxu0 0.0
    %1223 = vmatpush1.msra.mxu0 0.0
    %1224 = vmatprep.subr.mxu0 0.0
    %1225 = vmatpush1.msra.mxu0 0.0
    %1226 = vmatprep.subr.mxu0 0.0
    %1227 = vmatpush1.msra.mxu0 0.0
    %1228 = vmatprep.subr.mxu0 0.0
    %1229 = vmatpush1.msra.mxu0 0.0
    %1230 = vmatprep.subr.mxu0 0.0
    %1231 = vmatpush1.msra.mxu0 0.0
    %1232 = vmatprep.subr.mxu0 0.0
    %1233 = vmatpush1.msra.mxu0 0.0
    %1234 = vmatprep.subr.mxu0 0.0
    %1235 = vmatpush1.msra.mxu0 0.0
    %1236 = vmatprep.subr.mxu0 0.0
    %1237 = vmatpush1.msra.mxu0 0.0
    %1238 = vmatprep.subr.mxu0 0.0
    %1239 = vmatpush1.msra.mxu0 0.0
    %1240 = vmatprep.subr.mxu0 0.0
    %1241 = vmatpush1.msra.mxu0 0.0
    %1242 = vmatprep.subr.mxu0 0.0
    %1243 = vmatpush1.msra.mxu0 0.0
    %1244 = vmatprep.mubr.f32.mxu0 0.0
    %1245 = vmatmul.mubr.f32.gmra.mrb[0].mxu0 %v1178
    %v1246 = vpop.f32.mrb[0].mxu0
    %v1247 = vadd.f32 %v258, %v1246
    %v1248 = vpop.f32.mrb[0].mxu0
    %1249 = vdwg.mxu0
    %v1250 = vxor.u32 %v1247, 2147483648
    %v1251 = vmul.f32 %v1250, 1.442695
    %v1252 = vpow.pop %v1251
    %v1253 = vadd.f32 %v1252, 1.0
    %v1254 = vrcp.pop %v1253
    %v1255 = vmul.f32 1.0, %v1254
    %v1256 = vtanh.pop %v1247
    %v1257 = vmul.f32 %v1255, %v1064
    %1259 = vrot.lane.b32.xlu0 %v1256, 32
    %v1260 = vpop.permute.xlu0 %1259
    %v1262 = vmul.f32 %v1255, %v1260
    %1264 = vrot.lane.b32.xlu0 %v1262, 32
    %v1265 = vpop.permute.xlu0 %1264
    %v1267 = vadd.f32 %v1257, %v1265
    %v1268 = vtanh.pop %v1267
    %1270 = vrot.lane.b32.xlu0 %v1268, 32
    %v1271 = vpop.permute.xlu0 %1270
    %v1273 = vmul.f32 %v1255, %v1271
    %v1274 = vsel %vm260, %v1170, 0
    %1276 = vmatprep.subr.mxu0 0.0
    %1277 = vmatpush1.msra.mxu0 %v241
    %1278 = vmatprep.subr.mxu0 0.0
    %1279 = vmatpush1.msra.mxu0 %v242
    %1280 = vmatprep.subr.mxu0 0.0
    %1281 = vmatpush1.msra.mxu0 %v243
    %1282 = vmatprep.subr.mxu0 0.0
    %1283 = vmatpush1.msra.mxu0 %v244
    %1284 = vmatprep.subr.mxu0 0.0
    %1285 = vmatpush1.msra.mxu0 0.0
    %1286 = vmatprep.subr.mxu0 0.0
    %1287 = vmatpush1.msra.mxu0 0.0
    %1288 = vmatprep.subr.mxu0 0.0
    %1289 = vmatpush1.msra.mxu0 0.0
    %1290 = vmatprep.subr.mxu0 0.0
    %1291 = vmatpush1.msra.mxu0 0.0
    %1292 = vmatprep.subr.mxu0 0.0
    %1293 = vmatpush1.msra.mxu0 0.0
    %1294 = vmatprep.subr.mxu0 0.0
    %1295 = vmatpush1.msra.mxu0 0.0
    %1296 = vmatprep.subr.mxu0 0.0
    %1297 = vmatpush1.msra.mxu0 0.0
    %1298 = vmatprep.subr.mxu0 0.0
    %1299 = vmatpush1.msra.mxu0 0.0
    %1300 = vmatprep.subr.mxu0 0.0
    %1301 = vmatpush1.msra.mxu0 0.0
    %1302 = vmatprep.subr.mxu0 0.0
    %1303 = vmatpush1.msra.mxu0 0.0
    %1304 = vmatprep.subr.mxu0 0.0
    %1305 = vmatpush1.msra.mxu0 0.0
    %1306 = vmatprep.subr.mxu0 0.0
    %1307 = vmatpush1.msra.mxu0 0.0
    %1308 = vmatprep.subr.mxu0 0.0
    %1309 = vmatpush1.msra.mxu0 0.0
    %1310 = vmatprep.subr.mxu0 0.0
    %1311 = vmatpush1.msra.mxu0 0.0
    %1312 = vmatprep.subr.mxu0 0.0
    %1313 = vmatpush1.msra.mxu0 0.0
    %1314 = vmatprep.subr.mxu0 0.0
    %1315 = vmatpush1.msra.mxu0 0.0
    %1316 = vmatprep.subr.mxu0 0.0
    %1317 = vmatpush1.msra.mxu0 0.0
    %1318 = vmatprep.subr.mxu0 0.0
    %1319 = vmatpush1.msra.mxu0 0.0
    %1320 = vmatprep.subr.mxu0 0.0
    %1321 = vmatpush1.msra.mxu0 0.0
    %1322 = vmatprep.subr.mxu0 0.0
    %1323 = vmatpush1.msra.mxu0 0.0
    %1324 = vmatprep.subr.mxu0 0.0
    %1325 = vmatpush1.msra.mxu0 0.0
    %1326 = vmatprep.subr.mxu0 0.0
    %1327 = vmatpush1.msra.mxu0 0.0
    %1328 = vmatprep.subr.mxu0 0.0
    %1329 = vmatpush1.msra.mxu0 0.0
    %1330 = vmatprep.subr.mxu0 0.0
    %1331 = vmatpush1.msra.mxu0 0.0
    %1332 = vmatprep.subr.mxu0 0.0
    %1333 = vmatpush1.msra.mxu0 0.0
    %1334 = vmatprep.subr.mxu0 0.0
    %1335 = vmatpush1.msra.mxu0 0.0
    %1336 = vmatprep.subr.mxu0 0.0
    %1337 = vmatpush1.msra.mxu0 0.0
    %1338 = vmatprep.subr.mxu0 0.0
    %1339 = vmatpush1.msra.mxu0 0.0
    %1340 = vmatprep.mubr.f32.mxu0 0.0
    %1341 = vmatmul.mubr.f32.gmra.mrb[0].mxu0 %v1274
    %v1342 = vpop.f32.mrb[0].mxu0
    %v1343 = vadd.f32 0.0, %v1342
    %v1344 = vpop.f32.mrb[0].mxu0
    %1345 = vdwg.mxu0
    %v1346 = vadd.f32 %v228, %v1343
    %v1347 = vxor.u32 %v1346, 2147483648
    %v1348 = vmul.f32 %v1347, 1.442695
    %v1349 = vpow.pop %v1348
    %v1350 = vadd.f32 %v1349, 1.0
    %v1351 = vrcp.pop %v1350
    %v1352 = vmul.f32 1.0, %v1351
    %v1353 = vtanh.pop %v1346
    %v1354 = vmul.f32 %v1352, %v1161
    %1356 = vrot.lane.b32.xlu0 %v1353, 32
    %v1357 = vpop.permute.xlu0 %1356
    %v1359 = vmul.f32 %v1352, %v1357
    %1361 = vrot.lane.b32.xlu0 %v1359, 32
    %v1362 = vpop.permute.xlu0 %1361
    %v1364 = vadd.f32 %v1354, %v1362
    %v1365 = vtanh.pop %v1364
    %1367 = vrot.lane.b32.xlu0 %v1365, 32
    %v1368 = vpop.permute.xlu0 %1367
    %v1370 = vmul.f32 %v1352, %v1368
    %1372 = vrot.lane.b32.xlu0 %v1370, 64
    %v1373 = vpop.permute.xlu0 %1372
    %1376 = vrot.lane.b32.xlu0 %v1273, 96
    %v1377 = vpop.permute.xlu0 %1376
    %v1379 = vsel %vm260, %v1373, %v1377
    %v1381 = vsel %vm364, %v1379, 0
    %1383 = vmatprep.subr.mxu0 0.0
    %1384 = vmatpush1.msra.mxu0 %v245
    %1385 = vmatprep.subr.mxu0 0.0
    %1386 = vmatpush1.msra.mxu0 %v246
    %1387 = vmatprep.subr.mxu0 0.0
    %1388 = vmatpush1.msra.mxu0 %v247
    %1389 = vmatprep.subr.mxu0 0.0
    %1390 = vmatpush1.msra.mxu0 %v248
    %1391 = vmatprep.subr.mxu0 0.0
    %1392 = vmatpush1.msra.mxu0 %v249
    %1393 = vmatprep.subr.mxu0 0.0
    %1394 = vmatpush1.msra.mxu0 %v250
    %1395 = vmatprep.subr.mxu0 0.0
    %1396 = vmatpush1.msra.mxu0 %v251
    %1397 = vmatprep.subr.mxu0 0.0
    %1398 = vmatpush1.msra.mxu0 %v252
    %1399 = vmatprep.subr.mxu0 0.0
    %1400 = vmatpush1.msra.mxu0 0.0
    %1401 = vmatprep.subr.mxu0 0.0
    %1402 = vmatpush1.msra.mxu0 0.0
    %1403 = vmatprep.subr.mxu0 0.0
    %1404 = vmatpush1.msra.mxu0 0.0
    %1405 = vmatprep.subr.mxu0 0.0
    %1406 = vmatpush1.msra.mxu0 0.0
    %1407 = vmatprep.subr.mxu0 0.0
    %1408 = vmatpush1.msra.mxu0 0.0
    %1409 = vmatprep.subr.mxu0 0.0
    %1410 = vmatpush1.msra.mxu0 0.0
    %1411 = vmatprep.subr.mxu0 0.0
    %1412 = vmatpush1.msra.mxu0 0.0
    %1413 = vmatprep.subr.mxu0 0.0
    %1414 = vmatpush1.msra.mxu0 0.0
    %1415 = vmatprep.subr.mxu0 0.0
    %1416 = vmatpush1.msra.mxu0 0.0
    %1417 = vmatprep.subr.mxu0 0.0
    %1418 = vmatpush1.msra.mxu0 0.0
    %1419 = vmatprep.subr.mxu0 0.0
    %1420 = vmatpush1.msra.mxu0 0.0
    %1421 = vmatprep.subr.mxu0 0.0
    %1422 = vmatpush1.msra.mxu0 0.0
    %1423 = vmatprep.subr.mxu0 0.0
    %1424 = vmatpush1.msra.mxu0 0.0
    %1425 = vmatprep.subr.mxu0 0.0
    %1426 = vmatpush1.msra.mxu0 0.0
    %1427 = vmatprep.subr.mxu0 0.0
    %1428 = vmatpush1.msra.mxu0 0.0
    %1429 = vmatprep.subr.mxu0 0.0
    %1430 = vmatpush1.msra.mxu0 0.0
    %1431 = vmatprep.subr.mxu0 0.0
    %1432 = vmatpush1.msra.mxu0 0.0
    %1433 = vmatprep.subr.mxu0 0.0
    %1434 = vmatpush1.msra.mxu0 0.0
    %1435 = vmatprep.subr.mxu0 0.0
    %1436 = vmatpush1.msra.mxu0 0.0
    %1437 = vmatprep.subr.mxu0 0.0
    %1438 = vmatpush1.msra.mxu0 0.0
    %1439 = vmatprep.subr.mxu0 0.0
    %1440 = vmatpush1.msra.mxu0 0.0
    %1441 = vmatprep.subr.mxu0 0.0
    %1442 = vmatpush1.msra.mxu0 0.0
    %1443 = vmatprep.subr.mxu0 0.0
    %1444 = vmatpush1.msra.mxu0 0.0
    %1445 = vmatprep.subr.mxu0 0.0
    %1446 = vmatpush1.msra.mxu0 0.0
    %1447 = vmatprep.mubr.f32.mxu0 0.0
    %1448 = vmatmul.mubr.f32.gmra.mrb[0].mxu0 %v1381
    %v1449 = vpop.f32.mrb[0].mxu0
    %v1450 = vadd.f32 %v258, %v1449
    %v1451 = vpop.f32.mrb[0].mxu0
    %1452 = vdwg.mxu0
    %v1453 = vxor.u32 %v1450, 2147483648
    %v1454 = vmul.f32 %v1453, 1.442695
    %v1455 = vpow.pop %v1454
    %v1456 = vadd.f32 %v1455, 1.0
    %v1457 = vrcp.pop %v1456
    %v1458 = vmul.f32 1.0, %v1457
    %v1459 = vtanh.pop %v1450
    %v1460 = vmul.f32 %v1458, %v1267
    %1462 = vrot.lane.b32.xlu0 %v1459, 32
    %v1463 = vpop.permute.xlu0 %1462
    %v1465 = vmul.f32 %v1458, %v1463
    %1467 = vrot.lane.b32.xlu0 %v1465, 32
    %v1468 = vpop.permute.xlu0 %1467
    %v1470 = vadd.f32 %v1460, %v1468
    %v1471 = vtanh.pop %v1470
    %1473 = vrot.lane.b32.xlu0 %v1471, 32
    %v1474 = vpop.permute.xlu0 %1473
    %v1476 = vmul.f32 %v1458, %v1474
    %v1477 = vsel %vm260, %v1373, 0
    %1479 = vmatprep.subr.mxu0 0.0
    %1480 = vmatpush1.msra.mxu0 %v241
    %1481 = vmatprep.subr.mxu0 0.0
    %1482 = vmatpush1.msra.mxu0 %v242
    %1483 = vmatprep.subr.mxu0 0.0
    %1484 = vmatpush1.msra.mxu0 %v243
    %1485 = vmatprep.subr.mxu0 0.0
    %1486 = vmatpush1.msra.mxu0 %v244
    %1487 = vmatprep.subr.mxu0 0.0
    %1488 = vmatpush1.msra.mxu0 0.0
    %1489 = vmatprep.subr.mxu0 0.0
    %1490 = vmatpush1.msra.mxu0 0.0
    %1491 = vmatprep.subr.mxu0 0.0
    %1492 = vmatpush1.msra.mxu0 0.0
    %1493 = vmatprep.subr.mxu0 0.0
    %1494 = vmatpush1.msra.mxu0 0.0
    %1495 = vmatprep.subr.mxu0 0.0
    %1496 = vmatpush1.msra.mxu0 0.0
    %1497 = vmatprep.subr.mxu0 0.0
    %1498 = vmatpush1.msra.mxu0 0.0
    %1499 = vmatprep.subr.mxu0 0.0
    %1500 = vmatpush1.msra.mxu0 0.0
    %1501 = vmatprep.subr.mxu0 0.0
    %1502 = vmatpush1.msra.mxu0 0.0
    %1503 = vmatprep.subr.mxu0 0.0
    %1504 = vmatpush1.msra.mxu0 0.0
    %1505 = vmatprep.subr.mxu0 0.0
    %1506 = vmatpush1.msra.mxu0 0.0
    %1507 = vmatprep.subr.mxu0 0.0
    %1508 = vmatpush1.msra.mxu0 0.0
    %1509 = vmatprep.subr.mxu0 0.0
    %1510 = vmatpush1.msra.mxu0 0.0
    %1511 = vmatprep.subr.mxu0 0.0
    %1512 = vmatpush1.msra.mxu0 0.0
    %1513 = vmatprep.subr.mxu0 0.0
    %1514 = vmatpush1.msra.mxu0 0.0
    %1515 = vmatprep.subr.mxu0 0.0
    %1516 = vmatpush1.msra.mxu0 0.0
    %1517 = vmatprep.subr.mxu0 0.0
    %1518 = vmatpush1.msra.mxu0 0.0
    %1519 = vmatprep.subr.mxu0 0.0
    %1520 = vmatpush1.msra.mxu0 0.0
    %1521 = vmatprep.subr.mxu0 0.0
    %1522 = vmatpush1.msra.mxu0 0.0
    %1523 = vmatprep.subr.mxu0 0.0
    %1524 = vmatpush1.msra.mxu0 0.0
    %1525 = vmatprep.subr.mxu0 0.0
    %1526 = vmatpush1.msra.mxu0 0.0
    %1527 = vmatprep.subr.mxu0 0.0
    %1528 = vmatpush1.msra.mxu0 0.0
    %1529 = vmatprep.subr.mxu0 0.0
    %1530 = vmatpush1.msra.mxu0 0.0
    %1531 = vmatprep.subr.mxu0 0.0
    %1532 = vmatpush1.msra.mxu0 0.0
    %1533 = vmatprep.subr.mxu0 0.0
    %1534 = vmatpush1.msra.mxu0 0.0
    %1535 = vmatprep.subr.mxu0 0.0
    %1536 = vmatpush1.msra.mxu0 0.0
    %1537 = vmatprep.subr.mxu0 0.0
    %1538 = vmatpush1.msra.mxu0 0.0
    %1539 = vmatprep.subr.mxu0 0.0
    %1540 = vmatpush1.msra.mxu0 0.0
    %1541 = vmatprep.subr.mxu0 0.0
    %1542 = vmatpush1.msra.mxu0 0.0
    %1543 = vmatprep.mubr.f32.mxu0 0.0
    %1544 = vmatmul.mubr.f32.gmra.mrb[0].mxu0 %v1477
    %v1545 = vpop.f32.mrb[0].mxu0
    %v1546 = vadd.f32 0.0, %v1545
    %v1547 = vpop.f32.mrb[0].mxu0
    %1548 = vdwg.mxu0
    %v1549 = vadd.f32 %v233, %v1546
    %v1550 = vxor.u32 %v1549, 2147483648
    %v1551 = vmul.f32 %v1550, 1.442695
    %v1552 = vpow.pop %v1551
    %v1553 = vadd.f32 %v1552, 1.0
    %v1554 = vrcp.pop %v1553
    %v1555 = vmul.f32 1.0, %v1554
    %v1556 = vtanh.pop %v1549
    %v1557 = vmul.f32 %v1555, %v1364
    %1559 = vrot.lane.b32.xlu0 %v1556, 32
    %v1560 = vpop.permute.xlu0 %1559
    %v1562 = vmul.f32 %v1555, %v1560
    %1564 = vrot.lane.b32.xlu0 %v1562, 32
    %v1565 = vpop.permute.xlu0 %1564
    %v1567 = vadd.f32 %v1557, %v1565
    %v1568 = vtanh.pop %v1567
    %1570 = vrot.lane.b32.xlu0 %v1568, 32
    %v1571 = vpop.permute.xlu0 %1570
    %v1573 = vmul.f32 %v1555, %v1571
    %1575 = vrot.lane.b32.xlu0 %v1573, 64
    %v1576 = vpop.permute.xlu0 %1575
    %1579 = vrot.lane.b32.xlu0 %v1476, 96
    %v1580 = vpop.permute.xlu0 %1579
    %v1582 = vsel %vm260, %v1576, %v1580
    %v1584 = vsel %vm364, %v1582, 0
    %1586 = vmatprep.subr.mxu0 0.0
    %1587 = vmatpush1.msra.mxu0 %v245
    %1588 = vmatprep.subr.mxu0 0.0
    %1589 = vmatpush1.msra.mxu0 %v246
    %1590 = vmatprep.subr.mxu0 0.0
    %1591 = vmatpush1.msra.mxu0 %v247
    %1592 = vmatprep.subr.mxu0 0.0
    %1593 = vmatpush1.msra.mxu0 %v248
    %1594 = vmatprep.subr.mxu0 0.0
    %1595 = vmatpush1.msra.mxu0 %v249
    %1596 = vmatprep.subr.mxu0 0.0
    %1597 = vmatpush1.msra.mxu0 %v250
    %1598 = vmatprep.subr.mxu0 0.0
    %1599 = vmatpush1.msra.mxu0 %v251
    %1600 = vmatprep.subr.mxu0 0.0
    %1601 = vmatpush1.msra.mxu0 %v252
    %1602 = vmatprep.subr.mxu0 0.0
    %1603 = vmatpush1.msra.mxu0 0.0
    %1604 = vmatprep.subr.mxu0 0.0
    %1605 = vmatpush1.msra.mxu0 0.0
    %1606 = vmatprep.subr.mxu0 0.0
    %1607 = vmatpush1.msra.mxu0 0.0
    %1608 = vmatprep.subr.mxu0 0.0
    %1609 = vmatpush1.msra.mxu0 0.0
    %1610 = vmatprep.subr.mxu0 0.0
    %1611 = vmatpush1.msra.mxu0 0.0
    %1612 = vmatprep.subr.mxu0 0.0
    %1613 = vmatpush1.msra.mxu0 0.0
    %1614 = vmatprep.subr.mxu0 0.0
    %1615 = vmatpush1.msra.mxu0 0.0
    %1616 = vmatprep.subr.mxu0 0.0
    %1617 = vmatpush1.msra.mxu0 0.0
    %1618 = vmatprep.subr.mxu0 0.0
    %1619 = vmatpush1.msra.mxu0 0.0
    %1620 = vmatprep.subr.mxu0 0.0
    %1621 = vmatpush1.msra.mxu0 0.0
    %1622 = vmatprep.subr.mxu0 0.0
    %1623 = vmatpush1.msra.mxu0 0.0
    %1624 = vmatprep.subr.mxu0 0.0
    %1625 = vmatpush1.msra.mxu0 0.0
    %1626 = vmatprep.subr.mxu0 0.0
    %1627 = vmatpush1.msra.mxu0 0.0
    %1628 = vmatprep.subr.mxu0 0.0
    %1629 = vmatpush1.msra.mxu0 0.0
    %1630 = vmatprep.subr.mxu0 0.0
    %1631 = vmatpush1.msra.mxu0 0.0
    %1632 = vmatprep.subr.mxu0 0.0
    %1633 = vmatpush1.msra.mxu0 0.0
    %1634 = vmatprep.subr.mxu0 0.0
    %1635 = vmatpush1.msra.mxu0 0.0
    %1636 = vmatprep.subr.mxu0 0.0
    %1637 = vmatpush1.msra.mxu0 0.0
    %1638 = vmatprep.subr.mxu0 0.0
    %1639 = vmatpush1.msra.mxu0 0.0
    %1640 = vmatprep.subr.mxu0 0.0
    %1641 = vmatpush1.msra.mxu0 0.0
    %1642 = vmatprep.subr.mxu0 0.0
    %1643 = vmatpush1.msra.mxu0 0.0
    %1644 = vmatprep.subr.mxu0 0.0
    %1645 = vmatpush1.msra.mxu0 0.0
    %1646 = vmatprep.subr.mxu0 0.0
    %1647 = vmatpush1.msra.mxu0 0.0
    %1648 = vmatprep.subr.mxu0 0.0
    %1649 = vmatpush1.msra.mxu0 0.0
    %1650 = vmatprep.mubr.f32.mxu0 0.0
    %1651 = vmatmul.mubr.f32.gmra.mrb[0].mxu0 %v1584
    %v1652 = vpop.f32.mrb[0].mxu0
    %v1653 = vadd.f32 %v258, %v1652
    %v1654 = vpop.f32.mrb[0].mxu0
    %1655 = vdwg.mxu0
    %v1656 = vxor.u32 %v1653, 2147483648
    %v1657 = vmul.f32 %v1656, 1.442695
    %v1658 = vpow.pop %v1657
    %v1659 = vadd.f32 %v1658, 1.0
    %v1660 = vrcp.pop %v1659
    %v1661 = vmul.f32 1.0, %v1660
    %v1662 = vtanh.pop %v1653
    %v1663 = vmul.f32 %v1661, %v1470
    %1665 = vrot.lane.b32.xlu0 %v1662, 32
    %v1666 = vpop.permute.xlu0 %1665
    %v1668 = vmul.f32 %v1661, %v1666
    %1670 = vrot.lane.b32.xlu0 %v1668, 32
    %v1671 = vpop.permute.xlu0 %1670
    %v1673 = vadd.f32 %v1663, %v1671
    %v1674 = vtanh.pop %v1673
    %1676 = vrot.lane.b32.xlu0 %v1674, 32
    %v1677 = vpop.permute.xlu0 %1676
    %v1679 = vmul.f32 %v1661, %v1677
    %v1680 = vsel %vm260, %v1576, 0
    %1682 = vmatprep.subr.mxu0 0.0
    %1683 = vmatpush1.msra.mxu0 %v241
    %1684 = vmatprep.subr.mxu0 0.0
    %1685 = vmatpush1.msra.mxu0 %v242
    %1686 = vmatprep.subr.mxu0 0.0
    %1687 = vmatpush1.msra.mxu0 %v243
    %1688 = vmatprep.subr.mxu0 0.0
    %1689 = vmatpush1.msra.mxu0 %v244
    %1690 = vmatprep.subr.mxu0 0.0
    %1691 = vmatpush1.msra.mxu0 0.0
    %1692 = vmatprep.subr.mxu0 0.0
    %1693 = vmatpush1.msra.mxu0 0.0
    %1694 = vmatprep.subr.mxu0 0.0
    %1695 = vmatpush1.msra.mxu0 0.0
    %1696 = vmatprep.subr.mxu0 0.0
    %1697 = vmatpush1.msra.mxu0 0.0
    %1698 = vmatprep.subr.mxu0 0.0
    %1699 = vmatpush1.msra.mxu0 0.0
    %1700 = vmatprep.subr.mxu0 0.0
    %1701 = vmatpush1.msra.mxu0 0.0
    %1702 = vmatprep.subr.mxu0 0.0
    %1703 = vmatpush1.msra.mxu0 0.0
    %1704 = vmatprep.subr.mxu0 0.0
    %1705 = vmatpush1.msra.mxu0 0.0
    %1706 = vmatprep.subr.mxu0 0.0
    %1707 = vmatpush1.msra.mxu0 0.0
    %1708 = vmatprep.subr.mxu0 0.0
    %1709 = vmatpush1.msra.mxu0 0.0
    %1710 = vmatprep.subr.mxu0 0.0
    %1711 = vmatpush1.msra.mxu0 0.0
    %1712 = vmatprep.subr.mxu0 0.0
    %1713 = vmatpush1.msra.mxu0 0.0
    %1714 = vmatprep.subr.mxu0 0.0
    %1715 = vmatpush1.msra.mxu0 0.0
    %1716 = vmatprep.subr.mxu0 0.0
    %1717 = vmatpush1.msra.mxu0 0.0
    %1718 = vmatprep.subr.mxu0 0.0
    %1719 = vmatpush1.msra.mxu0 0.0
    %1720 = vmatprep.subr.mxu0 0.0
    %1721 = vmatpush1.msra.mxu0 0.0
    %1722 = vmatprep.subr.mxu0 0.0
    %1723 = vmatpush1.msra.mxu0 0.0
    %1724 = vmatprep.subr.mxu0 0.0
    %1725 = vmatpush1.msra.mxu0 0.0
    %1726 = vmatprep.subr.mxu0 0.0
    %1727 = vmatpush1.msra.mxu0 0.0
    %1728 = vmatprep.subr.mxu0 0.0
    %1729 = vmatpush1.msra.mxu0 0.0
    %1730 = vmatprep.subr.mxu0 0.0
    %1731 = vmatpush1.msra.mxu0 0.0
    %1732 = vmatprep.subr.mxu0 0.0
    %1733 = vmatpush1.msra.mxu0 0.0
    %1734 = vmatprep.subr.mxu0 0.0
    %1735 = vmatpush1.msra.mxu0 0.0
    %1736 = vmatprep.subr.mxu0 0.0
    %1737 = vmatpush1.msra.mxu0 0.0
    %1738 = vmatprep.subr.mxu0 0.0
    %1739 = vmatpush1.msra.mxu0 0.0
    %1740 = vmatprep.subr.mxu0 0.0
    %1741 = vmatpush1.msra.mxu0 0.0
    %1742 = vmatprep.subr.mxu0 0.0
    %1743 = vmatpush1.msra.mxu0 0.0
    %1744 = vmatprep.subr.mxu0 0.0
    %1745 = vmatpush1.msra.mxu0 0.0
    %1746 = vmatprep.mubr.f32.mxu0 0.0
    %1747 = vmatmul.mubr.f32.gmra.mrb[0].mxu0 %v1680
    %v1748 = vpop.f32.mrb[0].mxu0
    %v1749 = vadd.f32 0.0, %v1748
    %v1750 = vpop.f32.mrb[0].mxu0
    %1751 = vdwg.mxu0
    %v1752 = vadd.f32 %v238, %v1749
    %v1753 = vxor.u32 %v1752, 2147483648
    %v1754 = vmul.f32 %v1753, 1.442695
    %v1755 = vpow.pop %v1754
    %v1756 = vadd.f32 %v1755, 1.0
    %v1757 = vrcp.pop %v1756
    %v1758 = vmul.f32 1.0, %v1757
    %v1759 = vtanh.pop %v1752
    %v1760 = vmul.f32 %v1758, %v1567
    %1762 = vrot.lane.b32.xlu0 %v1759, 32
    %v1763 = vpop.permute.xlu0 %1762
    %v1765 = vmul.f32 %v1758, %v1763
    %1767 = vrot.lane.b32.xlu0 %v1765, 32
    %v1768 = vpop.permute.xlu0 %1767
    %v1770 = vadd.f32 %v1760, %v1768
    %v1771 = vtanh.pop %v1770
    %1773 = vrot.lane.b32.xlu0 %v1771, 32
    %v1774 = vpop.permute.xlu0 %1773
    %v1776 = vmul.f32 %v1758, %v1774
    %1778 = vrot.lane.b32.xlu0 %v1776, 64
    %v1779 = vpop.permute.xlu0 %1778
    %1782 = vrot.lane.b32.xlu0 %v1679, 96
    %v1783 = vpop.permute.xlu0 %1782
    %v1785 = vsel %vm260, %v1779, %v1783
    %v1787 = vsel %vm364, %v1785, 0
    %1789 = vmatprep.subr.mxu0 0.0
    %1790 = vmatpush1.msra.mxu0 %v245
    %1791 = vmatprep.subr.mxu0 0.0
    %1792 = vmatpush1.msra.mxu0 %v246
    %1793 = vmatprep.subr.mxu0 0.0
    %1794 = vmatpush1.msra.mxu0 %v247
    %1795 = vmatprep.subr.mxu0 0.0
    %1796 = vmatpush1.msra.mxu0 %v248
    %1797 = vmatprep.subr.mxu0 0.0
    %1798 = vmatpush1.msra.mxu0 %v249
    %1799 = vmatprep.subr.mxu0 0.0
    %1800 = vmatpush1.msra.mxu0 %v250
    %1801 = vmatprep.subr.mxu0 0.0
    %1802 = vmatpush1.msra.mxu0 %v251
    %1803 = vmatprep.subr.mxu0 0.0
    %1804 = vmatpush1.msra.mxu0 %v252
    %1805 = vmatprep.subr.mxu0 0.0
    %1806 = vmatpush1.msra.mxu0 0.0
    %1807 = vmatprep.subr.mxu0 0.0
    %1808 = vmatpush1.msra.mxu0 0.0
    %1809 = vmatprep.subr.mxu0 0.0
    %1810 = vmatpush1.msra.mxu0 0.0
    %1811 = vmatprep.subr.mxu0 0.0
    %1812 = vmatpush1.msra.mxu0 0.0
    %1813 = vmatprep.subr.mxu0 0.0
    %1814 = vmatpush1.msra.mxu0 0.0
    %1815 = vmatprep.subr.mxu0 0.0
    %1816 = vmatpush1.msra.mxu0 0.0
    %1817 = vmatprep.subr.mxu0 0.0
    %1818 = vmatpush1.msra.mxu0 0.0
    %1819 = vmatprep.subr.mxu0 0.0
    %1820 = vmatpush1.msra.mxu0 0.0
    %1821 = vmatprep.subr.mxu0 0.0
    %1822 = vmatpush1.msra.mxu0 0.0
    %1823 = vmatprep.subr.mxu0 0.0
    %1824 = vmatpush1.msra.mxu0 0.0
    %1825 = vmatprep.subr.mxu0 0.0
    %1826 = vmatpush1.msra.mxu0 0.0
    %1827 = vmatprep.subr.mxu0 0.0
    %1828 = vmatpush1.msra.mxu0 0.0
    %1829 = vmatprep.subr.mxu0 0.0
    %1830 = vmatpush1.msra.mxu0 0.0
    %1831 = vmatprep.subr.mxu0 0.0
    %1832 = vmatpush1.msra.mxu0 0.0
    %1833 = vmatprep.subr.mxu0 0.0
    %1834 = vmatpush1.msra.mxu0 0.0
    %1835 = vmatprep.subr.mxu0 0.0
    %1836 = vmatpush1.msra.mxu0 0.0
    %1837 = vmatprep.subr.mxu0 0.0
    %1838 = vmatpush1.msra.mxu0 0.0
    %1839 = vmatprep.subr.mxu0 0.0
    %1840 = vmatpush1.msra.mxu0 0.0
    %1841 = vmatprep.subr.mxu0 0.0
    %1842 = vmatpush1.msra.mxu0 0.0
    %1843 = vmatprep.subr.mxu0 0.0
    %1844 = vmatpush1.msra.mxu0 0.0
    %1845 = vmatprep.subr.mxu0 0.0
    %1846 = vmatpush1.msra.mxu0 0.0
    %1847 = vmatprep.subr.mxu0 0.0
    %1848 = vmatpush1.msra.mxu0 0.0
    %1849 = vmatprep.subr.mxu0 0.0
    %1850 = vmatpush1.msra.mxu0 0.0
    %1851 = vmatprep.subr.mxu0 0.0
    %1852 = vmatpush1.msra.mxu0 0.0
    %1853 = vmatprep.mubr.f32.mxu0 0.0
    %1854 = vmatmul.mubr.f32.gmra.mrb[0].mxu0 %v1787
    %v1855 = vpop.f32.mrb[0].mxu0
    %v1856 = vadd.f32 %v258, %v1855
    %v1857 = vpop.f32.mrb[0].mxu0
    %1858 = vdwg.mxu0
    %v1859 = vxor.u32 %v1856, 2147483648
    %v1860 = vmul.f32 %v1859, 1.442695
    %v1861 = vpow.pop %v1860
    %v1862 = vadd.f32 %v1861, 1.0
    %v1863 = vrcp.pop %v1862
    %v1864 = vmul.f32 1.0, %v1863
    %v1865 = vtanh.pop %v1856
    %v1866 = vmul.f32 %v1864, %v1673
    %1868 = vrot.lane.b32.xlu0 %v1865, 32
    %v1869 = vpop.permute.xlu0 %1868
    %v1871 = vmul.f32 %v1864, %v1869
    %1873 = vrot.lane.b32.xlu0 %v1871, 32
    %v1874 = vpop.permute.xlu0 %1873
    %v1876 = vadd.f32 %v1866, %v1874
    %v1877 = vtanh.pop %v1876
    %1879 = vrot.lane.b32.xlu0 %v1877, 32
    %v1880 = vpop.permute.xlu0 %1879
    %v1882 = vmul.f32 %v1864, %v1880
    %v1883 = vld [vmem:[%s6] sm:$0xff]
    %v1884 = vld [vmem:[%s6 + $0x8] sm:$0xff]
    %v1885 = vld [vmem:[%s6 + $0x10] sm:$0xff]
    %v1886 = vld [vmem:[%s6 + $0x18] sm:$0xff]
    %v1887 = vld [vmem:[%s8] sm:$0x1]
    %v1889 = vlaneseq
    %v1890 = vshrl.u32 %v1889, 7
    %v1891 = vsub.s32 0, %v1890
    %v1892 = vrot.slane %v1887, %v1891
    %1895 = vrot.lane.b32.xlu0 %v1882, 64
    %v1896 = vpop.permute.xlu0 %1895
    %v1897 = vsel %vm260, %v1896, 0
    %1899 = vmatprep.subr.mxu0 0.0
    %1900 = vmatpush1.msra.mxu0 %v1883
    %1901 = vmatprep.subr.mxu0 0.0
    %1902 = vmatpush1.msra.mxu0 %v1884
    %1903 = vmatprep.subr.mxu0 0.0
    %1904 = vmatpush1.msra.mxu0 %v1885
    %1905 = vmatprep.subr.mxu0 0.0
    %1906 = vmatpush1.msra.mxu0 %v1886
    %1907 = vmatprep.subr.mxu0 0.0
    %1908 = vmatpush1.msra.mxu0 0.0
    %1909 = vmatprep.subr.mxu0 0.0
    %1910 = vmatpush1.msra.mxu0 0.0
    %1911 = vmatprep.subr.mxu0 0.0
    %1912 = vmatpush1.msra.mxu0 0.0
    %1913 = vmatprep.subr.mxu0 0.0
    %1914 = vmatpush1.msra.mxu0 0.0
    %1915 = vmatprep.subr.mxu0 0.0
    %1916 = vmatpush1.msra.mxu0 0.0
    %1917 = vmatprep.subr.mxu0 0.0
    %1918 = vmatpush1.msra.mxu0 0.0
    %1919 = vmatprep.subr.mxu0 0.0
    %1920 = vmatpush1.msra.mxu0 0.0
    %1921 = vmatprep.subr.mxu0 0.0
    %1922 = vmatpush1.msra.mxu0 0.0
    %1923 = vmatprep.subr.mxu0 0.0
    %1924 = vmatpush1.msra.mxu0 0.0
    %1925 = vmatprep.subr.mxu0 0.0
    %1926 = vmatpush1.msra.mxu0 0.0
    %1927 = vmatprep.subr.mxu0 0.0
    %1928 = vmatpush1.msra.mxu0 0.0
    %1929 = vmatprep.subr.mxu0 0.0
    %1930 = vmatpush1.msra.mxu0 0.0
    %1931 = vmatprep.subr.mxu0 0.0
    %1932 = vmatpush1.msra.mxu0 0.0
    %1933 = vmatprep.subr.mxu0 0.0
    %1934 = vmatpush1.msra.mxu0 0.0
    %1935 = vmatprep.subr.mxu0 0.0
    %1936 = vmatpush1.msra.mxu0 0.0
    %1937 = vmatprep.subr.mxu0 0.0
    %1938 = vmatpush1.msra.mxu0 0.0
    %1939 = vmatprep.subr.mxu0 0.0
    %1940 = vmatpush1.msra.mxu0 0.0
    %1941 = vmatprep.subr.mxu0 0.0
    %1942 = vmatpush1.msra.mxu0 0.0
    %1943 = vmatprep.subr.mxu0 0.0
    %1944 = vmatpush1.msra.mxu0 0.0
    %1945 = vmatprep.subr.mxu0 0.0
    %1946 = vmatpush1.msra.mxu0 0.0
    %1947 = vmatprep.subr.mxu0 0.0
    %1948 = vmatpush1.msra.mxu0 0.0
    %1949 = vmatprep.subr.mxu0 0.0
    %1950 = vmatpush1.msra.mxu0 0.0
    %1951 = vmatprep.subr.mxu0 0.0
    %1952 = vmatpush1.msra.mxu0 0.0
    %1953 = vmatprep.subr.mxu0 0.0
    %1954 = vmatpush1.msra.mxu0 0.0
    %1955 = vmatprep.subr.mxu0 0.0
    %1956 = vmatpush1.msra.mxu0 0.0
    %1957 = vmatprep.subr.mxu0 0.0
    %1958 = vmatpush1.msra.mxu0 0.0
    %1959 = vmatprep.subr.mxu0 0.0
    %1960 = vmatpush1.msra.mxu0 0.0
    %1961 = vmatprep.subr.mxu0 0.0
    %1962 = vmatpush1.msra.mxu0 0.0
    %1963 = vmatprep.mubr.f32.mxu0 0.0
    %1964 = vmatmul.mubr.f32.gmra.mrb[0].mxu0 %v1897
    %v1965 = vpop.f32.mrb[0].mxu0
    %v1966 = vadd.f32 %v1892, %v1965
    %v1967 = vpop.f32.mrb[0].mxu0
    %1968 = vdwg.mxu0
    %v1969 = vld [vmem:[#allocation7] sm:$0xff]
    %v1970 = vld [vmem:[#allocation7 + $0x8] sm:$0xff]
    %v1971 = vld [vmem:[#allocation7 + $0x10] sm:$0xff]
    %v1972 = vld [vmem:[#allocation7 + $0x18] sm:$0xff]
    %v1973 = vld [vmem:[#allocation8] sm:$0xff]
    %v1974 = vld [vmem:[#allocation8 + $0x8] sm:$0xff]
    %v1975 = vld [vmem:[#allocation8 + $0x10] sm:$0xff]
    %v1976 = vld [vmem:[#allocation8 + $0x18] sm:$0xff]
    %v1977 = vld [vmem:[#allocation8 + $0x20] sm:$0xff]
    %v1978 = vld [vmem:[#allocation8 + $0x28] sm:$0xff]
    %v1979 = vld [vmem:[#allocation8 + $0x30] sm:$0xff]
    %v1980 = vld [vmem:[#allocation8 + $0x38] sm:$0xff]
    %v1981 = vld [vmem:[%s10] sm:$0x1]
    %v1983 = vlaneseq
    %v1984 = vshrl.u32 %v1983, 7
    %v1985 = vsub.s32 0, %v1984
    %v1986 = vrot.slane %v1981, %v1985
    %1988 = vmatprep.subr.mxu0 0.0
    %1989 = vmatpush1.msra.mxu0 %v1969
    %1990 = vmatprep.subr.mxu0 0.0
    %1991 = vmatpush1.msra.mxu0 %v1970
    %1992 = vmatprep.subr.mxu0 0.0
    %1993 = vmatpush1.msra.mxu0 %v1971
    %1994 = vmatprep.subr.mxu0 0.0
    %1995 = vmatpush1.msra.mxu0 %v1972
    %1996 = vmatprep.subr.mxu0 0.0
    %1997 = vmatpush1.msra.mxu0 0.0
    %1998 = vmatprep.subr.mxu0 0.0
    %1999 = vmatpush1.msra.mxu0 0.0
    %2000 = vmatprep.subr.mxu0 0.0
    %2001 = vmatpush1.msra.mxu0 0.0
    %2002 = vmatprep.subr.mxu0 0.0
    %2003 = vmatpush1.msra.mxu0 0.0
    %2004 = vmatprep.subr.mxu0 0.0
    %2005 = vmatpush1.msra.mxu0 0.0
    %2006 = vmatprep.subr.mxu0 0.0
    %2007 = vmatpush1.msra.mxu0 0.0
    %2008 = vmatprep.subr.mxu0 0.0
    %2009 = vmatpush1.msra.mxu0 0.0
    %2010 = vmatprep.subr.mxu0 0.0
    %2011 = vmatpush1.msra.mxu0 0.0
    %2012 = vmatprep.subr.mxu0 0.0
    %2013 = vmatpush1.msra.mxu0 0.0
    %2014 = vmatprep.subr.mxu0 0.0
    %2015 = vmatpush1.msra.mxu0 0.0
    %2016 = vmatprep.subr.mxu0 0.0
    %2017 = vmatpush1.msra.mxu0 0.0
    %2018 = vmatprep.subr.mxu0 0.0
    %2019 = vmatpush1.msra.mxu0 0.0
    %2020 = vmatprep.subr.mxu0 0.0
    %2021 = vmatpush1.msra.mxu0 0.0
    %2022 = vmatprep.subr.mxu0 0.0
    %2023 = vmatpush1.msra.mxu0 0.0
    %2024 = vmatprep.subr.mxu0 0.0
    %2025 = vmatpush1.msra.mxu0 0.0
    %2026 = vmatprep.subr.mxu0 0.0
    %2027 = vmatpush1.msra.mxu0 0.0
    %2028 = vmatprep.subr.mxu0 0.0
    %2029 = vmatpush1.msra.mxu0 0.0
    %2030 = vmatprep.subr.mxu0 0.0
    %2031 = vmatpush1.msra.mxu0 0.0
    %2032 = vmatprep.subr.mxu0 0.0
    %2033 = vmatpush1.msra.mxu0 0.0
    %2034 = vmatprep.subr.mxu0 0.0
    %2035 = vmatpush1.msra.mxu0 0.0
    %2036 = vmatprep.subr.mxu0 0.0
    %2037 = vmatpush1.msra.mxu0 0.0
    %2038 = vmatprep.subr.mxu0 0.0
    %2039 = vmatpush1.msra.mxu0 0.0
    %2040 = vmatprep.subr.mxu0 0.0
    %2041 = vmatpush1.msra.mxu0 0.0
    %2042 = vmatprep.subr.mxu0 0.0
    %2043 = vmatpush1.msra.mxu0 0.0
    %2044 = vmatprep.subr.mxu0 0.0
    %2045 = vmatpush1.msra.mxu0 0.0
    %2046 = vmatprep.subr.mxu0 0.0
    %2047 = vmatpush1.msra.mxu0 0.0
    %2048 = vmatprep.subr.mxu0 0.0
    %2049 = vmatpush1.msra.mxu0 0.0
    %2050 = vmatprep.subr.mxu0 0.0
    %2051 = vmatpush1.msra.mxu0 0.0
    %2052 = vmatprep.mubr.f32.mxu0 0.0
    %2053 = vmatmul.mubr.f32.gmra.mrb[0].mxu0 %v262
    %v2054 = vpop.f32.mrb[0].mxu0
    %v2055 = vadd.f32 0.0, %v2054
    %v2056 = vpop.f32.mrb[0].mxu0
    %2057 = vdwg.mxu0
    %v2058 = vadd.f32 %v1966, %v2055
    %v2059 = vxor.u32 %v2058, 2147483648
    %v2060 = vmul.f32 %v2059, 1.442695
    %v2061 = vpow.pop %v2060
    %v2062 = vadd.f32 %v2061, 1.0
    %v2063 = vrcp.pop %v2062
    %v2064 = vmul.f32 1.0, %v2063
    %v2065 = vtanh.pop %v2058
    %v2066 = vmul.f32 %v2064, 0.0
    %2068 = vrot.lane.b32.xlu0 %v2065, 32
    %v2069 = vpop.permute.xlu0 %2068
    %v2071 = vmul.f32 %v2064, %v2069
    %2073 = vrot.lane.b32.xlu0 %v2071, 32
    %v2074 = vpop.permute.xlu0 %2073
    %v2076 = vadd.f32 %v2066, %v2074
    %v2077 = vtanh.pop %v2076
    %2079 = vrot.lane.b32.xlu0 %v2077, 32
    %v2080 = vpop.permute.xlu0 %2079
    %v2082 = vmul.f32 %v2064, %v2080
    %2084 = vrot.lane.b32.xlu0 %v2082, 64
    %v2085 = vpop.permute.xlu0 %2084
    %v2087 = vsel %vm260, %v2085, 0.0
    %v2089 = vsel %vm364, %v2087, 0
    %2091 = vmatprep.subr.mxu0 0.0
    %2092 = vmatpush1.msra.mxu0 %v1973
    %2093 = vmatprep.subr.mxu0 0.0
    %2094 = vmatpush1.msra.mxu0 %v1974
    %2095 = vmatprep.subr.mxu0 0.0
    %2096 = vmatpush1.msra.mxu0 %v1975
    %2097 = vmatprep.subr.mxu0 0.0
    %2098 = vmatpush1.msra.mxu0 %v1976
    %2099 = vmatprep.subr.mxu0 0.0
    %2100 = vmatpush1.msra.mxu0 %v1977
    %2101 = vmatprep.subr.mxu0 0.0
    %2102 = vmatpush1.msra.mxu0 %v1978
    %2103 = vmatprep.subr.mxu0 0.0
    %2104 = vmatpush1.msra.mxu0 %v1979
    %2105 = vmatprep.subr.mxu0 0.0
    %2106 = vmatpush1.msra.mxu0 %v1980
    %2107 = vmatprep.subr.mxu0 0.0
    %2108 = vmatpush1.msra.mxu0 0.0
    %2109 = vmatprep.subr.mxu0 0.0
    %2110 = vmatpush1.msra.mxu0 0.0
    %2111 = vmatprep.subr.mxu0 0.0
    %2112 = vmatpush1.msra.mxu0 0.0
    %2113 = vmatprep.subr.mxu0 0.0
    %2114 = vmatpush1.msra.mxu0 0.0
    %2115 = vmatprep.subr.mxu0 0.0
    %2116 = vmatpush1.msra.mxu0 0.0
    %2117 = vmatprep.subr.mxu0 0.0
    %2118 = vmatpush1.msra.mxu0 0.0
    %2119 = vmatprep.subr.mxu0 0.0
    %2120 = vmatpush1.msra.mxu0 0.0
    %2121 = vmatprep.subr.mxu0 0.0
    %2122 = vmatpush1.msra.mxu0 0.0
    %2123 = vmatprep.subr.mxu0 0.0
    %2124 = vmatpush1.msra.mxu0 0.0
    %2125 = vmatprep.subr.mxu0 0.0
    %2126 = vmatpush1.msra.mxu0 0.0
    %2127 = vmatprep.subr.mxu0 0.0
    %2128 = vmatpush1.msra.mxu0 0.0
    %2129 = vmatprep.subr.mxu0 0.0
    %2130 = vmatpush1.msra.mxu0 0.0
    %2131 = vmatprep.subr.mxu0 0.0
    %2132 = vmatpush1.msra.mxu0 0.0
    %2133 = vmatprep.subr.mxu0 0.0
    %2134 = vmatpush1.msra.mxu0 0.0
    %2135 = vmatprep.subr.mxu0 0.0
    %2136 = vmatpush1.msra.mxu0 0.0
    %2137 = vmatprep.subr.mxu0 0.0
    %2138 = vmatpush1.msra.mxu0 0.0
    %2139 = vmatprep.subr.mxu0 0.0
    %2140 = vmatpush1.msra.mxu0 0.0
    %2141 = vmatprep.subr.mxu0 0.0
    %2142 = vmatpush1.msra.mxu0 0.0
    %2143 = vmatprep.subr.mxu0 0.0
    %2144 = vmatpush1.msra.mxu0 0.0
    %2145 = vmatprep.subr.mxu0 0.0
    %2146 = vmatpush1.msra.mxu0 0.0
    %2147 = vmatprep.subr.mxu0 0.0
    %2148 = vmatpush1.msra.mxu0 0.0
    %2149 = vmatprep.subr.mxu0 0.0
    %2150 = vmatpush1.msra.mxu0 0.0
    %2151 = vmatprep.subr.mxu0 0.0
    %2152 = vmatpush1.msra.mxu0 0.0
    %2153 = vmatprep.subr.mxu0 0.0
    %2154 = vmatpush1.msra.mxu0 0.0
    %2155 = vmatprep.mubr.f32.mxu0 0.0
    %2156 = vmatmul.mubr.f32.gmra.mrb[0].mxu0 %v2089
    %v2157 = vpop.f32.mrb[0].mxu0
    %v2158 = vadd.f32 %v1986, %v2157
    %v2159 = vpop.f32.mrb[0].mxu0
    %2160 = vdwg.mxu0
    %v2161 = vxor.u32 %v2158, 2147483648
    %v2162 = vmul.f32 %v2161, 1.442695
    %v2163 = vpow.pop %v2162
    %v2164 = vadd.f32 %v2163, 1.0
    %v2165 = vrcp.pop %v2164
    %v2166 = vmul.f32 1.0, %v2165
    %v2167 = vtanh.pop %v2158
    %v2168 = vmul.f32 %v2166, 0.0
    %2170 = vrot.lane.b32.xlu0 %v2167, 32
    %v2171 = vpop.permute.xlu0 %2170
    %v2173 = vmul.f32 %v2166, %v2171
    %2175 = vrot.lane.b32.xlu0 %v2173, 32
    %v2176 = vpop.permute.xlu0 %2175
    %v2178 = vadd.f32 %v2168, %v2176
    %v2179 = vtanh.pop %v2178
    %2181 = vrot.lane.b32.xlu0 %v2179, 32
    %v2182 = vpop.permute.xlu0 %2181
    %v2184 = vmul.f32 %v2166, %v2182
    %v2185 = vsel %vm260, %v2085, 0
    %2187 = vmatprep.subr.mxu0 0.0
    %2188 = vmatpush1.msra.mxu0 %v1969
    %2189 = vmatprep.subr.mxu0 0.0
    %2190 = vmatpush1.msra.mxu0 %v1970
    %2191 = vmatprep.subr.mxu0 0.0
    %2192 = vmatpush1.msra.mxu0 %v1971
    %2193 = vmatprep.subr.mxu0 0.0
    %2194 = vmatpush1.msra.mxu0 %v1972
    %2195 = vmatprep.subr.mxu0 0.0
    %2196 = vmatpush1.msra.mxu0 0.0
    %2197 = vmatprep.subr.mxu0 0.0
    %2198 = vmatpush1.msra.mxu0 0.0
    %2199 = vmatprep.subr.mxu0 0.0
    %2200 = vmatpush1.msra.mxu0 0.0
    %2201 = vmatprep.subr.mxu0 0.0
    %2202 = vmatpush1.msra.mxu0 0.0
    %2203 = vmatprep.subr.mxu0 0.0
    %2204 = vmatpush1.msra.mxu0 0.0
    %2205 = vmatprep.subr.mxu0 0.0
    %2206 = vmatpush1.msra.mxu0 0.0
    %2207 = vmatprep.subr.mxu0 0.0
    %2208 = vmatpush1.msra.mxu0 0.0
    %2209 = vmatprep.subr.mxu0 0.0
    %2210 = vmatpush1.msra.mxu0 0.0
    %2211 = vmatprep.subr.mxu0 0.0
    %2212 = vmatpush1.msra.mxu0 0.0
    %2213 = vmatprep.subr.mxu0 0.0
    %2214 = vmatpush1.msra.mxu0 0.0
    %2215 = vmatprep.subr.mxu0 0.0
    %2216 = vmatpush1.msra.mxu0 0.0
    %2217 = vmatprep.subr.mxu0 0.0
    %2218 = vmatpush1.msra.mxu0 0.0
    %2219 = vmatprep.subr.mxu0 0.0
    %2220 = vmatpush1.msra.mxu0 0.0
    %2221 = vmatprep.subr.mxu0 0.0
    %2222 = vmatpush1.msra.mxu0 0.0
    %2223 = vmatprep.subr.mxu0 0.0
    %2224 = vmatpush1.msra.mxu0 0.0
    %2225 = vmatprep.subr.mxu0 0.0
    %2226 = vmatpush1.msra.mxu0 0.0
    %2227 = vmatprep.subr.mxu0 0.0
    %2228 = vmatpush1.msra.mxu0 0.0
    %2229 = vmatprep.subr.mxu0 0.0
    %2230 = vmatpush1.msra.mxu0 0.0
    %2231 = vmatprep.subr.mxu0 0.0
    %2232 = vmatpush1.msra.mxu0 0.0
    %2233 = vmatprep.subr.mxu0 0.0
    %2234 = vmatpush1.msra.mxu0 0.0
    %2235 = vmatprep.subr.mxu0 0.0
    %2236 = vmatpush1.msra.mxu0 0.0
    %2237 = vmatprep.subr.mxu0 0.0
    %2238 = vmatpush1.msra.mxu0 0.0
    %2239 = vmatprep.subr.mxu0 0.0
    %2240 = vmatpush1.msra.mxu0 0.0
    %2241 = vmatprep.subr.mxu0 0.0
    %2242 = vmatpush1.msra.mxu0 0.0
    %2243 = vmatprep.subr.mxu0 0.0
    %2244 = vmatpush1.msra.mxu0 0.0
    %2245 = vmatprep.subr.mxu0 0.0
    %2246 = vmatpush1.msra.mxu0 0.0
    %2247 = vmatprep.subr.mxu0 0.0
    %2248 = vmatpush1.msra.mxu0 0.0
    %2249 = vmatprep.subr.mxu0 0.0
    %2250 = vmatpush1.msra.mxu0 0.0
    %2251 = vmatprep.mubr.f32.mxu0 0.0
    %2252 = vmatmul.mubr.f32.gmra.mrb[0].mxu0 %v2185
    %v2253 = vpop.f32.mrb[0].mxu0
    %v2254 = vadd.f32 0.0, %v2253
    %v2255 = vpop.f32.mrb[0].mxu0
    %2256 = vdwg.mxu0
    %v2257 = vadd.f32 %v1966, %v2254
    %v2258 = vxor.u32 %v2257, 2147483648
    %v2259 = vmul.f32 %v2258, 1.442695
    %v2260 = vpow.pop %v2259
    %v2261 = vadd.f32 %v2260, 1.0
    %v2262 = vrcp.pop %v2261
    %v2263 = vmul.f32 1.0, %v2262
    %v2264 = vtanh.pop %v2257
    %v2265 = vmul.f32 %v2263, %v2076
    %2267 = vrot.lane.b32.xlu0 %v2264, 32
    %v2268 = vpop.permute.xlu0 %2267
    %v2270 = vmul.f32 %v2263, %v2268
    %2272 = vrot.lane.b32.xlu0 %v2270, 32
    %v2273 = vpop.permute.xlu0 %2272
    %v2275 = vadd.f32 %v2265, %v2273
    %v2276 = vtanh.pop %v2275
    %2278 = vrot.lane.b32.xlu0 %v2276, 32
    %v2279 = vpop.permute.xlu0 %2278
    %v2281 = vmul.f32 %v2263, %v2279
    %2283 = vrot.lane.b32.xlu0 %v2281, 64
    %v2284 = vpop.permute.xlu0 %2283
    %2287 = vrot.lane.b32.xlu0 %v2184, 96
    %v2288 = vpop.permute.xlu0 %2287
    %v2290 = vsel %vm260, %v2284, %v2288
    %v2292 = vsel %vm364, %v2290, 0
    %2294 = vmatprep.subr.mxu0 0.0
    %2295 = vmatpush1.msra.mxu0 %v1973
    %2296 = vmatprep.subr.mxu0 0.0
    %2297 = vmatpush1.msra.mxu0 %v1974
    %2298 = vmatprep.subr.mxu0 0.0
    %2299 = vmatpush1.msra.mxu0 %v1975
    %2300 = vmatprep.subr.mxu0 0.0
    %2301 = vmatpush1.msra.mxu0 %v1976
    %2302 = vmatprep.subr.mxu0 0.0
    %2303 = vmatpush1.msra.mxu0 %v1977
    %2304 = vmatprep.subr.mxu0 0.0
    %2305 = vmatpush1.msra.mxu0 %v1978
    %2306 = vmatprep.subr.mxu0 0.0
    %2307 = vmatpush1.msra.mxu0 %v1979
    %2308 = vmatprep.subr.mxu0 0.0
    %2309 = vmatpush1.msra.mxu0 %v1980
    %2310 = vmatprep.subr.mxu0 0.0
    %2311 = vmatpush1.msra.mxu0 0.0
    %2312 = vmatprep.subr.mxu0 0.0
    %2313 = vmatpush1.msra.mxu0 0.0
    %2314 = vmatprep.subr.mxu0 0.0
    %2315 = vmatpush1.msra.mxu0 0.0
    %2316 = vmatprep.subr.mxu0 0.0
    %2317 = vmatpush1.msra.mxu0 0.0
    %2318 = vmatprep.subr.mxu0 0.0
    %2319 = vmatpush1.msra.mxu0 0.0
    %2320 = vmatprep.subr.mxu0 0.0
    %2321 = vmatpush1.msra.mxu0 0.0
    %2322 = vmatprep.subr.mxu0 0.0
    %2323 = vmatpush1.msra.mxu0 0.0
    %2324 = vmatprep.subr.mxu0 0.0
    %2325 = vmatpush1.msra.mxu0 0.0
    %2326 = vmatprep.subr.mxu0 0.0
    %2327 = vmatpush1.msra.mxu0 0.0
    %2328 = vmatprep.subr.mxu0 0.0
    %2329 = vmatpush1.msra.mxu0 0.0
    %2330 = vmatprep.subr.mxu0 0.0
    %2331 = vmatpush1.msra.mxu0 0.0
    %2332 = vmatprep.subr.mxu0 0.0
    %2333 = vmatpush1.msra.mxu0 0.0
    %2334 = vmatprep.subr.mxu0 0.0
    %2335 = vmatpush1.msra.mxu0 0.0
    %2336 = vmatprep.subr.mxu0 0.0
    %2337 = vmatpush1.msra.mxu0 0.0
    %2338 = vmatprep.subr.mxu0 0.0
    %2339 = vmatpush1.msra.mxu0 0.0
    %2340 = vmatprep.subr.mxu0 0.0
    %2341 = vmatpush1.msra.mxu0 0.0
    %2342 = vmatprep.subr.mxu0 0.0
    %2343 = vmatpush1.msra.mxu0 0.0
    %2344 = vmatprep.subr.mxu0 0.0
    %2345 = vmatpush1.msra.mxu0 0.0
    %2346 = vmatprep.subr.mxu0 0.0
    %2347 = vmatpush1.msra.mxu0 0.0
    %2348 = vmatprep.subr.mxu0 0.0
    %2349 = vmatpush1.msra.mxu0 0.0
    %2350 = vmatprep.subr.mxu0 0.0
    %2351 = vmatpush1.msra.mxu0 0.0
    %2352 = vmatprep.subr.mxu0 0.0
    %2353 = vmatpush1.msra.mxu0 0.0
    %2354 = vmatprep.subr.mxu0 0.0
    %2355 = vmatpush1.msra.mxu0 0.0
    %2356 = vmatprep.subr.mxu0 0.0
    %2357 = vmatpush1.msra.mxu0 0.0
    %2358 = vmatprep.mubr.f32.mxu0 0.0
    %2359 = vmatmul.mubr.f32.gmra.mrb[0].mxu0 %v2292
    %v2360 = vpop.f32.mrb[0].mxu0
    %v2361 = vadd.f32 %v1986, %v2360
    %v2362 = vpop.f32.mrb[0].mxu0
    %2363 = vdwg.mxu0
    %v2364 = vxor.u32 %v2361, 2147483648
    %v2365 = vmul.f32 %v2364, 1.442695
    %v2366 = vpow.pop %v2365
    %v2367 = vadd.f32 %v2366, 1.0
    %v2368 = vrcp.pop %v2367
    %v2369 = vmul.f32 1.0, %v2368
    %v2370 = vtanh.pop %v2361
    %v2371 = vmul.f32 %v2369, %v2178
    %2373 = vrot.lane.b32.xlu0 %v2370, 32
    %v2374 = vpop.permute.xlu0 %2373
    %v2376 = vmul.f32 %v2369, %v2374
    %2378 = vrot.lane.b32.xlu0 %v2376, 32
    %v2379 = vpop.permute.xlu0 %2378
    %v2381 = vadd.f32 %v2371, %v2379
    %v2382 = vtanh.pop %v2381
    %2384 = vrot.lane.b32.xlu0 %v2382, 32
    %v2385 = vpop.permute.xlu0 %2384
    %v2387 = vmul.f32 %v2369, %v2385
    %v2388 = vsel %vm260, %v2284, 0
    %2390 = vmatprep.subr.mxu0 0.0
    %2391 = vmatpush1.msra.mxu0 %v1969
    %2392 = vmatprep.subr.mxu0 0.0
    %2393 = vmatpush1.msra.mxu0 %v1970
    %2394 = vmatprep.subr.mxu0 0.0
    %2395 = vmatpush1.msra.mxu0 %v1971
    %2396 = vmatprep.subr.mxu0 0.0
    %2397 = vmatpush1.msra.mxu0 %v1972
    %2398 = vmatprep.subr.mxu0 0.0
    %2399 = vmatpush1.msra.mxu0 0.0
    %2400 = vmatprep.subr.mxu0 0.0
    %2401 = vmatpush1.msra.mxu0 0.0
    %2402 = vmatprep.subr.mxu0 0.0
    %2403 = vmatpush1.msra.mxu0 0.0
    %2404 = vmatprep.subr.mxu0 0.0
    %2405 = vmatpush1.msra.mxu0 0.0
    %2406 = vmatprep.subr.mxu0 0.0
    %2407 = vmatpush1.msra.mxu0 0.0
    %2408 = vmatprep.subr.mxu0 0.0
    %2409 = vmatpush1.msra.mxu0 0.0
    %2410 = vmatprep.subr.mxu0 0.0
    %2411 = vmatpush1.msra.mxu0 0.0
    %2412 = vmatprep.subr.mxu0 0.0
    %2413 = vmatpush1.msra.mxu0 0.0
    %2414 = vmatprep.subr.mxu0 0.0
    %2415 = vmatpush1.msra.mxu0 0.0
    %2416 = vmatprep.subr.mxu0 0.0
    %2417 = vmatpush1.msra.mxu0 0.0
    %2418 = vmatprep.subr.mxu0 0.0
    %2419 = vmatpush1.msra.mxu0 0.0
    %2420 = vmatprep.subr.mxu0 0.0
    %2421 = vmatpush1.msra.mxu0 0.0
    %2422 = vmatprep.subr.mxu0 0.0
    %2423 = vmatpush1.msra.mxu0 0.0
    %2424 = vmatprep.subr.mxu0 0.0
    %2425 = vmatpush1.msra.mxu0 0.0
    %2426 = vmatprep.subr.mxu0 0.0
    %2427 = vmatpush1.msra.mxu0 0.0
    %2428 = vmatprep.subr.mxu0 0.0
    %2429 = vmatpush1.msra.mxu0 0.0
    %2430 = vmatprep.subr.mxu0 0.0
    %2431 = vmatpush1.msra.mxu0 0.0
    %2432 = vmatprep.subr.mxu0 0.0
    %2433 = vmatpush1.msra.mxu0 0.0
    %2434 = vmatprep.subr.mxu0 0.0
    %2435 = vmatpush1.msra.mxu0 0.0
    %2436 = vmatprep.subr.mxu0 0.0
    %2437 = vmatpush1.msra.mxu0 0.0
    %2438 = vmatprep.subr.mxu0 0.0
    %2439 = vmatpush1.msra.mxu0 0.0
    %2440 = vmatprep.subr.mxu0 0.0
    %2441 = vmatpush1.msra.mxu0 0.0
    %2442 = vmatprep.subr.mxu0 0.0
    %2443 = vmatpush1.msra.mxu0 0.0
    %2444 = vmatprep.subr.mxu0 0.0
    %2445 = vmatpush1.msra.mxu0 0.0
    %2446 = vmatprep.subr.mxu0 0.0
    %2447 = vmatpush1.msra.mxu0 0.0
    %2448 = vmatprep.subr.mxu0 0.0
    %2449 = vmatpush1.msra.mxu0 0.0
    %2450 = vmatprep.subr.mxu0 0.0
    %2451 = vmatpush1.msra.mxu0 0.0
    %2452 = vmatprep.subr.mxu0 0.0
    %2453 = vmatpush1.msra.mxu0 0.0
    %2454 = vmatprep.mubr.f32.mxu0 0.0
    %2455 = vmatmul.mubr.f32.gmra.mrb[0].mxu0 %v2388
    %v2456 = vpop.f32.mrb[0].mxu0
    %v2457 = vadd.f32 0.0, %v2456
    %v2458 = vpop.f32.mrb[0].mxu0
    %2459 = vdwg.mxu0
    %v2460 = vadd.f32 %v1966, %v2457
    %v2461 = vxor.u32 %v2460, 2147483648
    %v2462 = vmul.f32 %v2461, 1.442695
    %v2463 = vpow.pop %v2462
    %v2464 = vadd.f32 %v2463, 1.0
    %v2465 = vrcp.pop %v2464
    %v2466 = vmul.f32 1.0, %v2465
    %v2467 = vtanh.pop %v2460
    %v2468 = vmul.f32 %v2466, %v2275
    %2470 = vrot.lane.b32.xlu0 %v2467, 32
    %v2471 = vpop.permute.xlu0 %2470
    %v2473 = vmul.f32 %v2466, %v2471
    %2475 = vrot.lane.b32.xlu0 %v2473, 32
    %v2476 = vpop.permute.xlu0 %2475
    %v2478 = vadd.f32 %v2468, %v2476
    %v2479 = vtanh.pop %v2478
    %2481 = vrot.lane.b32.xlu0 %v2479, 32
    %v2482 = vpop.permute.xlu0 %2481
    %v2484 = vmul.f32 %v2466, %v2482
    %2486 = vrot.lane.b32.xlu0 %v2484, 64
    %v2487 = vpop.permute.xlu0 %2486
    %2490 = vrot.lane.b32.xlu0 %v2387, 96
    %v2491 = vpop.permute.xlu0 %2490
    %v2493 = vsel %vm260, %v2487, %v2491
    %v2495 = vsel %vm364, %v2493, 0
    %2497 = vmatprep.subr.mxu0 0.0
    %2498 = vmatpush1.msra.mxu0 %v1973
    %2499 = vmatprep.subr.mxu0 0.0
    %2500 = vmatpush1.msra.mxu0 %v1974
    %2501 = vmatprep.subr.mxu0 0.0
    %2502 = vmatpush1.msra.mxu0 %v1975
    %2503 = vmatprep.subr.mxu0 0.0
    %2504 = vmatpush1.msra.mxu0 %v1976
    %2505 = vmatprep.subr.mxu0 0.0
    %2506 = vmatpush1.msra.mxu0 %v1977
    %2507 = vmatprep.subr.mxu0 0.0
    %2508 = vmatpush1.msra.mxu0 %v1978
    %2509 = vmatprep.subr.mxu0 0.0
    %2510 = vmatpush1.msra.mxu0 %v1979
    %2511 = vmatprep.subr.mxu0 0.0
    %2512 = vmatpush1.msra.mxu0 %v1980
    %2513 = vmatprep.subr.mxu0 0.0
    %2514 = vmatpush1.msra.mxu0 0.0
    %2515 = vmatprep.subr.mxu0 0.0
    %2516 = vmatpush1.msra.mxu0 0.0
    %2517 = vmatprep.subr.mxu0 0.0
    %2518 = vmatpush1.msra.mxu0 0.0
    %2519 = vmatprep.subr.mxu0 0.0
    %2520 = vmatpush1.msra.mxu0 0.0
    %2521 = vmatprep.subr.mxu0 0.0
    %2522 = vmatpush1.msra.mxu0 0.0
    %2523 = vmatprep.subr.mxu0 0.0
    %2524 = vmatpush1.msra.mxu0 0.0
    %2525 = vmatprep.subr.mxu0 0.0
    %2526 = vmatpush1.msra.mxu0 0.0
    %2527 = vmatprep.subr.mxu0 0.0
    %2528 = vmatpush1.msra.mxu0 0.0
    %2529 = vmatprep.subr.mxu0 0.0
    %2530 = vmatpush1.msra.mxu0 0.0
    %2531 = vmatprep.subr.mxu0 0.0
    %2532 = vmatpush1.msra.mxu0 0.0
    %2533 = vmatprep.subr.mxu0 0.0
    %2534 = vmatpush1.msra.mxu0 0.0
    %2535 = vmatprep.subr.mxu0 0.0
    %2536 = vmatpush1.msra.mxu0 0.0
    %2537 = vmatprep.subr.mxu0 0.0
    %2538 = vmatpush1.msra.mxu0 0.0
    %2539 = vmatprep.subr.mxu0 0.0
    %2540 = vmatpush1.msra.mxu0 0.0
    %2541 = vmatprep.subr.mxu0 0.0
    %2542 = vmatpush1.msra.mxu0 0.0
    %2543 = vmatprep.subr.mxu0 0.0
    %2544 = vmatpush1.msra.mxu0 0.0
    %2545 = vmatprep.subr.mxu0 0.0
    %2546 = vmatpush1.msra.mxu0 0.0
    %2547 = vmatprep.subr.mxu0 0.0
    %2548 = vmatpush1.msra.mxu0 0.0
    %2549 = vmatprep.subr.mxu0 0.0
    %2550 = vmatpush1.msra.mxu0 0.0
    %2551 = vmatprep.subr.mxu0 0.0
    %2552 = vmatpush1.msra.mxu0 0.0
    %2553 = vmatprep.subr.mxu0 0.0
    %2554 = vmatpush1.msra.mxu0 0.0
    %2555 = vmatprep.subr.mxu0 0.0
    %2556 = vmatpush1.msra.mxu0 0.0
    %2557 = vmatprep.subr.mxu0 0.0
    %2558 = vmatpush1.msra.mxu0 0.0
    %2559 = vmatprep.subr.mxu0 0.0
    %2560 = vmatpush1.msra.mxu0 0.0
    %2561 = vmatprep.mubr.f32.mxu0 0.0
    %2562 = vmatmul.mubr.f32.gmra.mrb[0].mxu0 %v2495
    %v2563 = vpop.f32.mrb[0].mxu0
    %v2564 = vadd.f32 %v1986, %v2563
    %v2565 = vpop.f32.mrb[0].mxu0
    %2566 = vdwg.mxu0
    %v2567 = vxor.u32 %v2564, 2147483648
    %v2568 = vmul.f32 %v2567, 1.442695
    %v2569 = vpow.pop %v2568
    %v2570 = vadd.f32 %v2569, 1.0
    %v2571 = vrcp.pop %v2570
    %v2572 = vmul.f32 1.0, %v2571
    %v2573 = vtanh.pop %v2564
    %v2574 = vmul.f32 %v2572, %v2381
    %2576 = vrot.lane.b32.xlu0 %v2573, 32
    %v2577 = vpop.permute.xlu0 %2576
    %v2579 = vmul.f32 %v2572, %v2577
    %2581 = vrot.lane.b32.xlu0 %v2579, 32
    %v2582 = vpop.permute.xlu0 %2581
    %v2584 = vadd.f32 %v2574, %v2582
    %v2585 = vtanh.pop %v2584
    %2587 = vrot.lane.b32.xlu0 %v2585, 32
    %v2588 = vpop.permute.xlu0 %2587
    %v2590 = vmul.f32 %v2572, %v2588
    %v2591 = vsel %vm260, %v2487, 0
    %2593 = vmatprep.subr.mxu0 0.0
    %2594 = vmatpush1.msra.mxu0 %v1969
    %2595 = vmatprep.subr.mxu0 0.0
    %2596 = vmatpush1.msra.mxu0 %v1970
    %2597 = vmatprep.subr.mxu0 0.0
    %2598 = vmatpush1.msra.mxu0 %v1971
    %2599 = vmatprep.subr.mxu0 0.0
    %2600 = vmatpush1.msra.mxu0 %v1972
    %2601 = vmatprep.subr.mxu0 0.0
    %2602 = vmatpush1.msra.mxu0 0.0
    %2603 = vmatprep.subr.mxu0 0.0
    %2604 = vmatpush1.msra.mxu0 0.0
    %2605 = vmatprep.subr.mxu0 0.0
    %2606 = vmatpush1.msra.mxu0 0.0
    %2607 = vmatprep.subr.mxu0 0.0
    %2608 = vmatpush1.msra.mxu0 0.0
    %2609 = vmatprep.subr.mxu0 0.0
    %2610 = vmatpush1.msra.mxu0 0.0
    %2611 = vmatprep.subr.mxu0 0.0
    %2612 = vmatpush1.msra.mxu0 0.0
    %2613 = vmatprep.subr.mxu0 0.0
    %2614 = vmatpush1.msra.mxu0 0.0
    %2615 = vmatprep.subr.mxu0 0.0
    %2616 = vmatpush1.msra.mxu0 0.0
    %2617 = vmatprep.subr.mxu0 0.0
    %2618 = vmatpush1.msra.mxu0 0.0
    %2619 = vmatprep.subr.mxu0 0.0
    %2620 = vmatpush1.msra.mxu0 0.0
    %2621 = vmatprep.subr.mxu0 0.0
    %2622 = vmatpush1.msra.mxu0 0.0
    %2623 = vmatprep.subr.mxu0 0.0
    %2624 = vmatpush1.msra.mxu0 0.0
    %2625 = vmatprep.subr.mxu0 0.0
    %2626 = vmatpush1.msra.mxu0 0.0
    %2627 = vmatprep.subr.mxu0 0.0
    %2628 = vmatpush1.msra.mxu0 0.0
    %2629 = vmatprep.subr.mxu0 0.0
    %2630 = vmatpush1.msra.mxu0 0.0
    %2631 = vmatprep.subr.mxu0 0.0
    %2632 = vmatpush1.msra.mxu0 0.0
    %2633 = vmatprep.subr.mxu0 0.0
    %2634 = vmatpush1.msra.mxu0 0.0
    %2635 = vmatprep.subr.mxu0 0.0
    %2636 = vmatpush1.msra.mxu0 0.0
    %2637 = vmatprep.subr.mxu0 0.0
    %2638 = vmatpush1.msra.mxu0 0.0
    %2639 = vmatprep.subr.mxu0 0.0
    %2640 = vmatpush1.msra.mxu0 0.0
    %2641 = vmatprep.subr.mxu0 0.0
    %2642 = vmatpush1.msra.mxu0 0.0
    %2643 = vmatprep.subr.mxu0 0.0
    %2644 = vmatpush1.msra.mxu0 0.0
    %2645 = vmatprep.subr.mxu0 0.0
    %2646 = vmatpush1.msra.mxu0 0.0
    %2647 = vmatprep.subr.mxu0 0.0
    %2648 = vmatpush1.msra.mxu0 0.0
    %2649 = vmatprep.subr.mxu0 0.0
    %2650 = vmatpush1.msra.mxu0 0.0
    %2651 = vmatprep.subr.mxu0 0.0
    %2652 = vmatpush1.msra.mxu0 0.0
    %2653 = vmatprep.subr.mxu0 0.0
    %2654 = vmatpush1.msra.mxu0 0.0
    %2655 = vmatprep.subr.mxu0 0.0
    %2656 = vmatpush1.msra.mxu0 0.0
    %2657 = vmatprep.mubr.f32.mxu0 0.0
    %2658 = vmatmul.mubr.f32.gmra.mrb[0].mxu0 %v2591
    %v2659 = vpop.f32.mrb[0].mxu0
    %v2660 = vadd.f32 0.0, %v2659
    %v2661 = vpop.f32.mrb[0].mxu0
    %2662 = vdwg.mxu0
    %v2663 = vadd.f32 %v1966, %v2660
    %v2664 = vxor.u32 %v2663, 2147483648
    %v2665 = vmul.f32 %v2664, 1.442695
    %v2666 = vpow.pop %v2665
    %v2667 = vadd.f32 %v2666, 1.0
    %v2668 = vrcp.pop %v2667
    %v2669 = vmul.f32 1.0, %v2668
    %v2670 = vtanh.pop %v2663
    %v2671 = vmul.f32 %v2669, %v2478
    %2673 = vrot.lane.b32.xlu0 %v2670, 32
    %v2674 = vpop.permute.xlu0 %2673
    %v2676 = vmul.f32 %v2669, %v2674
    %2678 = vrot.lane.b32.xlu0 %v2676, 32
    %v2679 = vpop.permute.xlu0 %2678
    %v2681 = vadd.f32 %v2671, %v2679
    %v2682 = vtanh.pop %v2681
    %2684 = vrot.lane.b32.xlu0 %v2682, 32
    %v2685 = vpop.permute.xlu0 %2684
    %v2687 = vmul.f32 %v2669, %v2685
    %2689 = vrot.lane.b32.xlu0 %v2687, 64
    %v2690 = vpop.permute.xlu0 %2689
    %2693 = vrot.lane.b32.xlu0 %v2590, 96
    %v2694 = vpop.permute.xlu0 %2693
    %v2696 = vsel %vm260, %v2690, %v2694
    %v2698 = vsel %vm364, %v2696, 0
    %2700 = vmatprep.subr.mxu0 0.0
    %2701 = vmatpush1.msra.mxu0 %v1973
    %2702 = vmatprep.subr.mxu0 0.0
    %2703 = vmatpush1.msra.mxu0 %v1974
    %2704 = vmatprep.subr.mxu0 0.0
    %2705 = vmatpush1.msra.mxu0 %v1975
    %2706 = vmatprep.subr.mxu0 0.0
    %2707 = vmatpush1.msra.mxu0 %v1976
    %2708 = vmatprep.subr.mxu0 0.0
    %2709 = vmatpush1.msra.mxu0 %v1977
    %2710 = vmatprep.subr.mxu0 0.0
    %2711 = vmatpush1.msra.mxu0 %v1978
    %2712 = vmatprep.subr.mxu0 0.0
    %2713 = vmatpush1.msra.mxu0 %v1979
    %2714 = vmatprep.subr.mxu0 0.0
    %2715 = vmatpush1.msra.mxu0 %v1980
    %2716 = vmatprep.subr.mxu0 0.0
    %2717 = vmatpush1.msra.mxu0 0.0
    %2718 = vmatprep.subr.mxu0 0.0
    %2719 = vmatpush1.msra.mxu0 0.0
    %2720 = vmatprep.subr.mxu0 0.0
    %2721 = vmatpush1.msra.mxu0 0.0
    %2722 = vmatprep.subr.mxu0 0.0
    %2723 = vmatpush1.msra.mxu0 0.0
    %2724 = vmatprep.subr.mxu0 0.0
    %2725 = vmatpush1.msra.mxu0 0.0
    %2726 = vmatprep.subr.mxu0 0.0
    %2727 = vmatpush1.msra.mxu0 0.0
    %2728 = vmatprep.subr.mxu0 0.0
    %2729 = vmatpush1.msra.mxu0 0.0
    %2730 = vmatprep.subr.mxu0 0.0
    %2731 = vmatpush1.msra.mxu0 0.0
    %2732 = vmatprep.subr.mxu0 0.0
    %2733 = vmatpush1.msra.mxu0 0.0
    %2734 = vmatprep.subr.mxu0 0.0
    %2735 = vmatpush1.msra.mxu0 0.0
    %2736 = vmatprep.subr.mxu0 0.0
    %2737 = vmatpush1.msra.mxu0 0.0
    %2738 = vmatprep.subr.mxu0 0.0
    %2739 = vmatpush1.msra.mxu0 0.0
    %2740 = vmatprep.subr.mxu0 0.0
    %2741 = vmatpush1.msra.mxu0 0.0
    %2742 = vmatprep.subr.mxu0 0.0
    %2743 = vmatpush1.msra.mxu0 0.0
    %2744 = vmatprep.subr.mxu0 0.0
    %2745 = vmatpush1.msra.mxu0 0.0
    %2746 = vmatprep.subr.mxu0 0.0
    %2747 = vmatpush1.msra.mxu0 0.0
    %2748 = vmatprep.subr.mxu0 0.0
    %2749 = vmatpush1.msra.mxu0 0.0
    %2750 = vmatprep.subr.mxu0 0.0
    %2751 = vmatpush1.msra.mxu0 0.0
    %2752 = vmatprep.subr.mxu0 0.0
    %2753 = vmatpush1.msra.mxu0 0.0
    %2754 = vmatprep.subr.mxu0 0.0
    %2755 = vmatpush1.msra.mxu0 0.0
    %2756 = vmatprep.subr.mxu0 0.0
    %2757 = vmatpush1.msra.mxu0 0.0
    %2758 = vmatprep.subr.mxu0 0.0
    %2759 = vmatpush1.msra.mxu0 0.0
    %2760 = vmatprep.subr.mxu0 0.0
    %2761 = vmatpush1.msra.mxu0 0.0
    %2762 = vmatprep.subr.mxu0 0.0
    %2763 = vmatpush1.msra.mxu0 0.0
    %2764 = vmatprep.mubr.f32.mxu0 0.0
    %2765 = vmatmul.mubr.f32.gmra.mrb[0].mxu0 %v2698
    %v2766 = vpop.f32.mrb[0].mxu0
    %v2767 = vadd.f32 %v1986, %v2766
    %v2768 = vpop.f32.mrb[0].mxu0
    %2769 = vdwg.mxu0
    %v2770 = vxor.u32 %v2767, 2147483648
    %v2771 = vmul.f32 %v2770, 1.442695
    %v2772 = vpow.pop %v2771
    %v2773 = vadd.f32 %v2772, 1.0
    %v2774 = vrcp.pop %v2773
    %v2775 = vmul.f32 1.0, %v2774
    %v2776 = vtanh.pop %v2767
    %v2777 = vmul.f32 %v2775, %v2584
    %2779 = vrot.lane.b32.xlu0 %v2776, 32
    %v2780 = vpop.permute.xlu0 %2779
    %v2782 = vmul.f32 %v2775, %v2780
    %2784 = vrot.lane.b32.xlu0 %v2782, 32
    %v2785 = vpop.permute.xlu0 %2784
    %v2787 = vadd.f32 %v2777, %v2785
    %v2788 = vtanh.pop %v2787
    %2790 = vrot.lane.b32.xlu0 %v2788, 32
    %v2791 = vpop.permute.xlu0 %2790
    %v2793 = vmul.f32 %v2775, %v2791
    %v2794 = vsel %vm260, %v2690, 0
    %2796 = vmatprep.subr.mxu0 0.0
    %2797 = vmatpush1.msra.mxu0 %v1969
    %2798 = vmatprep.subr.mxu0 0.0
    %2799 = vmatpush1.msra.mxu0 %v1970
    %2800 = vmatprep.subr.mxu0 0.0
    %2801 = vmatpush1.msra.mxu0 %v1971
    %2802 = vmatprep.subr.mxu0 0.0
    %2803 = vmatpush1.msra.mxu0 %v1972
    %2804 = vmatprep.subr.mxu0 0.0
    %2805 = vmatpush1.msra.mxu0 0.0
    %2806 = vmatprep.subr.mxu0 0.0
    %2807 = vmatpush1.msra.mxu0 0.0
    %2808 = vmatprep.subr.mxu0 0.0
    %2809 = vmatpush1.msra.mxu0 0.0
    %2810 = vmatprep.subr.mxu0 0.0
    %2811 = vmatpush1.msra.mxu0 0.0
    %2812 = vmatprep.subr.mxu0 0.0
    %2813 = vmatpush1.msra.mxu0 0.0
    %2814 = vmatprep.subr.mxu0 0.0
    %2815 = vmatpush1.msra.mxu0 0.0
    %2816 = vmatprep.subr.mxu0 0.0
    %2817 = vmatpush1.msra.mxu0 0.0
    %2818 = vmatprep.subr.mxu0 0.0
    %2819 = vmatpush1.msra.mxu0 0.0
    %2820 = vmatprep.subr.mxu0 0.0
    %2821 = vmatpush1.msra.mxu0 0.0
    %2822 = vmatprep.subr.mxu0 0.0
    %2823 = vmatpush1.msra.mxu0 0.0
    %2824 = vmatprep.subr.mxu0 0.0
    %2825 = vmatpush1.msra.mxu0 0.0
    %2826 = vmatprep.subr.mxu0 0.0
    %2827 = vmatpush1.msra.mxu0 0.0
    %2828 = vmatprep.subr.mxu0 0.0
    %2829 = vmatpush1.msra.mxu0 0.0
    %2830 = vmatprep.subr.mxu0 0.0
    %2831 = vmatpush1.msra.mxu0 0.0
    %2832 = vmatprep.subr.mxu0 0.0
    %2833 = vmatpush1.msra.mxu0 0.0
    %2834 = vmatprep.subr.mxu0 0.0
    %2835 = vmatpush1.msra.mxu0 0.0
    %2836 = vmatprep.subr.mxu0 0.0
    %2837 = vmatpush1.msra.mxu0 0.0
    %2838 = vmatprep.subr.mxu0 0.0
    %2839 = vmatpush1.msra.mxu0 0.0
    %2840 = vmatprep.subr.mxu0 0.0
    %2841 = vmatpush1.msra.mxu0 0.0
    %2842 = vmatprep.subr.mxu0 0.0
    %2843 = vmatpush1.msra.mxu0 0.0
    %2844 = vmatprep.subr.mxu0 0.0
    %2845 = vmatpush1.msra.mxu0 0.0
    %2846 = vmatprep.subr.mxu0 0.0
    %2847 = vmatpush1.msra.mxu0 0.0
    %2848 = vmatprep.subr.mxu0 0.0
    %2849 = vmatpush1.msra.mxu0 0.0
    %2850 = vmatprep.subr.mxu0 0.0
    %2851 = vmatpush1.msra.mxu0 0.0
    %2852 = vmatprep.subr.mxu0 0.0
    %2853 = vmatpush1.msra.mxu0 0.0
    %2854 = vmatprep.subr.mxu0 0.0
    %2855 = vmatpush1.msra.mxu0 0.0
    %2856 = vmatprep.subr.mxu0 0.0
    %2857 = vmatpush1.msra.mxu0 0.0
    %2858 = vmatprep.subr.mxu0 0.0
    %2859 = vmatpush1.msra.mxu0 0.0
    %2860 = vmatprep.mubr.f32.mxu0 0.0
    %2861 = vmatmul.mubr.f32.gmra.mrb[0].mxu0 %v2794
    %v2862 = vpop.f32.mrb[0].mxu0
    %v2863 = vadd.f32 0.0, %v2862
    %v2864 = vpop.f32.mrb[0].mxu0
    %2865 = vdwg.mxu0
    %v2866 = vadd.f32 %v1966, %v2863
    %v2867 = vxor.u32 %v2866, 2147483648
    %v2868 = vmul.f32 %v2867, 1.442695
    %v2869 = vpow.pop %v2868
    %v2870 = vadd.f32 %v2869, 1.0
    %v2871 = vrcp.pop %v2870
    %v2872 = vmul.f32 1.0, %v2871
    %v2873 = vtanh.pop %v2866
    %v2874 = vmul.f32 %v2872, %v2681
    %2876 = vrot.lane.b32.xlu0 %v2873, 32
    %v2877 = vpop.permute.xlu0 %2876
    %v2879 = vmul.f32 %v2872, %v2877
    %2881 = vrot.lane.b32.xlu0 %v2879, 32
    %v2882 = vpop.permute.xlu0 %2881
    %v2884 = vadd.f32 %v2874, %v2882
    %v2885 = vtanh.pop %v2884
    %2887 = vrot.lane.b32.xlu0 %v2885, 32
    %v2888 = vpop.permute.xlu0 %2887
    %v2890 = vmul.f32 %v2872, %v2888
    %2892 = vrot.lane.b32.xlu0 %v2890, 64
    %v2893 = vpop.permute.xlu0 %2892
    %2896 = vrot.lane.b32.xlu0 %v2793, 96
    %v2897 = vpop.permute.xlu0 %2896
    %v2899 = vsel %vm260, %v2893, %v2897
    %v2901 = vsel %vm364, %v2899, 0
    %2903 = vmatprep.subr.mxu0 0.0
    %2904 = vmatpush1.msra.mxu0 %v1973
    %2905 = vmatprep.subr.mxu0 0.0
    %2906 = vmatpush1.msra.mxu0 %v1974
    %2907 = vmatprep.subr.mxu0 0.0
    %2908 = vmatpush1.msra.mxu0 %v1975
    %2909 = vmatprep.subr.mxu0 0.0
    %2910 = vmatpush1.msra.mxu0 %v1976
    %2911 = vmatprep.subr.mxu0 0.0
    %2912 = vmatpush1.msra.mxu0 %v1977
    %2913 = vmatprep.subr.mxu0 0.0
    %2914 = vmatpush1.msra.mxu0 %v1978
    %2915 = vmatprep.subr.mxu0 0.0
    %2916 = vmatpush1.msra.mxu0 %v1979
    %2917 = vmatprep.subr.mxu0 0.0
    %2918 = vmatpush1.msra.mxu0 %v1980
    %2919 = vmatprep.subr.mxu0 0.0
    %2920 = vmatpush1.msra.mxu0 0.0
    %2921 = vmatprep.subr.mxu0 0.0
    %2922 = vmatpush1.msra.mxu0 0.0
    %2923 = vmatprep.subr.mxu0 0.0
    %2924 = vmatpush1.msra.mxu0 0.0
    %2925 = vmatprep.subr.mxu0 0.0
    %2926 = vmatpush1.msra.mxu0 0.0
    %2927 = vmatprep.subr.mxu0 0.0
    %2928 = vmatpush1.msra.mxu0 0.0
    %2929 = vmatprep.subr.mxu0 0.0
    %2930 = vmatpush1.msra.mxu0 0.0
    %2931 = vmatprep.subr.mxu0 0.0
    %2932 = vmatpush1.msra.mxu0 0.0
    %2933 = vmatprep.subr.mxu0 0.0
    %2934 = vmatpush1.msra.mxu0 0.0
    %2935 = vmatprep.subr.mxu0 0.0
    %2936 = vmatpush1.msra.mxu0 0.0
    %2937 = vmatprep.subr.mxu0 0.0
    %2938 = vmatpush1.msra.mxu0 0.0
    %2939 = vmatprep.subr.mxu0 0.0
    %2940 = vmatpush1.msra.mxu0 0.0
    %2941 = vmatprep.subr.mxu0 0.0
    %2942 = vmatpush1.msra.mxu0 0.0
    %2943 = vmatprep.subr.mxu0 0.0
    %2944 = vmatpush1.msra.mxu0 0.0
    %2945 = vmatprep.subr.mxu0 0.0
    %2946 = vmatpush1.msra.mxu0 0.0
    %2947 = vmatprep.subr.mxu0 0.0
    %2948 = vmatpush1.msra.mxu0 0.0
    %2949 = vmatprep.subr.mxu0 0.0
    %2950 = vmatpush1.msra.mxu0 0.0
    %2951 = vmatprep.subr.mxu0 0.0
    %2952 = vmatpush1.msra.mxu0 0.0
    %2953 = vmatprep.subr.mxu0 0.0
    %2954 = vmatpush1.msra.mxu0 0.0
    %2955 = vmatprep.subr.mxu0 0.0
    %2956 = vmatpush1.msra.mxu0 0.0
    %2957 = vmatprep.subr.mxu0 0.0
    %2958 = vmatpush1.msra.mxu0 0.0
    %2959 = vmatprep.subr.mxu0 0.0
    %2960 = vmatpush1.msra.mxu0 0.0
    %2961 = vmatprep.subr.mxu0 0.0
    %2962 = vmatpush1.msra.mxu0 0.0
    %2963 = vmatprep.subr.mxu0 0.0
    %2964 = vmatpush1.msra.mxu0 0.0
    %2965 = vmatprep.subr.mxu0 0.0
    %2966 = vmatpush1.msra.mxu0 0.0
    %2967 = vmatprep.mubr.f32.mxu0 0.0
    %2968 = vmatmul.mubr.f32.gmra.mrb[0].mxu0 %v2901
    %v2969 = vpop.f32.mrb[0].mxu0
    %v2970 = vadd.f32 %v1986, %v2969
    %v2971 = vpop.f32.mrb[0].mxu0
    %2972 = vdwg.mxu0
    %v2973 = vxor.u32 %v2970, 2147483648
    %v2974 = vmul.f32 %v2973, 1.442695
    %v2975 = vpow.pop %v2974
    %v2976 = vadd.f32 %v2975, 1.0
    %v2977 = vrcp.pop %v2976
    %v2978 = vmul.f32 1.0, %v2977
    %v2979 = vtanh.pop %v2970
    %v2980 = vmul.f32 %v2978, %v2787
    %2982 = vrot.lane.b32.xlu0 %v2979, 32
    %v2983 = vpop.permute.xlu0 %2982
    %v2985 = vmul.f32 %v2978, %v2983
    %2987 = vrot.lane.b32.xlu0 %v2985, 32
    %v2988 = vpop.permute.xlu0 %2987
    %v2990 = vadd.f32 %v2980, %v2988
    %v2991 = vtanh.pop %v2990
    %2993 = vrot.lane.b32.xlu0 %v2991, 32
    %v2994 = vpop.permute.xlu0 %2993
    %v2996 = vmul.f32 %v2978, %v2994
    %v2997 = vsel %vm260, %v2893, 0
    %2999 = vmatprep.subr.mxu0 0.0
    %3000 = vmatpush1.msra.mxu0 %v1969
    %3001 = vmatprep.subr.mxu0 0.0
    %3002 = vmatpush1.msra.mxu0 %v1970
    %3003 = vmatprep.subr.mxu0 0.0
    %3004 = vmatpush1.msra.mxu0 %v1971
    %3005 = vmatprep.subr.mxu0 0.0
    %3006 = vmatpush1.msra.mxu0 %v1972
    %3007 = vmatprep.subr.mxu0 0.0
    %3008 = vmatpush1.msra.mxu0 0.0
    %3009 = vmatprep.subr.mxu0 0.0
    %3010 = vmatpush1.msra.mxu0 0.0
    %3011 = vmatprep.subr.mxu0 0.0
    %3012 = vmatpush1.msra.mxu0 0.0
    %3013 = vmatprep.subr.mxu0 0.0
    %3014 = vmatpush1.msra.mxu0 0.0
    %3015 = vmatprep.subr.mxu0 0.0
    %3016 = vmatpush1.msra.mxu0 0.0
    %3017 = vmatprep.subr.mxu0 0.0
    %3018 = vmatpush1.msra.mxu0 0.0
    %3019 = vmatprep.subr.mxu0 0.0
    %3020 = vmatpush1.msra.mxu0 0.0
    %3021 = vmatprep.subr.mxu0 0.0
    %3022 = vmatpush1.msra.mxu0 0.0
    %3023 = vmatprep.subr.mxu0 0.0
    %3024 = vmatpush1.msra.mxu0 0.0
    %3025 = vmatprep.subr.mxu0 0.0
    %3026 = vmatpush1.msra.mxu0 0.0
    %3027 = vmatprep.subr.mxu0 0.0
    %3028 = vmatpush1.msra.mxu0 0.0
    %3029 = vmatprep.subr.mxu0 0.0
    %3030 = vmatpush1.msra.mxu0 0.0
    %3031 = vmatprep.subr.mxu0 0.0
    %3032 = vmatpush1.msra.mxu0 0.0
    %3033 = vmatprep.subr.mxu0 0.0
    %3034 = vmatpush1.msra.mxu0 0.0
    %3035 = vmatprep.subr.mxu0 0.0
    %3036 = vmatpush1.msra.mxu0 0.0
    %3037 = vmatprep.subr.mxu0 0.0
    %3038 = vmatpush1.msra.mxu0 0.0
    %3039 = vmatprep.subr.mxu0 0.0
    %3040 = vmatpush1.msra.mxu0 0.0
    %3041 = vmatprep.subr.mxu0 0.0
    %3042 = vmatpush1.msra.mxu0 0.0
    %3043 = vmatprep.subr.mxu0 0.0
    %3044 = vmatpush1.msra.mxu0 0.0
    %3045 = vmatprep.subr.mxu0 0.0
    %3046 = vmatpush1.msra.mxu0 0.0
    %3047 = vmatprep.subr.mxu0 0.0
    %3048 = vmatpush1.msra.mxu0 0.0
    %3049 = vmatprep.subr.mxu0 0.0
    %3050 = vmatpush1.msra.mxu0 0.0
    %3051 = vmatprep.subr.mxu0 0.0
    %3052 = vmatpush1.msra.mxu0 0.0
    %3053 = vmatprep.subr.mxu0 0.0
    %3054 = vmatpush1.msra.mxu0 0.0
    %3055 = vmatprep.subr.mxu0 0.0
    %3056 = vmatpush1.msra.mxu0 0.0
    %3057 = vmatprep.subr.mxu0 0.0
    %3058 = vmatpush1.msra.mxu0 0.0
    %3059 = vmatprep.subr.mxu0 0.0
    %3060 = vmatpush1.msra.mxu0 0.0
    %3061 = vmatprep.subr.mxu0 0.0
    %3062 = vmatpush1.msra.mxu0 0.0
    %3063 = vmatprep.mubr.f32.mxu0 0.0
    %3064 = vmatmul.mubr.f32.gmra.mrb[0].mxu0 %v2997
    %v3065 = vpop.f32.mrb[0].mxu0
    %v3066 = vadd.f32 0.0, %v3065
    %v3067 = vpop.f32.mrb[0].mxu0
    %3068 = vdwg.mxu0
    %v3069 = vadd.f32 %v1966, %v3066
    %v3070 = vxor.u32 %v3069, 2147483648
    %v3071 = vmul.f32 %v3070, 1.442695
    %v3072 = vpow.pop %v3071
    %v3073 = vadd.f32 %v3072, 1.0
    %v3074 = vrcp.pop %v3073
    %v3075 = vmul.f32 1.0, %v3074
    %v3076 = vtanh.pop %v3069
    %v3077 = vmul.f32 %v3075, %v2884
    %3079 = vrot.lane.b32.xlu0 %v3076, 32
    %v3080 = vpop.permute.xlu0 %3079
    %v3082 = vmul.f32 %v3075, %v3080
    %3084 = vrot.lane.b32.xlu0 %v3082, 32
    %v3085 = vpop.permute.xlu0 %3084
    %v3087 = vadd.f32 %v3077, %v3085
    %v3088 = vtanh.pop %v3087
    %3090 = vrot.lane.b32.xlu0 %v3088, 32
    %v3091 = vpop.permute.xlu0 %3090
    %v3093 = vmul.f32 %v3075, %v3091
    %3095 = vrot.lane.b32.xlu0 %v3093, 64
    %v3096 = vpop.permute.xlu0 %3095
    %3099 = vrot.lane.b32.xlu0 %v2996, 96
    %v3100 = vpop.permute.xlu0 %3099
    %v3102 = vsel %vm260, %v3096, %v3100
    %v3104 = vsel %vm364, %v3102, 0
    %3106 = vmatprep.subr.mxu0 0.0
    %3107 = vmatpush1.msra.mxu0 %v1973
    %3108 = vmatprep.subr.mxu0 0.0
    %3109 = vmatpush1.msra.mxu0 %v1974
    %3110 = vmatprep.subr.mxu0 0.0
    %3111 = vmatpush1.msra.mxu0 %v1975
    %3112 = vmatprep.subr.mxu0 0.0
    %3113 = vmatpush1.msra.mxu0 %v1976
    %3114 = vmatprep.subr.mxu0 0.0
    %3115 = vmatpush1.msra.mxu0 %v1977
    %3116 = vmatprep.subr.mxu0 0.0
    %3117 = vmatpush1.msra.mxu0 %v1978
    %3118 = vmatprep.subr.mxu0 0.0
    %3119 = vmatpush1.msra.mxu0 %v1979
    %3120 = vmatprep.subr.mxu0 0.0
    %3121 = vmatpush1.msra.mxu0 %v1980
    %3122 = vmatprep.subr.mxu0 0.0
    %3123 = vmatpush1.msra.mxu0 0.0
    %3124 = vmatprep.subr.mxu0 0.0
    %3125 = vmatpush1.msra.mxu0 0.0
    %3126 = vmatprep.subr.mxu0 0.0
    %3127 = vmatpush1.msra.mxu0 0.0
    %3128 = vmatprep.subr.mxu0 0.0
    %3129 = vmatpush1.msra.mxu0 0.0
    %3130 = vmatprep.subr.mxu0 0.0
    %3131 = vmatpush1.msra.mxu0 0.0
    %3132 = vmatprep.subr.mxu0 0.0
    %3133 = vmatpush1.msra.mxu0 0.0
    %3134 = vmatprep.subr.mxu0 0.0
    %3135 = vmatpush1.msra.mxu0 0.0
    %3136 = vmatprep.subr.mxu0 0.0
    %3137 = vmatpush1.msra.mxu0 0.0
    %3138 = vmatprep.subr.mxu0 0.0
    %3139 = vmatpush1.msra.mxu0 0.0
    %3140 = vmatprep.subr.mxu0 0.0
    %3141 = vmatpush1.msra.mxu0 0.0
    %3142 = vmatprep.subr.mxu0 0.0
    %3143 = vmatpush1.msra.mxu0 0.0
    %3144 = vmatprep.subr.mxu0 0.0
    %3145 = vmatpush1.msra.mxu0 0.0
    %3146 = vmatprep.subr.mxu0 0.0
    %3147 = vmatpush1.msra.mxu0 0.0
    %3148 = vmatprep.subr.mxu0 0.0
    %3149 = vmatpush1.msra.mxu0 0.0
    %3150 = vmatprep.subr.mxu0 0.0
    %3151 = vmatpush1.msra.mxu0 0.0
    %3152 = vmatprep.subr.mxu0 0.0
    %3153 = vmatpush1.msra.mxu0 0.0
    %3154 = vmatprep.subr.mxu0 0.0
    %3155 = vmatpush1.msra.mxu0 0.0
    %3156 = vmatprep.subr.mxu0 0.0
    %3157 = vmatpush1.msra.mxu0 0.0
    %3158 = vmatprep.subr.mxu0 0.0
    %3159 = vmatpush1.msra.mxu0 0.0
    %3160 = vmatprep.subr.mxu0 0.0
    %3161 = vmatpush1.msra.mxu0 0.0
    %3162 = vmatprep.subr.mxu0 0.0
    %3163 = vmatpush1.msra.mxu0 0.0
    %3164 = vmatprep.subr.mxu0 0.0
    %3165 = vmatpush1.msra.mxu0 0.0
    %3166 = vmatprep.subr.mxu0 0.0
    %3167 = vmatpush1.msra.mxu0 0.0
    %3168 = vmatprep.subr.mxu0 0.0
    %3169 = vmatpush1.msra.mxu0 0.0
    %3170 = vmatprep.mubr.f32.mxu0 0.0
    %3171 = vmatmul.mubr.f32.gmra.mrb[0].mxu0 %v3104
    %v3172 = vpop.f32.mrb[0].mxu0
    %v3173 = vadd.f32 %v1986, %v3172
    %v3174 = vpop.f32.mrb[0].mxu0
    %3175 = vdwg.mxu0
    %v3176 = vxor.u32 %v3173, 2147483648
    %v3177 = vmul.f32 %v3176, 1.442695
    %v3178 = vpow.pop %v3177
    %v3179 = vadd.f32 %v3178, 1.0
    %v3180 = vrcp.pop %v3179
    %v3181 = vmul.f32 1.0, %v3180
    %v3182 = vtanh.pop %v3173
    %v3183 = vmul.f32 %v3181, %v2990
    %3185 = vrot.lane.b32.xlu0 %v3182, 32
    %v3186 = vpop.permute.xlu0 %3185
    %v3188 = vmul.f32 %v3181, %v3186
    %3190 = vrot.lane.b32.xlu0 %v3188, 32
    %v3191 = vpop.permute.xlu0 %3190
    %v3193 = vadd.f32 %v3183, %v3191
    %v3194 = vtanh.pop %v3193
    %3196 = vrot.lane.b32.xlu0 %v3194, 32
    %v3197 = vpop.permute.xlu0 %3196
    %v3199 = vmul.f32 %v3181, %v3197
    %v3200 = vsel %vm260, %v3096, 0
    %3202 = vmatprep.subr.mxu0 0.0
    %3203 = vmatpush1.msra.mxu0 %v1969
    %3204 = vmatprep.subr.mxu0 0.0
    %3205 = vmatpush1.msra.mxu0 %v1970
    %3206 = vmatprep.subr.mxu0 0.0
    %3207 = vmatpush1.msra.mxu0 %v1971
    %3208 = vmatprep.subr.mxu0 0.0
    %3209 = vmatpush1.msra.mxu0 %v1972
    %3210 = vmatprep.subr.mxu0 0.0
    %3211 = vmatpush1.msra.mxu0 0.0
    %3212 = vmatprep.subr.mxu0 0.0
    %3213 = vmatpush1.msra.mxu0 0.0
    %3214 = vmatprep.subr.mxu0 0.0
    %3215 = vmatpush1.msra.mxu0 0.0
    %3216 = vmatprep.subr.mxu0 0.0
    %3217 = vmatpush1.msra.mxu0 0.0
    %3218 = vmatprep.subr.mxu0 0.0
    %3219 = vmatpush1.msra.mxu0 0.0
    %3220 = vmatprep.subr.mxu0 0.0
    %3221 = vmatpush1.msra.mxu0 0.0
    %3222 = vmatprep.subr.mxu0 0.0
    %3223 = vmatpush1.msra.mxu0 0.0
    %3224 = vmatprep.subr.mxu0 0.0
    %3225 = vmatpush1.msra.mxu0 0.0
    %3226 = vmatprep.subr.mxu0 0.0
    %3227 = vmatpush1.msra.mxu0 0.0
    %3228 = vmatprep.subr.mxu0 0.0
    %3229 = vmatpush1.msra.mxu0 0.0
    %3230 = vmatprep.subr.mxu0 0.0
    %3231 = vmatpush1.msra.mxu0 0.0
    %3232 = vmatprep.subr.mxu0 0.0
    %3233 = vmatpush1.msra.mxu0 0.0
    %3234 = vmatprep.subr.mxu0 0.0
    %3235 = vmatpush1.msra.mxu0 0.0
    %3236 = vmatprep.subr.mxu0 0.0
    %3237 = vmatpush1.msra.mxu0 0.0
    %3238 = vmatprep.subr.mxu0 0.0
    %3239 = vmatpush1.msra.mxu0 0.0
    %3240 = vmatprep.subr.mxu0 0.0
    %3241 = vmatpush1.msra.mxu0 0.0
    %3242 = vmatprep.subr.mxu0 0.0
    %3243 = vmatpush1.msra.mxu0 0.0
    %3244 = vmatprep.subr.mxu0 0.0
    %3245 = vmatpush1.msra.mxu0 0.0
    %3246 = vmatprep.subr.mxu0 0.0
    %3247 = vmatpush1.msra.mxu0 0.0
    %3248 = vmatprep.subr.mxu0 0.0
    %3249 = vmatpush1.msra.mxu0 0.0
    %3250 = vmatprep.subr.mxu0 0.0
    %3251 = vmatpush1.msra.mxu0 0.0
    %3252 = vmatprep.subr.mxu0 0.0
    %3253 = vmatpush1.msra.mxu0 0.0
    %3254 = vmatprep.subr.mxu0 0.0
    %3255 = vmatpush1.msra.mxu0 0.0
    %3256 = vmatprep.subr.mxu0 0.0
    %3257 = vmatpush1.msra.mxu0 0.0
    %3258 = vmatprep.subr.mxu0 0.0
    %3259 = vmatpush1.msra.mxu0 0.0
    %3260 = vmatprep.subr.mxu0 0.0
    %3261 = vmatpush1.msra.mxu0 0.0
    %3262 = vmatprep.subr.mxu0 0.0
    %3263 = vmatpush1.msra.mxu0 0.0
    %3264 = vmatprep.subr.mxu0 0.0
    %3265 = vmatpush1.msra.mxu0 0.0
    %3266 = vmatprep.mubr.f32.mxu0 0.0
    %3267 = vmatmul.mubr.f32.gmra.mrb[0].mxu0 %v3200
    %v3268 = vpop.f32.mrb[0].mxu0
    %v3269 = vadd.f32 0.0, %v3268
    %v3270 = vpop.f32.mrb[0].mxu0
    %3271 = vdwg.mxu0
    %v3272 = vadd.f32 %v1966, %v3269
    %v3273 = vxor.u32 %v3272, 2147483648
    %v3274 = vmul.f32 %v3273, 1.442695
    %v3275 = vpow.pop %v3274
    %v3276 = vadd.f32 %v3275, 1.0
    %v3277 = vrcp.pop %v3276
    %v3278 = vmul.f32 1.0, %v3277
    %v3279 = vtanh.pop %v3272
    %v3280 = vmul.f32 %v3278, %v3087
    %3282 = vrot.lane.b32.xlu0 %v3279, 32
    %v3283 = vpop.permute.xlu0 %3282
    %v3285 = vmul.f32 %v3278, %v3283
    %3287 = vrot.lane.b32.xlu0 %v3285, 32
    %v3288 = vpop.permute.xlu0 %3287
    %v3290 = vadd.f32 %v3280, %v3288
    %v3291 = vtanh.pop %v3290
    %3293 = vrot.lane.b32.xlu0 %v3291, 32
    %v3294 = vpop.permute.xlu0 %3293
    %v3296 = vmul.f32 %v3278, %v3294
    %3298 = vrot.lane.b32.xlu0 %v3296, 64
    %v3299 = vpop.permute.xlu0 %3298
    %3302 = vrot.lane.b32.xlu0 %v3199, 96
    %v3303 = vpop.permute.xlu0 %3302
    %v3305 = vsel %vm260, %v3299, %v3303
    %v3307 = vsel %vm364, %v3305, 0
    %3309 = vmatprep.subr.mxu0 0.0
    %3310 = vmatpush1.msra.mxu0 %v1973
    %3311 = vmatprep.subr.mxu0 0.0
    %3312 = vmatpush1.msra.mxu0 %v1974
    %3313 = vmatprep.subr.mxu0 0.0
    %3314 = vmatpush1.msra.mxu0 %v1975
    %3315 = vmatprep.subr.mxu0 0.0
    %3316 = vmatpush1.msra.mxu0 %v1976
    %3317 = vmatprep.subr.mxu0 0.0
    %3318 = vmatpush1.msra.mxu0 %v1977
    %3319 = vmatprep.subr.mxu0 0.0
    %3320 = vmatpush1.msra.mxu0 %v1978
    %3321 = vmatprep.subr.mxu0 0.0
    %3322 = vmatpush1.msra.mxu0 %v1979
    %3323 = vmatprep.subr.mxu0 0.0
    %3324 = vmatpush1.msra.mxu0 %v1980
    %3325 = vmatprep.subr.mxu0 0.0
    %3326 = vmatpush1.msra.mxu0 0.0
    %3327 = vmatprep.subr.mxu0 0.0
    %3328 = vmatpush1.msra.mxu0 0.0
    %3329 = vmatprep.subr.mxu0 0.0
    %3330 = vmatpush1.msra.mxu0 0.0
    %3331 = vmatprep.subr.mxu0 0.0
    %3332 = vmatpush1.msra.mxu0 0.0
    %3333 = vmatprep.subr.mxu0 0.0
    %3334 = vmatpush1.msra.mxu0 0.0
    %3335 = vmatprep.subr.mxu0 0.0
    %3336 = vmatpush1.msra.mxu0 0.0
    %3337 = vmatprep.subr.mxu0 0.0
    %3338 = vmatpush1.msra.mxu0 0.0
    %3339 = vmatprep.subr.mxu0 0.0
    %3340 = vmatpush1.msra.mxu0 0.0
    %3341 = vmatprep.subr.mxu0 0.0
    %3342 = vmatpush1.msra.mxu0 0.0
    %3343 = vmatprep.subr.mxu0 0.0
    %3344 = vmatpush1.msra.mxu0 0.0
    %3345 = vmatprep.subr.mxu0 0.0
    %3346 = vmatpush1.msra.mxu0 0.0
    %3347 = vmatprep.subr.mxu0 0.0
    %3348 = vmatpush1.msra.mxu0 0.0
    %3349 = vmatprep.subr.mxu0 0.0
    %3350 = vmatpush1.msra.mxu0 0.0
    %3351 = vmatprep.subr.mxu0 0.0
    %3352 = vmatpush1.msra.mxu0 0.0
    %3353 = vmatprep.subr.mxu0 0.0
    %3354 = vmatpush1.msra.mxu0 0.0
    %3355 = vmatprep.subr.mxu0 0.0
    %3356 = vmatpush1.msra.mxu0 0.0
    %3357 = vmatprep.subr.mxu0 0.0
    %3358 = vmatpush1.msra.mxu0 0.0
    %3359 = vmatprep.subr.mxu0 0.0
    %3360 = vmatpush1.msra.mxu0 0.0
    %3361 = vmatprep.subr.mxu0 0.0
    %3362 = vmatpush1.msra.mxu0 0.0
    %3363 = vmatprep.subr.mxu0 0.0
    %3364 = vmatpush1.msra.mxu0 0.0
    %3365 = vmatprep.subr.mxu0 0.0
    %3366 = vmatpush1.msra.mxu0 0.0
    %3367 = vmatprep.subr.mxu0 0.0
    %3368 = vmatpush1.msra.mxu0 0.0
    %3369 = vmatprep.subr.mxu0 0.0
    %3370 = vmatpush1.msra.mxu0 0.0
    %3371 = vmatprep.subr.mxu0 0.0
    %3372 = vmatpush1.msra.mxu0 0.0
    %3373 = vmatprep.mubr.f32.mxu0 0.0
    %3374 = vmatmul.mubr.f32.gmra.mrb[0].mxu0 %v3307
    %v3375 = vpop.f32.mrb[0].mxu0
    %v3376 = vadd.f32 %v1986, %v3375
    %v3377 = vpop.f32.mrb[0].mxu0
    %3378 = vdwg.mxu0
    %v3379 = vxor.u32 %v3376, 2147483648
    %v3380 = vmul.f32 %v3379, 1.442695
    %v3381 = vpow.pop %v3380
    %v3382 = vadd.f32 %v3381, 1.0
    %v3383 = vrcp.pop %v3382
    %v3384 = vmul.f32 1.0, %v3383
    %v3385 = vtanh.pop %v3376
    %v3386 = vmul.f32 %v3384, %v3193
    %3388 = vrot.lane.b32.xlu0 %v3385, 32
    %v3389 = vpop.permute.xlu0 %3388
    %v3391 = vmul.f32 %v3384, %v3389
    %3393 = vrot.lane.b32.xlu0 %v3391, 32
    %v3394 = vpop.permute.xlu0 %3393
    %v3396 = vadd.f32 %v3386, %v3394
    %v3397 = vtanh.pop %v3396
    %3399 = vrot.lane.b32.xlu0 %v3397, 32
    %v3400 = vpop.permute.xlu0 %3399
    %v3402 = vmul.f32 %v3384, %v3400
    %v3403 = vsel %vm260, %v3299, 0
    %3405 = vmatprep.subr.mxu0 0.0
    %3406 = vmatpush1.msra.mxu0 %v1969
    %3407 = vmatprep.subr.mxu0 0.0
    %3408 = vmatpush1.msra.mxu0 %v1970
    %3409 = vmatprep.subr.mxu0 0.0
    %3410 = vmatpush1.msra.mxu0 %v1971
    %3411 = vmatprep.subr.mxu0 0.0
    %3412 = vmatpush1.msra.mxu0 %v1972
    %3413 = vmatprep.subr.mxu0 0.0
    %3414 = vmatpush1.msra.mxu0 0.0
    %3415 = vmatprep.subr.mxu0 0.0
    %3416 = vmatpush1.msra.mxu0 0.0
    %3417 = vmatprep.subr.mxu0 0.0
    %3418 = vmatpush1.msra.mxu0 0.0
    %3419 = vmatprep.subr.mxu0 0.0
    %3420 = vmatpush1.msra.mxu0 0.0
    %3421 = vmatprep.subr.mxu0 0.0
    %3422 = vmatpush1.msra.mxu0 0.0
    %3423 = vmatprep.subr.mxu0 0.0
    %3424 = vmatpush1.msra.mxu0 0.0
    %3425 = vmatprep.subr.mxu0 0.0
    %3426 = vmatpush1.msra.mxu0 0.0
    %3427 = vmatprep.subr.mxu0 0.0
    %3428 = vmatpush1.msra.mxu0 0.0
    %3429 = vmatprep.subr.mxu0 0.0
    %3430 = vmatpush1.msra.mxu0 0.0
    %3431 = vmatprep.subr.mxu0 0.0
    %3432 = vmatpush1.msra.mxu0 0.0
    %3433 = vmatprep.subr.mxu0 0.0
    %3434 = vmatpush1.msra.mxu0 0.0
    %3435 = vmatprep.subr.mxu0 0.0
    %3436 = vmatpush1.msra.mxu0 0.0
    %3437 = vmatprep.subr.mxu0 0.0
    %3438 = vmatpush1.msra.mxu0 0.0
    %3439 = vmatprep.subr.mxu0 0.0
    %3440 = vmatpush1.msra.mxu0 0.0
    %3441 = vmatprep.subr.mxu0 0.0
    %3442 = vmatpush1.msra.mxu0 0.0
    %3443 = vmatprep.subr.mxu0 0.0
    %3444 = vmatpush1.msra.mxu0 0.0
    %3445 = vmatprep.subr.mxu0 0.0
    %3446 = vmatpush1.msra.mxu0 0.0
    %3447 = vmatprep.subr.mxu0 0.0
    %3448 = vmatpush1.msra.mxu0 0.0
    %3449 = vmatprep.subr.mxu0 0.0
    %3450 = vmatpush1.msra.mxu0 0.0
    %3451 = vmatprep.subr.mxu0 0.0
    %3452 = vmatpush1.msra.mxu0 0.0
    %3453 = vmatprep.subr.mxu0 0.0
    %3454 = vmatpush1.msra.mxu0 0.0
    %3455 = vmatprep.subr.mxu0 0.0
    %3456 = vmatpush1.msra.mxu0 0.0
    %3457 = vmatprep.subr.mxu0 0.0
    %3458 = vmatpush1.msra.mxu0 0.0
    %3459 = vmatprep.subr.mxu0 0.0
    %3460 = vmatpush1.msra.mxu0 0.0
    %3461 = vmatprep.subr.mxu0 0.0
    %3462 = vmatpush1.msra.mxu0 0.0
    %3463 = vmatprep.subr.mxu0 0.0
    %3464 = vmatpush1.msra.mxu0 0.0
    %3465 = vmatprep.subr.mxu0 0.0
    %3466 = vmatpush1.msra.mxu0 0.0
    %3467 = vmatprep.subr.mxu0 0.0
    %3468 = vmatpush1.msra.mxu0 0.0
    %3469 = vmatprep.mubr.f32.mxu0 0.0
    %3470 = vmatmul.mubr.f32.gmra.mrb[0].mxu0 %v3403
    %v3471 = vpop.f32.mrb[0].mxu0
    %v3472 = vadd.f32 0.0, %v3471
    %v3473 = vpop.f32.mrb[0].mxu0
    %3474 = vdwg.mxu0
    %v3475 = vadd.f32 %v1966, %v3472
    %v3476 = vxor.u32 %v3475, 2147483648
    %v3477 = vmul.f32 %v3476, 1.442695
    %v3478 = vpow.pop %v3477
    %v3479 = vadd.f32 %v3478, 1.0
    %v3480 = vrcp.pop %v3479
    %v3481 = vmul.f32 1.0, %v3480
    %v3482 = vtanh.pop %v3475
    %v3483 = vmul.f32 %v3481, %v3290
    %3485 = vrot.lane.b32.xlu0 %v3482, 32
    %v3486 = vpop.permute.xlu0 %3485
    %v3488 = vmul.f32 %v3481, %v3486
    %3490 = vrot.lane.b32.xlu0 %v3488, 32
    %v3491 = vpop.permute.xlu0 %3490
    %v3493 = vadd.f32 %v3483, %v3491
    %v3494 = vtanh.pop %v3493
    %3496 = vrot.lane.b32.xlu0 %v3494, 32
    %v3497 = vpop.permute.xlu0 %3496
    %v3499 = vmul.f32 %v3481, %v3497
    %3501 = vrot.lane.b32.xlu0 %v3499, 64
    %v3502 = vpop.permute.xlu0 %3501
    %3505 = vrot.lane.b32.xlu0 %v3402, 96
    %v3506 = vpop.permute.xlu0 %3505
    %v3508 = vsel %vm260, %v3502, %v3506
    %v3510 = vsel %vm364, %v3508, 0
    %3512 = vmatprep.subr.mxu0 0.0
    %3513 = vmatpush1.msra.mxu0 %v1973
    %3514 = vmatprep.subr.mxu0 0.0
    %3515 = vmatpush1.msra.mxu0 %v1974
    %3516 = vmatprep.subr.mxu0 0.0
    %3517 = vmatpush1.msra.mxu0 %v1975
    %3518 = vmatprep.subr.mxu0 0.0
    %3519 = vmatpush1.msra.mxu0 %v1976
    %3520 = vmatprep.subr.mxu0 0.0
    %3521 = vmatpush1.msra.mxu0 %v1977
    %3522 = vmatprep.subr.mxu0 0.0
    %3523 = vmatpush1.msra.mxu0 %v1978
    %3524 = vmatprep.subr.mxu0 0.0
    %3525 = vmatpush1.msra.mxu0 %v1979
    %3526 = vmatprep.subr.mxu0 0.0
    %3527 = vmatpush1.msra.mxu0 %v1980
    %3528 = vmatprep.subr.mxu0 0.0
    %3529 = vmatpush1.msra.mxu0 0.0
    %3530 = vmatprep.subr.mxu0 0.0
    %3531 = vmatpush1.msra.mxu0 0.0
    %3532 = vmatprep.subr.mxu0 0.0
    %3533 = vmatpush1.msra.mxu0 0.0
    %3534 = vmatprep.subr.mxu0 0.0
    %3535 = vmatpush1.msra.mxu0 0.0
    %3536 = vmatprep.subr.mxu0 0.0
    %3537 = vmatpush1.msra.mxu0 0.0
    %3538 = vmatprep.subr.mxu0 0.0
    %3539 = vmatpush1.msra.mxu0 0.0
    %3540 = vmatprep.subr.mxu0 0.0
    %3541 = vmatpush1.msra.mxu0 0.0
    %3542 = vmatprep.subr.mxu0 0.0
    %3543 = vmatpush1.msra.mxu0 0.0
    %3544 = vmatprep.subr.mxu0 0.0
    %3545 = vmatpush1.msra.mxu0 0.0
    %3546 = vmatprep.subr.mxu0 0.0
    %3547 = vmatpush1.msra.mxu0 0.0
    %3548 = vmatprep.subr.mxu0 0.0
    %3549 = vmatpush1.msra.mxu0 0.0
    %3550 = vmatprep.subr.mxu0 0.0
    %3551 = vmatpush1.msra.mxu0 0.0
    %3552 = vmatprep.subr.mxu0 0.0
    %3553 = vmatpush1.msra.mxu0 0.0
    %3554 = vmatprep.subr.mxu0 0.0
    %3555 = vmatpush1.msra.mxu0 0.0
    %3556 = vmatprep.subr.mxu0 0.0
    %3557 = vmatpush1.msra.mxu0 0.0
    %3558 = vmatprep.subr.mxu0 0.0
    %3559 = vmatpush1.msra.mxu0 0.0
    %3560 = vmatprep.subr.mxu0 0.0
    %3561 = vmatpush1.msra.mxu0 0.0
    %3562 = vmatprep.subr.mxu0 0.0
    %3563 = vmatpush1.msra.mxu0 0.0
    %3564 = vmatprep.subr.mxu0 0.0
    %3565 = vmatpush1.msra.mxu0 0.0
    %3566 = vmatprep.subr.mxu0 0.0
    %3567 = vmatpush1.msra.mxu0 0.0
    %3568 = vmatprep.subr.mxu0 0.0
    %3569 = vmatpush1.msra.mxu0 0.0
    %3570 = vmatprep.subr.mxu0 0.0
    %3571 = vmatpush1.msra.mxu0 0.0
    %3572 = vmatprep.subr.mxu0 0.0
    %3573 = vmatpush1.msra.mxu0 0.0
    %3574 = vmatprep.subr.mxu0 0.0
    %3575 = vmatpush1.msra.mxu0 0.0
    %3576 = vmatprep.mubr.f32.mxu0 0.0
    %3577 = vmatmul.mubr.f32.gmra.mrb[0].mxu0 %v3510
    %v3578 = vpop.f32.mrb[0].mxu0
    %v3579 = vadd.f32 %v1986, %v3578
    %v3580 = vpop.f32.mrb[0].mxu0
    %3581 = vdwg.mxu0
    %v3582 = vxor.u32 %v3579, 2147483648
    %v3583 = vmul.f32 %v3582, 1.442695
    %v3584 = vpow.pop %v3583
    %v3585 = vadd.f32 %v3584, 1.0
    %v3586 = vrcp.pop %v3585
    %v3587 = vmul.f32 1.0, %v3586
    %v3588 = vtanh.pop %v3579
    %v3589 = vmul.f32 %v3587, %v3396
    %3591 = vrot.lane.b32.xlu0 %v3588, 32
    %v3592 = vpop.permute.xlu0 %3591
    %v3594 = vmul.f32 %v3587, %v3592
    %3596 = vrot.lane.b32.xlu0 %v3594, 32
    %v3597 = vpop.permute.xlu0 %3596
    %v3599 = vadd.f32 %v3589, %v3597
    %v3600 = vtanh.pop %v3599
    %3602 = vrot.lane.b32.xlu0 %v3600, 32
    %v3603 = vpop.permute.xlu0 %3602
    %v3605 = vmul.f32 %v3587, %v3603
    %3606 = vrot.lane.b32.xlu0 %v2184, 64
    %v3607 = vpop.permute.xlu0 %3606
    %3609 = vrot.lane.b32.xlu0 %v2793, 32
    %v3610 = vpop.permute.xlu0 %3609
    %3612 = vrot.lane.b32.xlu0 %v2996, 64
    %v3613 = vpop.permute.xlu0 %3612
    %3616 = vrot.lane.b32.xlu0 %v3605, 32
    %v3617 = vpop.permute.xlu0 %3616
    %v3619 = vsel %vm260, %v3607, %v2491
    %v3620 = vsel %vm364, %v3619, %v2590
    %vm3621 = vcmask 785408
    %v3622 = vsel %vm3621, %v3620, %v3610
    %v3623 = vsel %vm260, %v3613, %v3303
    %v3624 = vsel %vm364, %v3623, %v3402
    %v3625 = vsel %vm3621, %v3624, %v3617
    %3626 = vst [vmem:[#allocation10] sm:$0xff] %v3622
    %3627 = vst [vmem:[#allocation10 + $0x8] sm:$0xff] %v3625
    // Predicated region
    $region62: #{tpu_custom_call.1} parent=1 // pred_check
      _
    $region63: #{tpu_custom_call.1} parent=1 // pred_check_branch
      %3629 = sbr.rel (0) target = $region65
    $region64: #{tpu_custom_call.1} parent=1 // pred_region
      %s3631 = ssub.s32 256, 256
      %3632 = vsyncadd [#allocation4], %s3631
      %s3634 = sshll.u32 [#allocation10], 4
      %s3635 = int_to_ptr.vmem [resolvable:$true] %s3634
      %3637 = dma.vmem_to_hbm [thread:$0]  %s3635, 256, %s11, [#allocation4]
    $region65: #{tpu_custom_call.1} parent=1 // pred_fallthru
      _
    // Predicated region
    $region66: #{tpu_custom_call.1} parent=1 // pred_check
      _
    $region67: #{tpu_custom_call.1} parent=1 // pred_check_branch
      %3639 = sbr.rel (0) target = $region69
    $region68: #{tpu_custom_call.1} parent=1 // pred_region
      %3640 = dma.done [#allocation4], 256
    $region69: #{tpu_custom_call.1} parent=1 // pred_fallthru
      _
    %3641 = vsyncpa [#allocation3], 1
    %3642 = vsyncpa [#allocation6], 1
    %3643 = vsyncpa [#allocation9], 1
    %3644 = vsyncpa [#allocation4], 1

</llo_original>
